<compile_context>
chip_gen: v7x
topology: tpu7x:2x2x1
jax: 0.10.0
libtpu: 0.0.40
codegen_flags: <defaults>
</compile_context>

<pallas_src>
import functools

import jax
import jax.numpy as jnp
from jax import lax
from jax.experimental import pallas as pl
from jax.experimental.pallas import tpu as pltpu


# Generation-portable VMEM knobs:
#  * 32 MiB scoped limit is the default on v6e/v7x and safely below physical
#    VMEM on every generation (128 MiB v5e/v6e, 64 MiB v7x).
#  * The per-step budget sizes the batch block (inputs/outputs are
#    double-buffered by the BlockSpec pipeline; in-kernel temps estimated).
_VMEM_LIMIT_BYTES = 32 * 1024 * 1024
_STEP_BUDGET_BYTES = 20 * 1024 * 1024


def _convlstm_kernel(x_ref, h_ref, wx_ref, wh_ref, b_ref, c_ref, out_ref, *,
                     ksize, wp, nf, forget_bias):
    """One batch block per grid step; channel-major, lane-dense.

    x_ref   : (1, F, Lx)    padded+flattened inputs; the Nb batch elements of
                            the block sit end-to-end on the lane axis with
                            per-element stride L = Hp*Wp, plus a
                            (K-1)*(Wp+1)-lane tail so every tap slice is
                            in bounds.
    h_ref   : (1, F, Lx)    previous hidden state, same layout as x_ref.
    wx_ref  : (K*K, 4F, F)  conv weights acting on x, one (4F, F) tap each.
    wh_ref  : (K*K, 4F, F)  conv weights acting on h.
    b_ref   : (4F, 1)       conv bias as a column (lane-broadcast).
    c_ref   : (1, F, Lo)    previous memory cell, Lo = Nb*L.
    out_ref : (1, 2F, Lo)   merged [new_c ; new_h] slab (== new_state).
    """
    lo = out_ref.shape[2]
    x = x_ref[0]                            # (F, Lx) compute dtype
    h = h_ref[0]

    # Conv = K*K accumulating per-tap MXU dots with f32 accumulation.  Each
    # tap is a static lane-offset slice of the flat padded image; keeping the
    # dots separate lets MXU work overlap the XLU lane shifts and avoids
    # materializing a 9x-sized im2col buffer in VMEM (critical on v7x).
    acc = None
    for kh in range(ksize):
        for kw in range(ksize):
            d = kh * wp + kw
            t = kh * ksize + kw
            tap = jnp.dot(wx_ref[t], x[:, d:d + lo],
                          preferred_element_type=jnp.float32)
            tap = tap + jnp.dot(wh_ref[t], h[:, d:d + lo],
                                preferred_element_type=jnp.float32)
            acc = tap if acc is None else acc + tap

    b = b_ref[...]                          # (4F, 1) -> lane broadcast

    # Gate order matches torch.chunk(conv_output, 4, dim=1): i, j, f, o.
    # Per-gate bias adds are sublane-aligned slices (nf % 8 == 0); the
    # forget_bias is folded into the tiny (nf, 1) bias column, not the tile.
    i_g = acc[0 * nf:1 * nf] + b[0 * nf:1 * nf]
    j_g = acc[1 * nf:2 * nf] + b[1 * nf:2 * nf]
    f_g = acc[2 * nf:3 * nf] + (b[2 * nf:3 * nf] + forget_bias)
    o_g = acc[3 * nf:4 * nf] + b[3 * nf:4 * nf]

    # sigmoid(z) = 0.5*tanh(0.5*z) + 0.5: one EUP push per sigmoid instead of
    # exp + reciprocal; the extra mul/add land in the VALU slot (has slack).
    def _sig(z):
        return 0.5 * jnp.tanh(0.5 * z) + 0.5

    c_prev = c_ref[0].astype(jnp.float32)   # (F, Lo)
    new_c = c_prev * _sig(f_g) + _sig(i_g) * jnp.tanh(j_g)
    new_h = jnp.tanh(new_c) * _sig(o_g)

    # Two direct sublane-sliced, unmasked lane-dense stores (no concat temp).
    out_ref[0, 0:nf, :] = new_c.astype(out_ref.dtype)
    out_ref[0, nf:2 * nf, :] = new_h.astype(out_ref.dtype)


def conv_lstm_cell(x, state, weight, bias, *, feature_size, num_features,
                   forget_bias=1.0, compute_dtype=jnp.bfloat16):
    """Forward pass of ConvLstmCell (NCHW in / NCHW out, like the module).

    x      : (N, F, H, W)
    state  : (N, 2F, H, W)   concat of [c, h]
    weight : (4F, 2F, K, K)  PyTorch Conv2d weight (OIHW)
    bias   : (4F,)
    compute_dtype : dtype of the MXU matmul operands (bf16 on v6e/v7x;
                    gating math is always f32).
    Returns (new_h, new_state), both NCHW float32.
    """
    N, F, H, W = x.shape
    assert F == num_features
    # Gate slices / half-slab stores are only relayout-free when F lands on
    # f32 sublane-group boundaries.
    assert F % 8 == 0, "num_features must be a multiple of 8"
    K = feature_size
    assert K % 2 == 1, "ConvLstmCell requires odd feature_size ('same' padding)"
    pad = (K - 1) // 2
    Cout = 4 * F
    Hp, Wp = H + 2 * pad, W + 2 * pad
    L = Hp * Wp                        # flat padded spatial grid (lane axis)
    tail = (K - 1) * (Wp + 1)          # tail pad so every tap slice is in bounds

    c_prev, h_prev = jnp.split(state, 2, axis=1)

    # ---- batch-block size: amortize the fixed per-grid-step overhead -------
    csize = jnp.dtype(compute_dtype).itemsize
    per_elem = (2 * (2 * F * L * csize)     # x + h blocks (double-buffered)
                + 2 * (F * L * 4)           # c block (double-buffered)
                + 2 * (2 * F * L * 4)       # out block (double-buffered)
                + 8 * F * L * 4)            # in-kernel acc / gate temporaries
    nb_vmem = max(1, _STEP_BUDGET_BYTES // per_elem)
    # Keep >= 2 grid steps when N >= 2 so v7x can split blocks across its TCs.
    nb = max(1, min(nb_vmem, -(-N // 2))) if N >= 2 else 1
    nblk = -(-N // nb)
    Npad = nblk * nb
    Lo = nb * L                        # gating/output lanes per grid step
    Lx = Lo + tail

    def to_blocks(a, dtype, pad_hw, lane_tail):
        """(N, C, H, W) -> (nblk, C, nb*L [+ lane_tail]) on the padded grid."""
        a = jnp.pad(a, ((0, Npad - N), (0, 0), pad_hw, pad_hw)).astype(dtype)
        C = a.shape[1]
        a = a.reshape(nblk, nb, C, L)
        a = jnp.transpose(a, (0, 2, 1, 3)).reshape(nblk, C, nb * L)
        if lane_tail:
            a = jnp.pad(a, ((0, 0), (0, 0), (0, lane_tail)))
        return a

    # x / h live on the symmetrically padded grid; c is aligned to the conv
    # output coordinates (output pixel (h, w) sits at lane h*Wp + w), so it is
    # padded on the bottom/right only.  Cross-element "bleed" of tap reads can
    # only hit garbage output positions, which the final crop discards.
    x_blk = to_blocks(x, compute_dtype, (pad, pad), tail)
    h_blk = to_blocks(h_prev, compute_dtype, (pad, pad), tail)
    c_blk = to_blocks(c_prev, jnp.float32, (0, 2 * pad), 0)

    # Per-tap weight matrices (t = kh*K + kw), split into the x- and h-channel
    # halves so the wrapper never materializes concat([x, h]).
    w = weight.astype(compute_dtype)
    wx = jnp.transpose(w[:, :F], (2, 3, 0, 1)).reshape(K * K, Cout, F)
    wh = jnp.transpose(w[:, F:], (2, 3, 0, 1)).reshape(K * K, Cout, F)
    b_col = bias.reshape(Cout, 1).astype(jnp.float32)

    kernel = functools.partial(_convlstm_kernel, ksize=K, wp=Wp, nf=F,
                               forget_bias=float(forget_bias))

    out_blk = pl.pallas_call(
        kernel,
        out_shape=jax.ShapeDtypeStruct((nblk, 2 * F, Lo), jnp.float32),
        grid_spec=pl.GridSpec(
            grid=(nblk,),
            in_specs=[
                pl.BlockSpec((1, F, Lx), lambda n: (n, 0, 0)),
                pl.BlockSpec((1, F, Lx), lambda n: (n, 0, 0)),
                pl.BlockSpec((K * K, Cout, F), lambda n: (0, 0, 0)),
                pl.BlockSpec((K * K, Cout, F), lambda n: (0, 0, 0)),
                pl.BlockSpec((Cout, 1), lambda n: (0, 0)),
                pl.BlockSpec((1, F, Lo), lambda n: (n, 0, 0)),
            ],
            out_specs=pl.BlockSpec((1, 2 * F, Lo), lambda n: (n, 0, 0)),
        ),
        # TODO(synk): for very large H*W*F a single batch element can exceed
        # the per-step VMEM budget; add a second spatial grid axis with a
        # (K-1)-row halo (overlapping lane windows need manual DMA).
        compiler_params=pltpu.CompilerParams(
            dimension_semantics=("parallel",),
            vmem_limit_bytes=_VMEM_LIMIT_BYTES),
    )(x_blk, h_blk, wx, wh, b_col, c_blk)

    # ---- glue: the slab IS new_state = [new_c ; new_h] on the padded grid --
    out = out_blk.reshape(nblk, 2 * F, nb, L)
    out = jnp.transpose(out, (0, 2, 1, 3)).reshape(Npad, 2 * F, Hp, Wp)
    new_state = out[:N, :, :H, :W]
    new_h = new_state[:, F:]
    return new_h, new_state


def _reference(x, state, weight, bias, *, feature_size, forget_bias=1.0):
    """Pure-JAX reference mirroring the PyTorch forward (NCHW, f32)."""
    pad = (feature_size - 1) // 2
    c, h = jnp.split(state, 2, axis=1)
    conv_in = jnp.concatenate([x, h], axis=1)
    conv_out = lax.conv_general_dilated(
        conv_in, weight, window_strides=(1, 1),
        padding=((pad, pad), (pad, pad)),
        dimension_numbers=("NCHW", "OIHW", "NCHW"))
    conv_out = conv_out + bias.reshape(1, -1, 1, 1)
    i, j, f, o = jnp.split(conv_out, 4, axis=1)
    new_c = c * jax.nn.sigmoid(f + forget_bias) + jax.nn.sigmoid(i) * jnp.tanh(j)
    new_h = jnp.tanh(new_c) * jax.nn.sigmoid(o)
    new_state = jnp.concatenate([new_c, new_h], axis=1)
    return new_h, new_state


if __name__ == "__main__":
    # Small, deterministic configuration.
    N = 2                 # batch
    num_features = 8      # F
    H = W = 16            # spatial
    feature_size = 3      # conv kernel size (odd -> 'same' padding)
    forget_bias = 1.0

    key = jax.random.PRNGKey(0)
    k_x, k_s, k_w, k_b = jax.random.split(key, 4)

    x = jax.random.normal(k_x, (N, num_features, H, W), dtype=jnp.float32)
    state = jax.random.normal(k_s, (N, 2 * num_features, H, W),
                              dtype=jnp.float32)
    # Deterministic synthetic parameters (PyTorch Conv2d shapes: OIHW, (Cout,)).
    weight = 0.1 * jax.random.normal(
        k_w, (4 * num_features, 2 * num_features, feature_size, feature_size),
        dtype=jnp.float32)
    bias = 0.1 * jax.random.normal(k_b, (4 * num_features,), dtype=jnp.float32)

    ref_h, ref_state = _reference(
        x, state, weight, bias,
        feature_size=feature_size, forget_bias=forget_bias)

    # 1) f32 matmul operands: exact-semantics check (tight tolerance).
    h32, s32 = conv_lstm_cell(
        x, state, weight, bias,
        feature_size=feature_size, num_features=num_features,
        forget_bias=forget_bias, compute_dtype=jnp.float32)
    jax.block_until_ready((h32, s32))
    assert jnp.allclose(h32, ref_h, atol=1e-4, rtol=1e-4)
    assert jnp.allclose(s32, ref_state, atol=1e-4, rtol=1e-4)

    # 2) bf16 MXU operands (recommended on v6e/v7x): relaxed bf16-matmul
    #    tolerance; gating math is still f32.
    hbf, sbf = conv_lstm_cell(
        x, state, weight, bias,
        feature_size=feature_size, num_features=num_features,
        forget_bias=forget_bias, compute_dtype=jnp.bfloat16)
    jax.block_until_ready((hbf, sbf))
    assert jnp.allclose(hbf, ref_h, atol=5e-2, rtol=5e-2)
    assert jnp.allclose(sbf, ref_state, atol=5e-2, rtol=5e-2)

    print("KERNEL_OK")
</pallas_src>

<mosaic_0001>
module attributes {stable_mosaic.version = 11 : i64} {
  func.func @_convlstm_kernel(%arg0: i32, %arg1: memref<1x8x362xf32, #tpu.memory_space<vmem>>, %arg2: memref<1x8x362xf32, #tpu.memory_space<vmem>>, %arg3: memref<9x32x8xf32, #tpu.memory_space<vmem>>, %arg4: memref<9x32x8xf32, #tpu.memory_space<vmem>>, %arg5: memref<32x1xf32, #tpu.memory_space<vmem>>, %arg6: memref<1x8x324xf32, #tpu.memory_space<vmem>>, %arg7: memref<1x16x324xf32, #tpu.memory_space<vmem>>) attributes {dimension_semantics = [#tpu.dimension_semantics<parallel>], iteration_bounds = array<i64: 2>, scalar_prefetch = 0 : i64, scratch_operands = 0 : i64, tpu.core_type = #tpu.core_type<tc>, window_params = [{transform_indices = @transform_0, window_bounds = array<i64: 1, 8, 362>}, {transform_indices = @transform_1, window_bounds = array<i64: 1, 8, 362>}, {pipeline_mode = #tpu.pipeline_mode<synchronous>, transform_indices = @transform_2, window_bounds = array<i64: 9, 32, 8>}, {pipeline_mode = #tpu.pipeline_mode<synchronous>, transform_indices = @transform_3, window_bounds = array<i64: 9, 32, 8>}, {pipeline_mode = #tpu.pipeline_mode<synchronous>, transform_indices = @transform_4, window_bounds = array<i64: 32, 1>}, {transform_indices = @transform_5, window_bounds = array<i64: 1, 8, 324>}, {transform_indices = @transform_6, window_bounds = array<i64: 1, 16, 324>}]} {
    %c0 = arith.constant 0 : index
    %c0_0 = arith.constant 0 : index
    %c0_1 = arith.constant 0 : index
    %0 = vector.load %arg1[%c0, %c0_0, %c0_1] : memref<1x8x362xf32, #tpu.memory_space<vmem>>, vector<1x8x362xf32>
    %1 = vector.shape_cast %0 : vector<1x8x362xf32> to vector<8x362xf32>
    %c0_2 = arith.constant 0 : index
    %c0_3 = arith.constant 0 : index
    %c0_4 = arith.constant 0 : index
    %2 = vector.load %arg2[%c0_2, %c0_3, %c0_4] : memref<1x8x362xf32, #tpu.memory_space<vmem>>, vector<1x8x362xf32>
    %3 = vector.shape_cast %2 : vector<1x8x362xf32> to vector<8x362xf32>
    %c0_5 = arith.constant 0 : index
    %c0_6 = arith.constant 0 : index
    %c0_7 = arith.constant 0 : index
    %4 = vector.load %arg3[%c0_5, %c0_6, %c0_7] : memref<9x32x8xf32, #tpu.memory_space<vmem>>, vector<1x32x8xf32>
    %5 = vector.shape_cast %4 : vector<1x32x8xf32> to vector<32x8xf32>
    %6 = vector.extract_strided_slice %1 {offsets = [0, 0], sizes = [8, 324], strides = [1, 1]} : vector<8x362xf32> to vector<8x324xf32>
    %cst = arith.constant dense<0.000000e+00> : vector<32x324xf32>
    %7 = tpu.matmul %5, %6, %cst {dimension_numbers = #tpu.dot_dimension_numbers<[1], [0], [0], [1], [0, 0, 1, 1], [], []>} : vector<32x8xf32>, vector<8x324xf32>, vector<32x324xf32> -> vector<32x324xf32>
    %c0_8 = arith.constant 0 : index
    %c0_9 = arith.constant 0 : index
    %c0_10 = arith.constant 0 : index
    %8 = vector.load %arg4[%c0_8, %c0_9, %c0_10] : memref<9x32x8xf32, #tpu.memory_space<vmem>>, vector<1x32x8xf32>
    %9 = vector.shape_cast %8 : vector<1x32x8xf32> to vector<32x8xf32>
    %10 = vector.extract_strided_slice %3 {offsets = [0, 0], sizes = [8, 324], strides = [1, 1]} : vector<8x362xf32> to vector<8x324xf32>
    %cst_11 = arith.constant dense<0.000000e+00> : vector<32x324xf32>
    %11 = tpu.matmul %9, %10, %cst_11 {dimension_numbers = #tpu.dot_dimension_numbers<[1], [0], [0], [1], [0, 0, 1, 1], [], []>} : vector<32x8xf32>, vector<8x324xf32>, vector<32x324xf32> -> vector<32x324xf32>
    %12 = arith.addf %7, %11 : vector<32x324xf32>
    %c1 = arith.constant 1 : index
    %c0_12 = arith.constant 0 : index
    %c0_13 = arith.constant 0 : index
    %13 = vector.load %arg3[%c1, %c0_12, %c0_13] : memref<9x32x8xf32, #tpu.memory_space<vmem>>, vector<1x32x8xf32>
    %14 = vector.shape_cast %13 : vector<1x32x8xf32> to vector<32x8xf32>
    %15 = vector.extract_strided_slice %1 {offsets = [0, 1], sizes = [8, 324], strides = [1, 1]} : vector<8x362xf32> to vector<8x324xf32>
    %cst_14 = arith.constant dense<0.000000e+00> : vector<32x324xf32>
    %16 = tpu.matmul %14, %15, %cst_14 {dimension_numbers = #tpu.dot_dimension_numbers<[1], [0], [0], [1], [0, 0, 1, 1], [], []>} : vector<32x8xf32>, vector<8x324xf32>, vector<32x324xf32> -> vector<32x324xf32>
    %c1_15 = arith.constant 1 : index
    %c0_16 = arith.constant 0 : index
    %c0_17 = arith.constant 0 : index
    %17 = vector.load %arg4[%c1_15, %c0_16, %c0_17] : memref<9x32x8xf32, #tpu.memory_space<vmem>>, vector<1x32x8xf32>
    %18 = vector.shape_cast %17 : vector<1x32x8xf32> to vector<32x8xf32>
    %19 = vector.extract_strided_slice %3 {offsets = [0, 1], sizes = [8, 324], strides = [1, 1]} : vector<8x362xf32> to vector<8x324xf32>
    %cst_18 = arith.constant dense<0.000000e+00> : vector<32x324xf32>
    %20 = tpu.matmul %18, %19, %cst_18 {dimension_numbers = #tpu.dot_dimension_numbers<[1], [0], [0], [1], [0, 0, 1, 1], [], []>} : vector<32x8xf32>, vector<8x324xf32>, vector<32x324xf32> -> vector<32x324xf32>
    %21 = arith.addf %16, %20 : vector<32x324xf32>
    %22 = arith.addf %12, %21 : vector<32x324xf32>
    %c2 = arith.constant 2 : index
    %c0_19 = arith.constant 0 : index
    %c0_20 = arith.constant 0 : index
    %23 = vector.load %arg3[%c2, %c0_19, %c0_20] : memref<9x32x8xf32, #tpu.memory_space<vmem>>, vector<1x32x8xf32>
    %24 = vector.shape_cast %23 : vector<1x32x8xf32> to vector<32x8xf32>
    %25 = vector.extract_strided_slice %1 {offsets = [0, 2], sizes = [8, 324], strides = [1, 1]} : vector<8x362xf32> to vector<8x324xf32>
    %cst_21 = arith.constant dense<0.000000e+00> : vector<32x324xf32>
    %26 = tpu.matmul %24, %25, %cst_21 {dimension_numbers = #tpu.dot_dimension_numbers<[1], [0], [0], [1], [0, 0, 1, 1], [], []>} : vector<32x8xf32>, vector<8x324xf32>, vector<32x324xf32> -> vector<32x324xf32>
    %c2_22 = arith.constant 2 : index
    %c0_23 = arith.constant 0 : index
    %c0_24 = arith.constant 0 : index
    %27 = vector.load %arg4[%c2_22, %c0_23, %c0_24] : memref<9x32x8xf32, #tpu.memory_space<vmem>>, vector<1x32x8xf32>
    %28 = vector.shape_cast %27 : vector<1x32x8xf32> to vector<32x8xf32>
    %29 = vector.extract_strided_slice %3 {offsets = [0, 2], sizes = [8, 324], strides = [1, 1]} : vector<8x362xf32> to vector<8x324xf32>
    %cst_25 = arith.constant dense<0.000000e+00> : vector<32x324xf32>
    %30 = tpu.matmul %28, %29, %cst_25 {dimension_numbers = #tpu.dot_dimension_numbers<[1], [0], [0], [1], [0, 0, 1, 1], [], []>} : vector<32x8xf32>, vector<8x324xf32>, vector<32x324xf32> -> vector<32x324xf32>
    %31 = arith.addf %26, %30 : vector<32x324xf32>
    %32 = arith.addf %22, %31 : vector<32x324xf32>
    %c3 = arith.constant 3 : index
    %c0_26 = arith.constant 0 : index
    %c0_27 = arith.constant 0 : index
    %33 = vector.load %arg3[%c3, %c0_26, %c0_27] : memref<9x32x8xf32, #tpu.memory_space<vmem>>, vector<1x32x8xf32>
    %34 = vector.shape_cast %33 : vector<1x32x8xf32> to vector<32x8xf32>
    %35 = vector.extract_strided_slice %1 {offsets = [0, 18], sizes = [8, 324], strides = [1, 1]} : vector<8x362xf32> to vector<8x324xf32>
    %cst_28 = arith.constant dense<0.000000e+00> : vector<32x324xf32>
    %36 = tpu.matmul %34, %35, %cst_28 {dimension_numbers = #tpu.dot_dimension_numbers<[1], [0], [0], [1], [0, 0, 1, 1], [], []>} : vector<32x8xf32>, vector<8x324xf32>, vector<32x324xf32> -> vector<32x324xf32>
    %c3_29 = arith.constant 3 : index
    %c0_30 = arith.constant 0 : index
    %c0_31 = arith.constant 0 : index
    %37 = vector.load %arg4[%c3_29, %c0_30, %c0_31] : memref<9x32x8xf32, #tpu.memory_space<vmem>>, vector<1x32x8xf32>
    %38 = vector.shape_cast %37 : vector<1x32x8xf32> to vector<32x8xf32>
    %39 = vector.extract_strided_slice %3 {offsets = [0, 18], sizes = [8, 324], strides = [1, 1]} : vector<8x362xf32> to vector<8x324xf32>
    %cst_32 = arith.constant dense<0.000000e+00> : vector<32x324xf32>
    %40 = tpu.matmul %38, %39, %cst_32 {dimension_numbers = #tpu.dot_dimension_numbers<[1], [0], [0], [1], [0, 0, 1, 1], [], []>} : vector<32x8xf32>, vector<8x324xf32>, vector<32x324xf32> -> vector<32x324xf32>
    %41 = arith.addf %36, %40 : vector<32x324xf32>
    %42 = arith.addf %32, %41 : vector<32x324xf32>
    %c4 = arith.constant 4 : index
    %c0_33 = arith.constant 0 : index
    %c0_34 = arith.constant 0 : index
    %43 = vector.load %arg3[%c4, %c0_33, %c0_34] : memref<9x32x8xf32, #tpu.memory_space<vmem>>, vector<1x32x8xf32>
    %44 = vector.shape_cast %43 : vector<1x32x8xf32> to vector<32x8xf32>
    %45 = vector.extract_strided_slice %1 {offsets = [0, 19], sizes = [8, 324], strides = [1, 1]} : vector<8x362xf32> to vector<8x324xf32>
    %cst_35 = arith.constant dense<0.000000e+00> : vector<32x324xf32>
    %46 = tpu.matmul %44, %45, %cst_35 {dimension_numbers = #tpu.dot_dimension_numbers<[1], [0], [0], [1], [0, 0, 1, 1], [], []>} : vector<32x8xf32>, vector<8x324xf32>, vector<32x324xf32> -> vector<32x324xf32>
    %c4_36 = arith.constant 4 : index
    %c0_37 = arith.constant 0 : index
    %c0_38 = arith.constant 0 : index
    %47 = vector.load %arg4[%c4_36, %c0_37, %c0_38] : memref<9x32x8xf32, #tpu.memory_space<vmem>>, vector<1x32x8xf32>
    %48 = vector.shape_cast %47 : vector<1x32x8xf32> to vector<32x8xf32>
    %49 = vector.extract_strided_slice %3 {offsets = [0, 19], sizes = [8, 324], strides = [1, 1]} : vector<8x362xf32> to vector<8x324xf32>
    %cst_39 = arith.constant dense<0.000000e+00> : vector<32x324xf32>
    %50 = tpu.matmul %48, %49, %cst_39 {dimension_numbers = #tpu.dot_dimension_numbers<[1], [0], [0], [1], [0, 0, 1, 1], [], []>} : vector<32x8xf32>, vector<8x324xf32>, vector<32x324xf32> -> vector<32x324xf32>
    %51 = arith.addf %46, %50 : vector<32x324xf32>
    %52 = arith.addf %42, %51 : vector<32x324xf32>
    %c5 = arith.constant 5 : index
    %c0_40 = arith.constant 0 : index
    %c0_41 = arith.constant 0 : index
    %53 = vector.load %arg3[%c5, %c0_40, %c0_41] : memref<9x32x8xf32, #tpu.memory_space<vmem>>, vector<1x32x8xf32>
    %54 = vector.shape_cast %53 : vector<1x32x8xf32> to vector<32x8xf32>
    %55 = vector.extract_strided_slice %1 {offsets = [0, 20], sizes = [8, 324], strides = [1, 1]} : vector<8x362xf32> to vector<8x324xf32>
    %cst_42 = arith.constant dense<0.000000e+00> : vector<32x324xf32>
    %56 = tpu.matmul %54, %55, %cst_42 {dimension_numbers = #tpu.dot_dimension_numbers<[1], [0], [0], [1], [0, 0, 1, 1], [], []>} : vector<32x8xf32>, vector<8x324xf32>, vector<32x324xf32> -> vector<32x324xf32>
    %c5_43 = arith.constant 5 : index
    %c0_44 = arith.constant 0 : index
    %c0_45 = arith.constant 0 : index
    %57 = vector.load %arg4[%c5_43, %c0_44, %c0_45] : memref<9x32x8xf32, #tpu.memory_space<vmem>>, vector<1x32x8xf32>
    %58 = vector.shape_cast %57 : vector<1x32x8xf32> to vector<32x8xf32>
    %59 = vector.extract_strided_slice %3 {offsets = [0, 20], sizes = [8, 324], strides = [1, 1]} : vector<8x362xf32> to vector<8x324xf32>
    %cst_46 = arith.constant dense<0.000000e+00> : vector<32x324xf32>
    %60 = tpu.matmul %58, %59, %cst_46 {dimension_numbers = #tpu.dot_dimension_numbers<[1], [0], [0], [1], [0, 0, 1, 1], [], []>} : vector<32x8xf32>, vector<8x324xf32>, vector<32x324xf32> -> vector<32x324xf32>
    %61 = arith.addf %56, %60 : vector<32x324xf32>
    %62 = arith.addf %52, %61 : vector<32x324xf32>
    %c6 = arith.constant 6 : index
    %c0_47 = arith.constant 0 : index
    %c0_48 = arith.constant 0 : index
    %63 = vector.load %arg3[%c6, %c0_47, %c0_48] : memref<9x32x8xf32, #tpu.memory_space<vmem>>, vector<1x32x8xf32>
    %64 = vector.shape_cast %63 : vector<1x32x8xf32> to vector<32x8xf32>
    %65 = vector.extract_strided_slice %1 {offsets = [0, 36], sizes = [8, 324], strides = [1, 1]} : vector<8x362xf32> to vector<8x324xf32>
    %cst_49 = arith.constant dense<0.000000e+00> : vector<32x324xf32>
    %66 = tpu.matmul %64, %65, %cst_49 {dimension_numbers = #tpu.dot_dimension_numbers<[1], [0], [0], [1], [0, 0, 1, 1], [], []>} : vector<32x8xf32>, vector<8x324xf32>, vector<32x324xf32> -> vector<32x324xf32>
    %c6_50 = arith.constant 6 : index
    %c0_51 = arith.constant 0 : index
    %c0_52 = arith.constant 0 : index
    %67 = vector.load %arg4[%c6_50, %c0_51, %c0_52] : memref<9x32x8xf32, #tpu.memory_space<vmem>>, vector<1x32x8xf32>
    %68 = vector.shape_cast %67 : vector<1x32x8xf32> to vector<32x8xf32>
    %69 = vector.extract_strided_slice %3 {offsets = [0, 36], sizes = [8, 324], strides = [1, 1]} : vector<8x362xf32> to vector<8x324xf32>
    %cst_53 = arith.constant dense<0.000000e+00> : vector<32x324xf32>
    %70 = tpu.matmul %68, %69, %cst_53 {dimension_numbers = #tpu.dot_dimension_numbers<[1], [0], [0], [1], [0, 0, 1, 1], [], []>} : vector<32x8xf32>, vector<8x324xf32>, vector<32x324xf32> -> vector<32x324xf32>
    %71 = arith.addf %66, %70 : vector<32x324xf32>
    %72 = arith.addf %62, %71 : vector<32x324xf32>
    %c7 = arith.constant 7 : index
    %c0_54 = arith.constant 0 : index
    %c0_55 = arith.constant 0 : index
    %73 = vector.load %arg3[%c7, %c0_54, %c0_55] : memref<9x32x8xf32, #tpu.memory_space<vmem>>, vector<1x32x8xf32>
    %74 = vector.shape_cast %73 : vector<1x32x8xf32> to vector<32x8xf32>
    %75 = vector.extract_strided_slice %1 {offsets = [0, 37], sizes = [8, 324], strides = [1, 1]} : vector<8x362xf32> to vector<8x324xf32>
    %cst_56 = arith.constant dense<0.000000e+00> : vector<32x324xf32>
    %76 = tpu.matmul %74, %75, %cst_56 {dimension_numbers = #tpu.dot_dimension_numbers<[1], [0], [0], [1], [0, 0, 1, 1], [], []>} : vector<32x8xf32>, vector<8x324xf32>, vector<32x324xf32> -> vector<32x324xf32>
    %c7_57 = arith.constant 7 : index
    %c0_58 = arith.constant 0 : index
    %c0_59 = arith.constant 0 : index
    %77 = vector.load %arg4[%c7_57, %c0_58, %c0_59] : memref<9x32x8xf32, #tpu.memory_space<vmem>>, vector<1x32x8xf32>
    %78 = vector.shape_cast %77 : vector<1x32x8xf32> to vector<32x8xf32>
    %79 = vector.extract_strided_slice %3 {offsets = [0, 37], sizes = [8, 324], strides = [1, 1]} : vector<8x362xf32> to vector<8x324xf32>
    %cst_60 = arith.constant dense<0.000000e+00> : vector<32x324xf32>
    %80 = tpu.matmul %78, %79, %cst_60 {dimension_numbers = #tpu.dot_dimension_numbers<[1], [0], [0], [1], [0, 0, 1, 1], [], []>} : vector<32x8xf32>, vector<8x324xf32>, vector<32x324xf32> -> vector<32x324xf32>
    %81 = arith.addf %76, %80 : vector<32x324xf32>
    %82 = arith.addf %72, %81 : vector<32x324xf32>
    %c8 = arith.constant 8 : index
    %c0_61 = arith.constant 0 : index
    %c0_62 = arith.constant 0 : index
    %83 = vector.load %arg3[%c8, %c0_61, %c0_62] : memref<9x32x8xf32, #tpu.memory_space<vmem>>, vector<1x32x8xf32>
    %84 = vector.shape_cast %83 : vector<1x32x8xf32> to vector<32x8xf32>
    %85 = vector.extract_strided_slice %1 {offsets = [0, 38], sizes = [8, 324], strides = [1, 1]} : vector<8x362xf32> to vector<8x324xf32>
    %cst_63 = arith.constant dense<0.000000e+00> : vector<32x324xf32>
    %86 = tpu.matmul %84, %85, %cst_63 {dimension_numbers = #tpu.dot_dimension_numbers<[1], [0], [0], [1], [0, 0, 1, 1], [], []>} : vector<32x8xf32>, vector<8x324xf32>, vector<32x324xf32> -> vector<32x324xf32>
    %c8_64 = arith.constant 8 : index
    %c0_65 = arith.constant 0 : index
    %c0_66 = arith.constant 0 : index
    %87 = vector.load %arg4[%c8_64, %c0_65, %c0_66] : memref<9x32x8xf32, #tpu.memory_space<vmem>>, vector<1x32x8xf32>
    %88 = vector.shape_cast %87 : vector<1x32x8xf32> to vector<32x8xf32>
    %89 = vector.extract_strided_slice %3 {offsets = [0, 38], sizes = [8, 324], strides = [1, 1]} : vector<8x362xf32> to vector<8x324xf32>
    %cst_67 = arith.constant dense<0.000000e+00> : vector<32x324xf32>
    %90 = tpu.matmul %88, %89, %cst_67 {dimension_numbers = #tpu.dot_dimension_numbers<[1], [0], [0], [1], [0, 0, 1, 1], [], []>} : vector<32x8xf32>, vector<8x324xf32>, vector<32x324xf32> -> vector<32x324xf32>
    %91 = arith.addf %86, %90 : vector<32x324xf32>
    %92 = arith.addf %82, %91 : vector<32x324xf32>
    %c0_68 = arith.constant 0 : index
    %c0_69 = arith.constant 0 : index
    %93 = vector.load %arg5[%c0_68, %c0_69] : memref<32x1xf32, #tpu.memory_space<vmem>>, vector<32x1xf32>
    %94 = vector.extract_strided_slice %92 {offsets = [0, 0], sizes = [8, 324], strides = [1, 1]} : vector<32x324xf32> to vector<8x324xf32>
    %95 = vector.extract_strided_slice %93 {offsets = [0, 0], sizes = [8, 1], strides = [1, 1]} : vector<32x1xf32> to vector<8x1xf32>
    %96 = vector.broadcast %95 : vector<8x1xf32> to vector<8x324xf32>
    %97 = arith.addf %94, %96 : vector<8x324xf32>
    %98 = vector.extract_strided_slice %92 {offsets = [8, 0], sizes = [8, 324], strides = [1, 1]} : vector<32x324xf32> to vector<8x324xf32>
    %99 = vector.extract_strided_slice %93 {offsets = [8, 0], sizes = [8, 1], strides = [1, 1]} : vector<32x1xf32> to vector<8x1xf32>
    %100 = vector.broadcast %99 : vector<8x1xf32> to vector<8x324xf32>
    %101 = arith.addf %98, %100 : vector<8x324xf32>
    %102 = vector.extract_strided_slice %92 {offsets = [16, 0], sizes = [8, 324], strides = [1, 1]} : vector<32x324xf32> to vector<8x324xf32>
    %103 = vector.extract_strided_slice %93 {offsets = [16, 0], sizes = [8, 1], strides = [1, 1]} : vector<32x1xf32> to vector<8x1xf32>
    %cst_70 = arith.constant 1.000000e+00 : f32
    %104 = vector.broadcast %cst_70 : f32 to vector<8x1xf32>
    %105 = arith.addf %103, %104 : vector<8x1xf32>
    %106 = vector.broadcast %105 : vector<8x1xf32> to vector<8x324xf32>
    %107 = arith.addf %102, %106 : vector<8x324xf32>
    %108 = vector.extract_strided_slice %92 {offsets = [24, 0], sizes = [8, 324], strides = [1, 1]} : vector<32x324xf32> to vector<8x324xf32>
    %109 = vector.extract_strided_slice %93 {offsets = [24, 0], sizes = [8, 1], strides = [1, 1]} : vector<32x1xf32> to vector<8x1xf32>
    %110 = vector.broadcast %109 : vector<8x1xf32> to vector<8x324xf32>
    %111 = arith.addf %108, %110 : vector<8x324xf32>
    %c0_71 = arith.constant 0 : index
    %c0_72 = arith.constant 0 : index
    %c0_73 = arith.constant 0 : index
    %112 = vector.load %arg6[%c0_71, %c0_72, %c0_73] : memref<1x8x324xf32, #tpu.memory_space<vmem>>, vector<1x8x324xf32>
    %113 = vector.shape_cast %112 : vector<1x8x324xf32> to vector<8x324xf32>
    %cst_74 = arith.constant 5.000000e-01 : f32
    %114 = vector.broadcast %cst_74 : f32 to vector<8x324xf32>
    %115 = arith.mulf %114, %107 : vector<8x324xf32>
    %116 = math.tanh %115 : vector<8x324xf32>
    %cst_75 = arith.constant 5.000000e-01 : f32
    %117 = vector.broadcast %cst_75 : f32 to vector<8x324xf32>
    %118 = arith.mulf %117, %116 : vector<8x324xf32>
    %cst_76 = arith.constant 5.000000e-01 : f32
    %119 = vector.broadcast %cst_76 : f32 to vector<8x324xf32>
    %120 = arith.addf %118, %119 : vector<8x324xf32>
    %121 = arith.mulf %113, %120 : vector<8x324xf32>
    %cst_77 = arith.constant 5.000000e-01 : f32
    %122 = vector.broadcast %cst_77 : f32 to vector<8x324xf32>
    %123 = arith.mulf %122, %97 : vector<8x324xf32>
    %124 = math.tanh %123 : vector<8x324xf32>
    %cst_78 = arith.constant 5.000000e-01 : f32
    %125 = vector.broadcast %cst_78 : f32 to vector<8x324xf32>
    %126 = arith.mulf %125, %124 : vector<8x324xf32>
    %cst_79 = arith.constant 5.000000e-01 : f32
    %127 = vector.broadcast %cst_79 : f32 to vector<8x324xf32>
    %128 = arith.addf %126, %127 : vector<8x324xf32>
    %129 = math.tanh %101 : vector<8x324xf32>
    %130 = arith.mulf %128, %129 : vector<8x324xf32>
    %131 = arith.addf %121, %130 : vector<8x324xf32>
    %132 = math.tanh %131 : vector<8x324xf32>
    %cst_80 = arith.constant 5.000000e-01 : f32
    %133 = vector.broadcast %cst_80 : f32 to vector<8x324xf32>
    %134 = arith.mulf %133, %111 : vector<8x324xf32>
    %135 = math.tanh %134 : vector<8x324xf32>
    %cst_81 = arith.constant 5.000000e-01 : f32
    %136 = vector.broadcast %cst_81 : f32 to vector<8x324xf32>
    %137 = arith.mulf %136, %135 : vector<8x324xf32>
    %cst_82 = arith.constant 5.000000e-01 : f32
    %138 = vector.broadcast %cst_82 : f32 to vector<8x324xf32>
    %139 = arith.addf %137, %138 : vector<8x324xf32>
    %140 = arith.mulf %132, %139 : vector<8x324xf32>
    %c0_83 = arith.constant 0 : index
    %c0_84 = arith.constant 0 : index
    %c0_85 = arith.constant 0 : index
    %141 = vector.load %arg7[%c0_83, %c0_84, %c0_85] : memref<1x16x324xf32, #tpu.memory_space<vmem>>, vector<1x8x324xf32>
    %142 = vector.shape_cast %141 : vector<1x8x324xf32> to vector<8x324xf32>
    %143 = vector.shape_cast %131 : vector<8x324xf32> to vector<1x8x324xf32>
    tpu.vector_store %arg7[%c0_83, %c0_84, %c0_85], %143 {strides = array<i32>} : memref<1x16x324xf32, #tpu.memory_space<vmem>>, vector<1x8x324xf32>,
    %c0_86 = arith.constant 0 : index
    %c8_87 = arith.constant 8 : index
    %c0_88 = arith.constant 0 : index
    %144 = vector.load %arg7[%c0_86, %c8_87, %c0_88] : memref<1x16x324xf32, #tpu.memory_space<vmem>>, vector<1x8x324xf32>
    %145 = vector.shape_cast %144 : vector<1x8x324xf32> to vector<8x324xf32>
    %146 = vector.shape_cast %140 : vector<8x324xf32> to vector<1x8x324xf32>
    tpu.vector_store %arg7[%c0_86, %c8_87, %c0_88], %146 {strides = array<i32>} : memref<1x16x324xf32, #tpu.memory_space<vmem>>, vector<1x8x324xf32>,
    return
  }
  func.func @transform_0(%arg0: i32) -> (i32, i32, i32) {
    %c0_i32 = arith.constant 0 : i32
    %c0_i32_0 = arith.constant 0 : i32
    %c0_i32_1 = arith.constant 0 : i32
    return %arg0, %c0_i32, %c0_i32_0 : i32, i32, i32
  }
  func.func @transform_1(%arg0: i32) -> (i32, i32, i32) {
    %c0_i32 = arith.constant 0 : i32
    %c0_i32_0 = arith.constant 0 : i32
    %c0_i32_1 = arith.constant 0 : i32
    return %arg0, %c0_i32, %c0_i32_0 : i32, i32, i32
  }
  func.func @transform_2(%arg0: i32) -> (i32, i32, i32) {
    %c0_i32 = arith.constant 0 : i32
    %c0_i32_0 = arith.constant 0 : i32
    %c0_i32_1 = arith.constant 0 : i32
    %c0_i32_2 = arith.constant 0 : i32
    return %c0_i32, %c0_i32_0, %c0_i32_1 : i32, i32, i32
  }
  func.func @transform_3(%arg0: i32) -> (i32, i32, i32) {
    %c0_i32 = arith.constant 0 : i32
    %c0_i32_0 = arith.constant 0 : i32
    %c0_i32_1 = arith.constant 0 : i32
    %c0_i32_2 = arith.constant 0 : i32
    return %c0_i32, %c0_i32_0, %c0_i32_1 : i32, i32, i32
  }
  func.func @transform_4(%arg0: i32) -> (i32, i32) {
    %c0_i32 = arith.constant 0 : i32
    %c0_i32_0 = arith.constant 0 : i32
    %c0_i32_1 = arith.constant 0 : i32
    return %c0_i32, %c0_i32_0 : i32, i32
  }
  func.func @transform_5(%arg0: i32) -> (i32, i32, i32) {
    %c0_i32 = arith.constant 0 : i32
    %c0_i32_0 = arith.constant 0 : i32
    %c0_i32_1 = arith.constant 0 : i32
    return %arg0, %c0_i32, %c0_i32_0 : i32, i32, i32
  }
  func.func @transform_6(%arg0: i32) -> (i32, i32, i32) {
    %c0_i32 = arith.constant 0 : i32
    %c0_i32_0 = arith.constant 0 : i32
    %c0_i32_1 = arith.constant 0 : i32
    return %arg0, %c0_i32, %c0_i32_0 : i32, i32, i32
  }
}

</mosaic_0001>

<llo_original>
// kernel: tpu_custom_call.1
$region0: #{tpu_custom_call.1}
  #allocation0 [shape = 'u32[]', space=smem, size = 0x4, offset = 0x4, fixed_abs, tag = 'smem constant byte address 0x4 - core index']
  #allocation1 [shape = 'u32[144,128]{1,0:T(1,128)}', space=vmem, size = 0x12000, scoped, tag = 'internal scratch']
  %s0 = inlined_call_operand.vmem [shape: f32[2,8,362], index: 0, kind: input, shape index: {}]
  %s1 = inlined_call_operand.vmem [shape: f32[2,8,362], index: 1, kind: input, shape index: {}]
  %s2 = inlined_call_operand.vmem [shape: f32[9,32,8], index: 2, kind: input, shape index: {}]
  %s3 = inlined_call_operand.vmem [shape: f32[9,32,8], index: 3, kind: input, shape index: {}]
  %s4 = inlined_call_operand.vmem [shape: f32[32,1], index: 4, kind: input, shape index: {}]
  %s5 = inlined_call_operand.vmem [shape: f32[2,8,324], index: 5, kind: input, shape index: {}]
  %s6 = inlined_call_operand.hbm [shape: f32[2,16,324], index: 6, kind: output, shape index: {}]
  %s7 = sld [smem:[#allocation0]]
  $region57: #{tpu_custom_call.1} parent=0
    _
  %s9 = ssub.s32 1, %s7
  %s10 = scalar_select 0, %s9, %s7
  $region1: #{tpu_custom_call.1} parent=0
    #allocation2 [shape = 'u8[49152]{0}', space=vmem, size = 0xc000, scoped, tag = 'output window, operand 0']
    #allocation3 [shape = 's32[2]{0}', space=sflag, size = 0x8, scoped, tag = 'scoped memory for tpu_custom_call.1']
    %11 = vsyncpa [#allocation3], 0
    %s12 = scalar_lea.sflag [#allocation3], 1
    %13 = vsyncpa %s12, 0
    loop: start=0, step=1, limit=4
    $region2: #{tpu_custom_call.1} parent=1 // loop_pre_header
      _
    $region3: #{tpu_custom_call.1} parent=1 // loop_header
      %s15 = sphi 0, %s19
      %p16 = scmp.ge.s32.totalorder %s15, 4
      %s25 = sphi 0, %s27
      %s28 = sphi 0, %s25
      %s29 = sphi 0, %s28
      %s45 = sphi 0, %s29
      %s51 = sphi 0, %s53
      %s54 = sphi 0, %s51
      %s55 = sphi 0, %s54
      %s71 = sphi 0, %s55
      %s75 = sphi 0, %s75
      %s77 = sphi 0, %s75
      %s78 = sphi 0, %s77
      %s92 = sphi 0, %s78
      %s96 = sphi 0, %s96
      %s98 = sphi 0, %s96
      %s99 = sphi 0, %s98
      %s113 = sphi 0, %s99
      %s117 = sphi 0, %s117
      %s119 = sphi 0, %s117
      %s120 = sphi 0, %s119
      %s134 = sphi 0, %s120
      %s140 = sphi 0, %s142
      %s143 = sphi 0, %s140
      %s144 = sphi 0, %s143
      %s160 = sphi 0, %s144
      %s166 = sphi 0, %s168
      %s169 = sphi 0, %s166
      %s170 = sphi 0, %s169
      %s186 = sphi 0, %s170
    $region4: #{tpu_custom_call.1} parent=1 // loop_header_branch
      %18 = sbr.rel (%p16) target = $region8
    $region5: #{tpu_custom_call.1} parent=1 // loop_body
      %s20 = ssub.s32 %s15, 1
      %s21 = ssub.s32 %s15, 2
      %s22 = sadd.s32 %s15, 1
      %s23 = ssub.s32 %s15, %s22
      %p24 = scmp.eq.s32.totalorder %s23, 0
      %s26 = sadd.s32 %s25, 1
      %s27 = scalar_select %p24, %s25, %s26
      %p30 = pneg %p24
      %p31 = scmp.eq.s32.totalorder %s15, 1
      %p32 = por %p30, %p31
      %p33 = scmp.ne.s32.totalorder %s25, %s28
      %p34 = scmp.eq.s32.totalorder %s15, 0
      %p35 = por %p33, %p34
      %p36 = scmp.ne.s32.totalorder %s25, %s28
      %p37 = scmp.eq.s32.totalorder %s20, 1
      %p38 = por %p36, %p37
      %p39 = scmp.ne.s32.totalorder %s28, %s29
      %p40 = scmp.eq.s32.totalorder %s20, 0
      %p41 = por %p39, %p40
      %p42 = scmp.ne.s32.totalorder %s28, %s29
      %p43 = scmp.eq.s32.totalorder %s21, 1
      %p44 = por %p42, %p43
      %p46 = scmp.ne.s32.totalorder %s29, %s45
      %p47 = scmp.eq.s32.totalorder %s21, 0
      %p48 = por %p46, %p47
      %s49 = ssub.s32 %s15, %s22
      %p50 = scmp.eq.s32.totalorder %s49, 0
      %s52 = sadd.s32 %s51, 1
      %s53 = scalar_select %p50, %s51, %s52
      %p56 = pneg %p50
      %p57 = scmp.eq.s32.totalorder %s15, 1
      %p58 = por %p56, %p57
      %p59 = scmp.ne.s32.totalorder %s51, %s54
      %p60 = scmp.eq.s32.totalorder %s15, 0
      %p61 = por %p59, %p60
      %p62 = scmp.ne.s32.totalorder %s51, %s54
      %p63 = scmp.eq.s32.totalorder %s20, 1
      %p64 = por %p62, %p63
      %p65 = scmp.ne.s32.totalorder %s54, %s55
      %p66 = scmp.eq.s32.totalorder %s20, 0
      %p67 = por %p65, %p66
      %p68 = scmp.ne.s32.totalorder %s54, %s55
      %p69 = scmp.eq.s32.totalorder %s21, 1
      %p70 = por %p68, %p69
      %p72 = scmp.ne.s32.totalorder %s55, %s71
      %p73 = scmp.eq.s32.totalorder %s21, 0
      %p74 = por %p72, %p73
      %s76 = sadd.s32 %s75, 1
      %p79 = scmp.eq.s32.totalorder %s15, 1
      %p80 = scmp.ne.s32.totalorder %s75, %s77
      %p81 = scmp.eq.s32.totalorder %s15, 0
      %p82 = por %p80, %p81
      %p83 = scmp.ne.s32.totalorder %s75, %s77
      %p84 = scmp.eq.s32.totalorder %s20, 1
      %p85 = por %p83, %p84
      %p86 = scmp.ne.s32.totalorder %s77, %s78
      %p87 = scmp.eq.s32.totalorder %s20, 0
      %p88 = por %p86, %p87
      %p89 = scmp.ne.s32.totalorder %s77, %s78
      %p90 = scmp.eq.s32.totalorder %s21, 1
      %p91 = por %p89, %p90
      %p93 = scmp.ne.s32.totalorder %s78, %s92
      %p94 = scmp.eq.s32.totalorder %s21, 0
      %p95 = por %p93, %p94
      %s97 = sadd.s32 %s96, 1
      %p100 = scmp.eq.s32.totalorder %s15, 1
      %p101 = scmp.ne.s32.totalorder %s96, %s98
      %p102 = scmp.eq.s32.totalorder %s15, 0
      %p103 = por %p101, %p102
      %p104 = scmp.ne.s32.totalorder %s96, %s98
      %p105 = scmp.eq.s32.totalorder %s20, 1
      %p106 = por %p104, %p105
      %p107 = scmp.ne.s32.totalorder %s98, %s99
      %p108 = scmp.eq.s32.totalorder %s20, 0
      %p109 = por %p107, %p108
      %p110 = scmp.ne.s32.totalorder %s98, %s99
      %p111 = scmp.eq.s32.totalorder %s21, 1
      %p112 = por %p110, %p111
      %p114 = scmp.ne.s32.totalorder %s99, %s113
      %p115 = scmp.eq.s32.totalorder %s21, 0
      %p116 = por %p114, %p115
      %s118 = sadd.s32 %s117, 1
      %p121 = scmp.eq.s32.totalorder %s15, 1
      %p122 = scmp.ne.s32.totalorder %s117, %s119
      %p123 = scmp.eq.s32.totalorder %s15, 0
      %p124 = por %p122, %p123
      %p125 = scmp.ne.s32.totalorder %s117, %s119
      %p126 = scmp.eq.s32.totalorder %s20, 1
      %p127 = por %p125, %p126
      %p128 = scmp.ne.s32.totalorder %s119, %s120
      %p129 = scmp.eq.s32.totalorder %s20, 0
      %p130 = por %p128, %p129
      %p131 = scmp.ne.s32.totalorder %s119, %s120
      %p132 = scmp.eq.s32.totalorder %s21, 1
      %p133 = por %p131, %p132
      %p135 = scmp.ne.s32.totalorder %s120, %s134
      %p136 = scmp.eq.s32.totalorder %s21, 0
      %p137 = por %p135, %p136
      %s138 = ssub.s32 %s15, %s22
      %p139 = scmp.eq.s32.totalorder %s138, 0
      %s141 = sadd.s32 %s140, 1
      %s142 = scalar_select %p139, %s140, %s141
      %p145 = pneg %p139
      %p146 = scmp.eq.s32.totalorder %s15, 1
      %p147 = por %p145, %p146
      %p148 = scmp.ne.s32.totalorder %s140, %s143
      %p149 = scmp.eq.s32.totalorder %s15, 0
      %p150 = por %p148, %p149
      %p151 = scmp.ne.s32.totalorder %s140, %s143
      %p152 = scmp.eq.s32.totalorder %s20, 1
      %p153 = por %p151, %p152
      %p154 = scmp.ne.s32.totalorder %s143, %s144
      %p155 = scmp.eq.s32.totalorder %s20, 0
      %p156 = por %p154, %p155
      %p157 = scmp.ne.s32.totalorder %s143, %s144
      %p158 = scmp.eq.s32.totalorder %s21, 1
      %p159 = por %p157, %p158
      %p161 = scmp.ne.s32.totalorder %s144, %s160
      %p162 = scmp.eq.s32.totalorder %s21, 0
      %p163 = por %p161, %p162
      %s164 = ssub.s32 %s15, %s22
      %p165 = scmp.eq.s32.totalorder %s164, 0
      %s167 = sadd.s32 %s166, 1
      %s168 = scalar_select %p165, %s166, %s167
      %p171 = pneg %p165
      %p172 = scmp.eq.s32.totalorder %s15, 1
      %p173 = por %p171, %p172
      %p174 = scmp.ne.s32.totalorder %s166, %s169
      %p175 = scmp.eq.s32.totalorder %s15, 0
      %p176 = por %p174, %p175
      %p177 = scmp.ne.s32.totalorder %s166, %s169
      %p178 = scmp.eq.s32.totalorder %s20, 1
      %p179 = por %p177, %p178
      %p180 = scmp.ne.s32.totalorder %s169, %s170
      %p181 = scmp.eq.s32.totalorder %s20, 0
      %p182 = por %p180, %p181
      %p183 = scmp.ne.s32.totalorder %s169, %s170
      %p184 = scmp.eq.s32.totalorder %s21, 1
      %p185 = por %p183, %p184
      %p187 = scmp.ne.s32.totalorder %s170, %s186
      %p188 = scmp.eq.s32.totalorder %s21, 0
      %p189 = por %p187, %p188
      %p190 = scmp.le.s32.totalorder 1, %s15
      %p191 = scmp.lt.s32.totalorder %s15, 3
      %p192 = pnand %p190, %p191
      %p193 = pneg %p192
      // Predicated region
      $region9: #{tpu_custom_call.1} parent=5 // pred_check
        _
      $region10: #{tpu_custom_call.1} parent=5 // pred_check_branch
        %195 = sbr.rel (%p192) target = $region12
      $region11: #{tpu_custom_call.1} parent=5 // pred_region
        %s196 = ssub.s32 %s15, 1
        // Predicated region
        $region13: #{tpu_custom_call.1} parent=11 // pred_check
          %p197 = pneg %p88
        $region14: #{tpu_custom_call.1} parent=11 // pred_check_branch
          %199 = sbr.rel (%p197) target = $region16
        $region15: #{tpu_custom_call.1} parent=11 // pred_region
          _
        $region16: #{tpu_custom_call.1} parent=11 // pred_fallthru
          _
        // Predicated region
        $region17: #{tpu_custom_call.1} parent=11 // pred_check
          %p200 = pneg %p109
        $region18: #{tpu_custom_call.1} parent=11 // pred_check_branch
          %202 = sbr.rel (%p200) target = $region20
        $region19: #{tpu_custom_call.1} parent=11 // pred_region
          _
        $region20: #{tpu_custom_call.1} parent=11 // pred_fallthru
          _
        // Predicated region
        $region21: #{tpu_custom_call.1} parent=11 // pred_check
          %p203 = pneg %p130
        $region22: #{tpu_custom_call.1} parent=11 // pred_check_branch
          %205 = sbr.rel (%p203) target = $region24
        $region23: #{tpu_custom_call.1} parent=11 // pred_region
          _
        $region24: #{tpu_custom_call.1} parent=11 // pred_fallthru
          _
      $region12: #{tpu_custom_call.1} parent=5 // pred_fallthru
        _
      %p206 = scmp.lt.s32.totalorder %s15, 2
      // Predicated region
      $region25: #{tpu_custom_call.1} parent=5 // pred_check
        %p207 = pneg %p206
      $region26: #{tpu_custom_call.1} parent=5 // pred_check_branch
        %209 = sbr.rel (%p207) target = $region28
      $region27: #{tpu_custom_call.1} parent=5 // pred_region
        // Predicated region
        $region29: #{tpu_custom_call.1} parent=27 // pred_check
          %p210 = pneg %p35
        $region30: #{tpu_custom_call.1} parent=27 // pred_check_branch
          %212 = sbr.rel (%p210) target = $region32
        $region31: #{tpu_custom_call.1} parent=27 // pred_region
          %p213 = scmp.lt.s32.totalorder %s15, 1
          %s214 = scalar_select %p213, %s15, 1
          %s215 = smul.addr %s214, 3
          %s216 = smul.addr %s215, 8
          %s217 = scalar_lea.vmem %s0, %s216
        $region32: #{tpu_custom_call.1} parent=27 // pred_fallthru
          _
        // Predicated region
        $region33: #{tpu_custom_call.1} parent=27 // pred_check
          %p218 = pneg %p61
        $region34: #{tpu_custom_call.1} parent=27 // pred_check_branch
          %220 = sbr.rel (%p218) target = $region36
        $region35: #{tpu_custom_call.1} parent=27 // pred_region
          %p221 = scmp.lt.s32.totalorder %s15, 1
          %s222 = scalar_select %p221, %s15, 1
          %s223 = smul.addr %s222, 3
          %s224 = smul.addr %s223, 8
          %s225 = scalar_lea.vmem %s1, %s224
        $region36: #{tpu_custom_call.1} parent=27 // pred_fallthru
          _
        // Predicated region
        $region37: #{tpu_custom_call.1} parent=27 // pred_check
          %p226 = pneg %p150
        $region38: #{tpu_custom_call.1} parent=27 // pred_check_branch
          %228 = sbr.rel (%p226) target = $region40
        $region39: #{tpu_custom_call.1} parent=27 // pred_region
          %p229 = scmp.lt.s32.totalorder %s15, 1
          %s230 = scalar_select %p229, %s15, 1
          %s231 = smul.addr %s230, 3
          %s232 = smul.addr %s231, 8
          %s233 = scalar_lea.vmem %s5, %s232
        $region40: #{tpu_custom_call.1} parent=27 // pred_fallthru
          _
      $region28: #{tpu_custom_call.1} parent=5 // pred_fallthru
        _
      %p234 = scmp.le.s32.totalorder 1, %s15
      %p235 = scmp.lt.s32.totalorder %s15, 3
      %p236 = pnand %p234, %p235
      %p237 = pneg %p236
      // Predicated region
      $region41: #{tpu_custom_call.1} parent=5 // pred_check
        _
      $region42: #{tpu_custom_call.1} parent=5 // pred_check_branch
        %239 = sbr.rel (%p236) target = $region44
      $region43: #{tpu_custom_call.1} parent=5 // pred_region
        %s240 = ssub.s32 %s15, 1
        %p241 = scmp.lt.s32.totalorder %s20, 1
        %s242 = scalar_select %p241, %s20, 1
        %s243 = smul.addr %s242, 3
        %s244 = smul.addr %s243, 8
        %s245 = scalar_lea.vmem %s0, %s244
        %p246 = pneg %p41
        %p247 = pneg %p38
        %p248 = scmp.lt.s32.totalorder %s20, 1
        %s249 = scalar_select %p248, %s20, 1
        %s250 = smul.addr %s249, 3
        %s251 = smul.addr %s250, 8
        %s252 = scalar_lea.vmem %s1, %s251
        %p253 = pneg %p67
        %p254 = pneg %p64
        %p255 = pneg %p88
        %p256 = pneg %p85
        %p257 = pneg %p109
        %p258 = pneg %p106
        %p259 = pneg %p130
        %p260 = pneg %p127
        %p261 = scmp.lt.s32.totalorder %s20, 1
        %s262 = scalar_select %p261, %s20, 1
        %s263 = smul.addr %s262, 3
        %s264 = smul.addr %s263, 8
        %s265 = scalar_lea.vmem %s5, %s264
        %p266 = pneg %p156
        %p267 = pneg %p153
        %p268 = pneg %p182
        %p269 = pneg %p179
        %s270 = sand.u32 %s169, 1
        %s271 = scalar_lea.sflag [#allocation3], %s270
        %s272 = sand.u32 %s169, 1
        %s273 = smul.addr %s272, 48
        %s274 = scalar_lea.vmem [#allocation2], %s273
        %p275 = scmp.lt.s32.totalorder %s20, 1
        %s276 = scalar_select %p275, %s20, 1
        %s277 = smul.addr %s276, 3
        %s278 = smul.addr %s277, 8
        %s279 = scalar_lea.vmem %s0, %s278
        %p280 = scmp.lt.s32.totalorder %s20, 1
        %s281 = scalar_select %p280, %s20, 1
        %s282 = smul.addr %s281, 3
        %s283 = smul.addr %s282, 8
        %s284 = scalar_lea.vmem %s1, %s283
        %p285 = scmp.lt.s32.totalorder %s20, 1
        %s286 = scalar_select %p285, %s20, 1
        %s287 = smul.addr %s286, 3
        %s288 = smul.addr %s287, 8
        %s289 = scalar_lea.vmem %s5, %s288
        %v290 = vld [vmem:[%s279] sm:$0xff]
        %v291 = vld [vmem:[%s279 + $0x8] sm:$0xff]
        %v292 = vld [vmem:[%s279 + $0x10] sm:$0xff]
        %v293 = vld [vmem:[%s284] sm:$0xff]
        %v294 = vld [vmem:[%s284 + $0x8] sm:$0xff]
        %v295 = vld [vmem:[%s284 + $0x10] sm:$0xff]
        %v296 = vld [vmem:[%s2] sm:$0xff]
        %v297 = vld [vmem:[%s2 + $0x8] sm:$0xff]
        %v298 = vld [vmem:[%s2 + $0x10] sm:$0xff]
        %v299 = vld [vmem:[%s2 + $0x18] sm:$0xff]
        %v300 = vld [vmem:[%s3] sm:$0xff]
        %v301 = vld [vmem:[%s3 + $0x8] sm:$0xff]
        %v302 = vld [vmem:[%s3 + $0x10] sm:$0xff]
        %v303 = vld [vmem:[%s3 + $0x18] sm:$0xff]
        %vm304 = vcmask 64512
        %v306 = vsel %vm304, %v300, 0
        %v309 = vsel %vm304, %v301, 0
        %v312 = vsel %vm304, %v302, 0
        %v315 = vsel %vm304, %v303, 0
        %317 = vmatprep.subr.mxu0 %v294
        %318 = vmatpush1.msra.mxu0 %v293
        %319 = vmatprep.subr.mxu0 0.0
        %320 = vmatpush1.msra.mxu0 0.0
        %321 = vmatprep.subr.mxu0 0.0
        %322 = vmatpush1.msra.mxu0 0.0
        %323 = vmatprep.subr.mxu0 0.0
        %324 = vmatpush1.msra.mxu0 0.0
        %325 = vmatprep.subr.mxu0 0.0
        %326 = vmatpush1.msra.mxu0 0.0
        %327 = vmatprep.subr.mxu0 0.0
        %328 = vmatpush1.msra.mxu0 0.0
        %329 = vmatprep.subr.mxu0 0.0
        %330 = vmatpush1.msra.mxu0 0.0
        %331 = vmatprep.subr.mxu0 0.0
        %332 = vmatpush1.msra.mxu0 0.0
        %333 = vmatprep.subr.mxu0 0.0
        %334 = vmatpush1.msra.mxu0 0.0
        %335 = vmatprep.subr.mxu0 0.0
        %336 = vmatpush1.msra.mxu0 0.0
        %337 = vmatprep.subr.mxu0 0.0
        %338 = vmatpush1.msra.mxu0 0.0
        %339 = vmatprep.subr.mxu0 0.0
        %340 = vmatpush1.msra.mxu0 0.0
        %341 = vmatprep.subr.mxu0 0.0
        %342 = vmatpush1.msra.mxu0 0.0
        %343 = vmatprep.subr.mxu0 0.0
        %344 = vmatpush1.msra.mxu0 0.0
        %345 = vmatprep.subr.mxu0 0.0
        %346 = vmatpush1.msra.mxu0 0.0
        %347 = vmatprep.subr.mxu0 0.0
        %348 = vmatpush1.msra.mxu0 0.0
        %349 = vmatprep.subr.mxu0 0.0
        %350 = vmatpush1.msra.mxu0 0.0
        %351 = vmatprep.subr.mxu0 0.0
        %352 = vmatpush1.msra.mxu0 0.0
        %353 = vmatprep.subr.mxu0 0.0
        %354 = vmatpush1.msra.mxu0 0.0
        %355 = vmatprep.subr.mxu0 0.0
        %356 = vmatpush1.msra.mxu0 0.0
        %357 = vmatprep.subr.mxu0 0.0
        %358 = vmatpush1.msra.mxu0 0.0
        %359 = vmatprep.subr.mxu0 0.0
        %360 = vmatpush1.msra.mxu0 0.0
        %361 = vmatprep.subr.mxu0 0.0
        %362 = vmatpush1.msra.mxu0 0.0
        %363 = vmatprep.subr.mxu0 0.0
        %364 = vmatpush1.msra.mxu0 0.0
        %365 = vmatprep.subr.mxu0 0.0
        %366 = vmatpush1.msra.mxu0 0.0
        %367 = vmatprep.subr.mxu0 0.0
        %368 = vmatpush1.msra.mxu0 0.0
        %369 = vmatprep.subr.mxu0 0.0
        %370 = vmatpush1.msra.mxu0 0.0
        %371 = vmatprep.subr.mxu0 0.0
        %372 = vmatpush1.msra.mxu0 0.0
        %373 = vmatprep.subr.mxu0 0.0
        %374 = vmatpush1.msra.mxu0 0.0
        %375 = vmatprep.subr.mxu0 0.0
        %376 = vmatpush1.msra.mxu0 0.0
        %377 = vmatprep.subr.mxu0 0.0
        %378 = vmatpush1.msra.mxu0 0.0
        %379 = vmatprep.subr.mxu0 0.0
        %380 = vmatpush1.msra.mxu0 0.0
        %381 = vmatprep.mubr.f32.mxu0 0.0
        %382 = vmatmul.mubr.f32.gmra.mrb[0].mxu0 %v306
        %v383 = vpop.f32.mrb[0].mxu0
        %v384 = vadd.f32 0.0, %v383
        %v385 = vpop.f32.mrb[0].mxu0
        %v386 = vadd.f32 0.0, %v385
        %387 = vmatprep.mubr.f32.mxu0 0.0
        %388 = vmatmul.mubr.f32.gmra.mrb[0].mxu0 %v309
        %v389 = vpop.f32.mrb[0].mxu0
        %v390 = vadd.f32 0.0, %v389
        %v391 = vpop.f32.mrb[0].mxu0
        %v392 = vadd.f32 0.0, %v391
        %393 = vmatprep.mubr.f32.mxu0 0.0
        %394 = vmatmul.mubr.f32.gmra.mrb[0].mxu0 %v312
        %v395 = vpop.f32.mrb[0].mxu0
        %v396 = vadd.f32 0.0, %v395
        %v397 = vpop.f32.mrb[0].mxu0
        %v398 = vadd.f32 0.0, %v397
        %399 = vmatprep.mubr.f32.mxu0 0.0
        %400 = vmatmul.mubr.f32.gmra.mrb[0].mxu0 %v315
        %v401 = vpop.f32.mrb[0].mxu0
        %v402 = vadd.f32 0.0, %v401
        %v403 = vpop.f32.mrb[0].mxu0
        %v404 = vadd.f32 0.0, %v403
        %405 = vdwg.mxu0
        %406 = vmatprep.subr.mxu0 0.0
        %407 = vmatpush1.msra.mxu0 %v295
        %408 = vmatprep.subr.mxu0 0.0
        %409 = vmatpush1.msra.mxu0 0.0
        %410 = vmatprep.subr.mxu0 0.0
        %411 = vmatpush1.msra.mxu0 0.0
        %412 = vmatprep.subr.mxu0 0.0
        %413 = vmatpush1.msra.mxu0 0.0
        %414 = vmatprep.subr.mxu0 0.0
        %415 = vmatpush1.msra.mxu0 0.0
        %416 = vmatprep.subr.mxu0 0.0
        %417 = vmatpush1.msra.mxu0 0.0
        %418 = vmatprep.subr.mxu0 0.0
        %419 = vmatpush1.msra.mxu0 0.0
        %420 = vmatprep.subr.mxu0 0.0
        %421 = vmatpush1.msra.mxu0 0.0
        %422 = vmatprep.subr.mxu0 0.0
        %423 = vmatpush1.msra.mxu0 0.0
        %424 = vmatprep.subr.mxu0 0.0
        %425 = vmatpush1.msra.mxu0 0.0
        %426 = vmatprep.subr.mxu0 0.0
        %427 = vmatpush1.msra.mxu0 0.0
        %428 = vmatprep.subr.mxu0 0.0
        %429 = vmatpush1.msra.mxu0 0.0
        %430 = vmatprep.subr.mxu0 0.0
        %431 = vmatpush1.msra.mxu0 0.0
        %432 = vmatprep.subr.mxu0 0.0
        %433 = vmatpush1.msra.mxu0 0.0
        %434 = vmatprep.subr.mxu0 0.0
        %435 = vmatpush1.msra.mxu0 0.0
        %436 = vmatprep.subr.mxu0 0.0
        %437 = vmatpush1.msra.mxu0 0.0
        %438 = vmatprep.subr.mxu0 0.0
        %439 = vmatpush1.msra.mxu0 0.0
        %440 = vmatprep.subr.mxu0 0.0
        %441 = vmatpush1.msra.mxu0 0.0
        %442 = vmatprep.subr.mxu0 0.0
        %443 = vmatpush1.msra.mxu0 0.0
        %444 = vmatprep.subr.mxu0 0.0
        %445 = vmatpush1.msra.mxu0 0.0
        %446 = vmatprep.subr.mxu0 0.0
        %447 = vmatpush1.msra.mxu0 0.0
        %448 = vmatprep.subr.mxu0 0.0
        %449 = vmatpush1.msra.mxu0 0.0
        %450 = vmatprep.subr.mxu0 0.0
        %451 = vmatpush1.msra.mxu0 0.0
        %452 = vmatprep.subr.mxu0 0.0
        %453 = vmatpush1.msra.mxu0 0.0
        %454 = vmatprep.subr.mxu0 0.0
        %455 = vmatpush1.msra.mxu0 0.0
        %456 = vmatprep.subr.mxu0 0.0
        %457 = vmatpush1.msra.mxu0 0.0
        %458 = vmatprep.subr.mxu0 0.0
        %459 = vmatpush1.msra.mxu0 0.0
        %460 = vmatprep.subr.mxu0 0.0
        %461 = vmatpush1.msra.mxu0 0.0
        %462 = vmatprep.subr.mxu0 0.0
        %463 = vmatpush1.msra.mxu0 0.0
        %464 = vmatprep.subr.mxu0 0.0
        %465 = vmatpush1.msra.mxu0 0.0
        %466 = vmatprep.subr.mxu0 0.0
        %467 = vmatpush1.msra.mxu0 0.0
        %468 = vmatprep.subr.mxu0 0.0
        %469 = vmatpush1.msra.mxu0 0.0
        %470 = vmatprep.mubr.f32.mxu0 0.0
        %471 = vmatmul.mubr.f32.gmra.mrb[0].mxu0 %v306
        %v472 = vpop.f32.mrb[0].mxu0
        %v473 = vadd.f32 0.0, %v472
        %v474 = vpop.f32.mrb[0].mxu0
        %475 = vmatprep.mubr.f32.mxu0 0.0
        %476 = vmatmul.mubr.f32.gmra.mrb[0].mxu0 %v309
        %v477 = vpop.f32.mrb[0].mxu0
        %v478 = vadd.f32 0.0, %v477
        %v479 = vpop.f32.mrb[0].mxu0
        %480 = vmatprep.mubr.f32.mxu0 0.0
        %481 = vmatmul.mubr.f32.gmra.mrb[0].mxu0 %v312
        %v482 = vpop.f32.mrb[0].mxu0
        %v483 = vadd.f32 0.0, %v482
        %v484 = vpop.f32.mrb[0].mxu0
        %485 = vmatprep.mubr.f32.mxu0 0.0
        %486 = vmatmul.mubr.f32.gmra.mrb[0].mxu0 %v315
        %v487 = vpop.f32.mrb[0].mxu0
        %v488 = vadd.f32 0.0, %v487
        %v489 = vpop.f32.mrb[0].mxu0
        %490 = vdwg.mxu0
        %v492 = vsel %vm304, %v296, 0
        %v495 = vsel %vm304, %v297, 0
        %v498 = vsel %vm304, %v298, 0
        %v501 = vsel %vm304, %v299, 0
        %503 = vmatprep.subr.mxu0 %v291
        %504 = vmatpush1.msra.mxu0 %v290
        %505 = vmatprep.subr.mxu0 0.0
        %506 = vmatpush1.msra.mxu0 0.0
        %507 = vmatprep.subr.mxu0 0.0
        %508 = vmatpush1.msra.mxu0 0.0
        %509 = vmatprep.subr.mxu0 0.0
        %510 = vmatpush1.msra.mxu0 0.0
        %511 = vmatprep.subr.mxu0 0.0
        %512 = vmatpush1.msra.mxu0 0.0
        %513 = vmatprep.subr.mxu0 0.0
        %514 = vmatpush1.msra.mxu0 0.0
        %515 = vmatprep.subr.mxu0 0.0
        %516 = vmatpush1.msra.mxu0 0.0
        %517 = vmatprep.subr.mxu0 0.0
        %518 = vmatpush1.msra.mxu0 0.0
        %519 = vmatprep.subr.mxu0 0.0
        %520 = vmatpush1.msra.mxu0 0.0
        %521 = vmatprep.subr.mxu0 0.0
        %522 = vmatpush1.msra.mxu0 0.0
        %523 = vmatprep.subr.mxu0 0.0
        %524 = vmatpush1.msra.mxu0 0.0
        %525 = vmatprep.subr.mxu0 0.0
        %526 = vmatpush1.msra.mxu0 0.0
        %527 = vmatprep.subr.mxu0 0.0
        %528 = vmatpush1.msra.mxu0 0.0
        %529 = vmatprep.subr.mxu0 0.0
        %530 = vmatpush1.msra.mxu0 0.0
        %531 = vmatprep.subr.mxu0 0.0
        %532 = vmatpush1.msra.mxu0 0.0
        %533 = vmatprep.subr.mxu0 0.0
        %534 = vmatpush1.msra.mxu0 0.0
        %535 = vmatprep.subr.mxu0 0.0
        %536 = vmatpush1.msra.mxu0 0.0
        %537 = vmatprep.subr.mxu0 0.0
        %538 = vmatpush1.msra.mxu0 0.0
        %539 = vmatprep.subr.mxu0 0.0
        %540 = vmatpush1.msra.mxu0 0.0
        %541 = vmatprep.subr.mxu0 0.0
        %542 = vmatpush1.msra.mxu0 0.0
        %543 = vmatprep.subr.mxu0 0.0
        %544 = vmatpush1.msra.mxu0 0.0
        %545 = vmatprep.subr.mxu0 0.0
        %546 = vmatpush1.msra.mxu0 0.0
        %547 = vmatprep.subr.mxu0 0.0
        %548 = vmatpush1.msra.mxu0 0.0
        %549 = vmatprep.subr.mxu0 0.0
        %550 = vmatpush1.msra.mxu0 0.0
        %551 = vmatprep.subr.mxu0 0.0
        %552 = vmatpush1.msra.mxu0 0.0
        %553 = vmatprep.subr.mxu0 0.0
        %554 = vmatpush1.msra.mxu0 0.0
        %555 = vmatprep.subr.mxu0 0.0
        %556 = vmatpush1.msra.mxu0 0.0
        %557 = vmatprep.subr.mxu0 0.0
        %558 = vmatpush1.msra.mxu0 0.0
        %559 = vmatprep.subr.mxu0 0.0
        %560 = vmatpush1.msra.mxu0 0.0
        %561 = vmatprep.subr.mxu0 0.0
        %562 = vmatpush1.msra.mxu0 0.0
        %563 = vmatprep.subr.mxu0 0.0
        %564 = vmatpush1.msra.mxu0 0.0
        %565 = vmatprep.subr.mxu0 0.0
        %566 = vmatpush1.msra.mxu0 0.0
        %567 = vmatprep.mubr.f32.mxu0 0.0
        %568 = vmatmul.mubr.f32.gmra.mrb[0].mxu0 %v492
        %v569 = vpop.f32.mrb[0].mxu0
        %v570 = vadd.f32 %v384, %v569
        %v571 = vpop.f32.mrb[0].mxu0
        %v572 = vadd.f32 %v386, %v571
        %573 = vmatprep.mubr.f32.mxu0 0.0
        %574 = vmatmul.mubr.f32.gmra.mrb[0].mxu0 %v495
        %v575 = vpop.f32.mrb[0].mxu0
        %v576 = vadd.f32 %v390, %v575
        %v577 = vpop.f32.mrb[0].mxu0
        %v578 = vadd.f32 %v392, %v577
        %579 = vmatprep.mubr.f32.mxu0 0.0
        %580 = vmatmul.mubr.f32.gmra.mrb[0].mxu0 %v498
        %v581 = vpop.f32.mrb[0].mxu0
        %v582 = vadd.f32 %v396, %v581
        %v583 = vpop.f32.mrb[0].mxu0
        %v584 = vadd.f32 %v398, %v583
        %585 = vmatprep.mubr.f32.mxu0 0.0
        %586 = vmatmul.mubr.f32.gmra.mrb[0].mxu0 %v501
        %v587 = vpop.f32.mrb[0].mxu0
        %v588 = vadd.f32 %v402, %v587
        %v589 = vpop.f32.mrb[0].mxu0
        %v590 = vadd.f32 %v404, %v589
        %591 = vdwg.mxu0
        %592 = vmatprep.subr.mxu0 0.0
        %593 = vmatpush1.msra.mxu0 %v292
        %594 = vmatprep.subr.mxu0 0.0
        %595 = vmatpush1.msra.mxu0 0.0
        %596 = vmatprep.subr.mxu0 0.0
        %597 = vmatpush1.msra.mxu0 0.0
        %598 = vmatprep.subr.mxu0 0.0
        %599 = vmatpush1.msra.mxu0 0.0
        %600 = vmatprep.subr.mxu0 0.0
        %601 = vmatpush1.msra.mxu0 0.0
        %602 = vmatprep.subr.mxu0 0.0
        %603 = vmatpush1.msra.mxu0 0.0
        %604 = vmatprep.subr.mxu0 0.0
        %605 = vmatpush1.msra.mxu0 0.0
        %606 = vmatprep.subr.mxu0 0.0
        %607 = vmatpush1.msra.mxu0 0.0
        %608 = vmatprep.subr.mxu0 0.0
        %609 = vmatpush1.msra.mxu0 0.0
        %610 = vmatprep.subr.mxu0 0.0
        %611 = vmatpush1.msra.mxu0 0.0
        %612 = vmatprep.subr.mxu0 0.0
        %613 = vmatpush1.msra.mxu0 0.0
        %614 = vmatprep.subr.mxu0 0.0
        %615 = vmatpush1.msra.mxu0 0.0
        %616 = vmatprep.subr.mxu0 0.0
        %617 = vmatpush1.msra.mxu0 0.0
        %618 = vmatprep.subr.mxu0 0.0
        %619 = vmatpush1.msra.mxu0 0.0
        %620 = vmatprep.subr.mxu0 0.0
        %621 = vmatpush1.msra.mxu0 0.0
        %622 = vmatprep.subr.mxu0 0.0
        %623 = vmatpush1.msra.mxu0 0.0
        %624 = vmatprep.subr.mxu0 0.0
        %625 = vmatpush1.msra.mxu0 0.0
        %626 = vmatprep.subr.mxu0 0.0
        %627 = vmatpush1.msra.mxu0 0.0
        %628 = vmatprep.subr.mxu0 0.0
        %629 = vmatpush1.msra.mxu0 0.0
        %630 = vmatprep.subr.mxu0 0.0
        %631 = vmatpush1.msra.mxu0 0.0
        %632 = vmatprep.subr.mxu0 0.0
        %633 = vmatpush1.msra.mxu0 0.0
        %634 = vmatprep.subr.mxu0 0.0
        %635 = vmatpush1.msra.mxu0 0.0
        %636 = vmatprep.subr.mxu0 0.0
        %637 = vmatpush1.msra.mxu0 0.0
        %638 = vmatprep.subr.mxu0 0.0
        %639 = vmatpush1.msra.mxu0 0.0
        %640 = vmatprep.subr.mxu0 0.0
        %641 = vmatpush1.msra.mxu0 0.0
        %642 = vmatprep.subr.mxu0 0.0
        %643 = vmatpush1.msra.mxu0 0.0
        %644 = vmatprep.subr.mxu0 0.0
        %645 = vmatpush1.msra.mxu0 0.0
        %646 = vmatprep.subr.mxu0 0.0
        %647 = vmatpush1.msra.mxu0 0.0
        %648 = vmatprep.subr.mxu0 0.0
        %649 = vmatpush1.msra.mxu0 0.0
        %650 = vmatprep.subr.mxu0 0.0
        %651 = vmatpush1.msra.mxu0 0.0
        %652 = vmatprep.subr.mxu0 0.0
        %653 = vmatpush1.msra.mxu0 0.0
        %654 = vmatprep.subr.mxu0 0.0
        %655 = vmatpush1.msra.mxu0 0.0
        %656 = vmatprep.mubr.f32.mxu0 0.0
        %657 = vmatmul.mubr.f32.gmra.mrb[0].mxu0 %v492
        %v658 = vpop.f32.mrb[0].mxu0
        %v659 = vadd.f32 %v473, %v658
        %v660 = vpop.f32.mrb[0].mxu0
        %661 = vmatprep.mubr.f32.mxu0 0.0
        %662 = vmatmul.mubr.f32.gmra.mrb[0].mxu0 %v495
        %v663 = vpop.f32.mrb[0].mxu0
        %v664 = vadd.f32 %v478, %v663
        %v665 = vpop.f32.mrb[0].mxu0
        %666 = vmatprep.mubr.f32.mxu0 0.0
        %667 = vmatmul.mubr.f32.gmra.mrb[0].mxu0 %v498
        %v668 = vpop.f32.mrb[0].mxu0
        %v669 = vadd.f32 %v483, %v668
        %v670 = vpop.f32.mrb[0].mxu0
        %671 = vmatprep.mubr.f32.mxu0 0.0
        %672 = vmatmul.mubr.f32.gmra.mrb[0].mxu0 %v501
        %v673 = vpop.f32.mrb[0].mxu0
        %v674 = vadd.f32 %v488, %v673
        %v675 = vpop.f32.mrb[0].mxu0
        %676 = vdwg.mxu0
        %s677 = scalar_lea.vmem %s2, 32
        %v678 = vld [vmem:[%s677] sm:$0xff]
        %v679 = vld [vmem:[%s677 + $0x8] sm:$0xff]
        %v680 = vld [vmem:[%s677 + $0x10] sm:$0xff]
        %v681 = vld [vmem:[%s677 + $0x18] sm:$0xff]
        %s682 = scalar_lea.vmem %s3, 32
        %v683 = vld [vmem:[%s682] sm:$0xff]
        %v684 = vld [vmem:[%s682 + $0x8] sm:$0xff]
        %v685 = vld [vmem:[%s682 + $0x10] sm:$0xff]
        %v686 = vld [vmem:[%s682 + $0x18] sm:$0xff]
        %690 = vrot.lane.b32.xlu0 %v293, 127
        %v691 = vpop.permute.xlu0 %690
        %692 = vrot.lane.b32.xlu0 %v294, 127
        %v693 = vpop.permute.xlu0 %692
        %694 = vrot.lane.b32.xlu0 %v295, 127
        %v695 = vpop.permute.xlu0 %694
        %vm696 = vcmask 1039360
        %v697 = vsel %vm696, %v691, %v693
        %v698 = vsel %vm696, %v693, %v695
        %v703 = vsel %vm304, %v683, 0
        %v706 = vsel %vm304, %v684, 0
        %v709 = vsel %vm304, %v685, 0
        %v712 = vsel %vm304, %v686, 0
        %714 = vmatprep.subr.mxu0 %v698
        %715 = vmatpush1.msra.mxu0 %v697
        %716 = vmatprep.subr.mxu0 0.0
        %717 = vmatpush1.msra.mxu0 0.0
        %718 = vmatprep.subr.mxu0 0.0
        %719 = vmatpush1.msra.mxu0 0.0
        %720 = vmatprep.subr.mxu0 0.0
        %721 = vmatpush1.msra.mxu0 0.0
        %722 = vmatprep.subr.mxu0 0.0
        %723 = vmatpush1.msra.mxu0 0.0
        %724 = vmatprep.subr.mxu0 0.0
        %725 = vmatpush1.msra.mxu0 0.0
        %726 = vmatprep.subr.mxu0 0.0
        %727 = vmatpush1.msra.mxu0 0.0
        %728 = vmatprep.subr.mxu0 0.0
        %729 = vmatpush1.msra.mxu0 0.0
        %730 = vmatprep.subr.mxu0 0.0
        %731 = vmatpush1.msra.mxu0 0.0
        %732 = vmatprep.subr.mxu0 0.0
        %733 = vmatpush1.msra.mxu0 0.0
        %734 = vmatprep.subr.mxu0 0.0
        %735 = vmatpush1.msra.mxu0 0.0
        %736 = vmatprep.subr.mxu0 0.0
        %737 = vmatpush1.msra.mxu0 0.0
        %738 = vmatprep.subr.mxu0 0.0
        %739 = vmatpush1.msra.mxu0 0.0
        %740 = vmatprep.subr.mxu0 0.0
        %741 = vmatpush1.msra.mxu0 0.0
        %742 = vmatprep.subr.mxu0 0.0
        %743 = vmatpush1.msra.mxu0 0.0
        %744 = vmatprep.subr.mxu0 0.0
        %745 = vmatpush1.msra.mxu0 0.0
        %746 = vmatprep.subr.mxu0 0.0
        %747 = vmatpush1.msra.mxu0 0.0
        %748 = vmatprep.subr.mxu0 0.0
        %749 = vmatpush1.msra.mxu0 0.0
        %750 = vmatprep.subr.mxu0 0.0
        %751 = vmatpush1.msra.mxu0 0.0
        %752 = vmatprep.subr.mxu0 0.0
        %753 = vmatpush1.msra.mxu0 0.0
        %754 = vmatprep.subr.mxu0 0.0
        %755 = vmatpush1.msra.mxu0 0.0
        %756 = vmatprep.subr.mxu0 0.0
        %757 = vmatpush1.msra.mxu0 0.0
        %758 = vmatprep.subr.mxu0 0.0
        %759 = vmatpush1.msra.mxu0 0.0
        %760 = vmatprep.subr.mxu0 0.0
        %761 = vmatpush1.msra.mxu0 0.0
        %762 = vmatprep.subr.mxu0 0.0
        %763 = vmatpush1.msra.mxu0 0.0
        %764 = vmatprep.subr.mxu0 0.0
        %765 = vmatpush1.msra.mxu0 0.0
        %766 = vmatprep.subr.mxu0 0.0
        %767 = vmatpush1.msra.mxu0 0.0
        %768 = vmatprep.subr.mxu0 0.0
        %769 = vmatpush1.msra.mxu0 0.0
        %770 = vmatprep.subr.mxu0 0.0
        %771 = vmatpush1.msra.mxu0 0.0
        %772 = vmatprep.subr.mxu0 0.0
        %773 = vmatpush1.msra.mxu0 0.0
        %774 = vmatprep.subr.mxu0 0.0
        %775 = vmatpush1.msra.mxu0 0.0
        %776 = vmatprep.subr.mxu0 0.0
        %777 = vmatpush1.msra.mxu0 0.0
        %778 = vmatprep.mubr.f32.mxu0 0.0
        %779 = vmatmul.mubr.f32.gmra.mrb[0].mxu0 %v703
        %v780 = vpop.f32.mrb[0].mxu0
        %v781 = vadd.f32 0.0, %v780
        %v782 = vpop.f32.mrb[0].mxu0
        %v783 = vadd.f32 0.0, %v782
        %784 = vmatprep.mubr.f32.mxu0 0.0
        %785 = vmatmul.mubr.f32.gmra.mrb[0].mxu0 %v706
        %v786 = vpop.f32.mrb[0].mxu0
        %v787 = vadd.f32 0.0, %v786
        %v788 = vpop.f32.mrb[0].mxu0
        %v789 = vadd.f32 0.0, %v788
        %790 = vmatprep.mubr.f32.mxu0 0.0
        %791 = vmatmul.mubr.f32.gmra.mrb[0].mxu0 %v709
        %v792 = vpop.f32.mrb[0].mxu0
        %v793 = vadd.f32 0.0, %v792
        %v794 = vpop.f32.mrb[0].mxu0
        %v795 = vadd.f32 0.0, %v794
        %796 = vmatprep.mubr.f32.mxu0 0.0
        %797 = vmatmul.mubr.f32.gmra.mrb[0].mxu0 %v712
        %v798 = vpop.f32.mrb[0].mxu0
        %v799 = vadd.f32 0.0, %v798
        %v800 = vpop.f32.mrb[0].mxu0
        %v801 = vadd.f32 0.0, %v800
        %802 = vdwg.mxu0
        %803 = vmatprep.subr.mxu0 0.0
        %804 = vmatpush1.msra.mxu0 %v695
        %805 = vmatprep.subr.mxu0 0.0
        %806 = vmatpush1.msra.mxu0 0.0
        %807 = vmatprep.subr.mxu0 0.0
        %808 = vmatpush1.msra.mxu0 0.0
        %809 = vmatprep.subr.mxu0 0.0
        %810 = vmatpush1.msra.mxu0 0.0
        %811 = vmatprep.subr.mxu0 0.0
        %812 = vmatpush1.msra.mxu0 0.0
        %813 = vmatprep.subr.mxu0 0.0
        %814 = vmatpush1.msra.mxu0 0.0
        %815 = vmatprep.subr.mxu0 0.0
        %816 = vmatpush1.msra.mxu0 0.0
        %817 = vmatprep.subr.mxu0 0.0
        %818 = vmatpush1.msra.mxu0 0.0
        %819 = vmatprep.subr.mxu0 0.0
        %820 = vmatpush1.msra.mxu0 0.0
        %821 = vmatprep.subr.mxu0 0.0
        %822 = vmatpush1.msra.mxu0 0.0
        %823 = vmatprep.subr.mxu0 0.0
        %824 = vmatpush1.msra.mxu0 0.0
        %825 = vmatprep.subr.mxu0 0.0
        %826 = vmatpush1.msra.mxu0 0.0
        %827 = vmatprep.subr.mxu0 0.0
        %828 = vmatpush1.msra.mxu0 0.0
        %829 = vmatprep.subr.mxu0 0.0
        %830 = vmatpush1.msra.mxu0 0.0
        %831 = vmatprep.subr.mxu0 0.0
        %832 = vmatpush1.msra.mxu0 0.0
        %833 = vmatprep.subr.mxu0 0.0
        %834 = vmatpush1.msra.mxu0 0.0
        %835 = vmatprep.subr.mxu0 0.0
        %836 = vmatpush1.msra.mxu0 0.0
        %837 = vmatprep.subr.mxu0 0.0
        %838 = vmatpush1.msra.mxu0 0.0
        %839 = vmatprep.subr.mxu0 0.0
        %840 = vmatpush1.msra.mxu0 0.0
        %841 = vmatprep.subr.mxu0 0.0
        %842 = vmatpush1.msra.mxu0 0.0
        %843 = vmatprep.subr.mxu0 0.0
        %844 = vmatpush1.msra.mxu0 0.0
        %845 = vmatprep.subr.mxu0 0.0
        %846 = vmatpush1.msra.mxu0 0.0
        %847 = vmatprep.subr.mxu0 0.0
        %848 = vmatpush1.msra.mxu0 0.0
        %849 = vmatprep.subr.mxu0 0.0
        %850 = vmatpush1.msra.mxu0 0.0
        %851 = vmatprep.subr.mxu0 0.0
        %852 = vmatpush1.msra.mxu0 0.0
        %853 = vmatprep.subr.mxu0 0.0
        %854 = vmatpush1.msra.mxu0 0.0
        %855 = vmatprep.subr.mxu0 0.0
        %856 = vmatpush1.msra.mxu0 0.0
        %857 = vmatprep.subr.mxu0 0.0
        %858 = vmatpush1.msra.mxu0 0.0
        %859 = vmatprep.subr.mxu0 0.0
        %860 = vmatpush1.msra.mxu0 0.0
        %861 = vmatprep.subr.mxu0 0.0
        %862 = vmatpush1.msra.mxu0 0.0
        %863 = vmatprep.subr.mxu0 0.0
        %864 = vmatpush1.msra.mxu0 0.0
        %865 = vmatprep.subr.mxu0 0.0
        %866 = vmatpush1.msra.mxu0 0.0
        %867 = vmatprep.mubr.f32.mxu0 0.0
        %868 = vmatmul.mubr.f32.gmra.mrb[0].mxu0 %v703
        %v869 = vpop.f32.mrb[0].mxu0
        %v870 = vadd.f32 0.0, %v869
        %v871 = vpop.f32.mrb[0].mxu0
        %872 = vmatprep.mubr.f32.mxu0 0.0
        %873 = vmatmul.mubr.f32.gmra.mrb[0].mxu0 %v706
        %v874 = vpop.f32.mrb[0].mxu0
        %v875 = vadd.f32 0.0, %v874
        %v876 = vpop.f32.mrb[0].mxu0
        %877 = vmatprep.mubr.f32.mxu0 0.0
        %878 = vmatmul.mubr.f32.gmra.mrb[0].mxu0 %v709
        %v879 = vpop.f32.mrb[0].mxu0
        %v880 = vadd.f32 0.0, %v879
        %v881 = vpop.f32.mrb[0].mxu0
        %882 = vmatprep.mubr.f32.mxu0 0.0
        %883 = vmatmul.mubr.f32.gmra.mrb[0].mxu0 %v712
        %v884 = vpop.f32.mrb[0].mxu0
        %v885 = vadd.f32 0.0, %v884
        %v886 = vpop.f32.mrb[0].mxu0
        %887 = vdwg.mxu0
        %891 = vrot.lane.b32.xlu0 %v290, 127
        %v892 = vpop.permute.xlu0 %891
        %893 = vrot.lane.b32.xlu0 %v291, 127
        %v894 = vpop.permute.xlu0 %893
        %895 = vrot.lane.b32.xlu0 %v292, 127
        %v896 = vpop.permute.xlu0 %895
        %v897 = vsel %vm696, %v892, %v894
        %v898 = vsel %vm696, %v894, %v896
        %v903 = vsel %vm304, %v678, 0
        %v906 = vsel %vm304, %v679, 0
        %v909 = vsel %vm304, %v680, 0
        %v912 = vsel %vm304, %v681, 0
        %914 = vmatprep.subr.mxu0 %v898
        %915 = vmatpush1.msra.mxu0 %v897
        %916 = vmatprep.subr.mxu0 0.0
        %917 = vmatpush1.msra.mxu0 0.0
        %918 = vmatprep.subr.mxu0 0.0
        %919 = vmatpush1.msra.mxu0 0.0
        %920 = vmatprep.subr.mxu0 0.0
        %921 = vmatpush1.msra.mxu0 0.0
        %922 = vmatprep.subr.mxu0 0.0
        %923 = vmatpush1.msra.mxu0 0.0
        %924 = vmatprep.subr.mxu0 0.0
        %925 = vmatpush1.msra.mxu0 0.0
        %926 = vmatprep.subr.mxu0 0.0
        %927 = vmatpush1.msra.mxu0 0.0
        %928 = vmatprep.subr.mxu0 0.0
        %929 = vmatpush1.msra.mxu0 0.0
        %930 = vmatprep.subr.mxu0 0.0
        %931 = vmatpush1.msra.mxu0 0.0
        %932 = vmatprep.subr.mxu0 0.0
        %933 = vmatpush1.msra.mxu0 0.0
        %934 = vmatprep.subr.mxu0 0.0
        %935 = vmatpush1.msra.mxu0 0.0
        %936 = vmatprep.subr.mxu0 0.0
        %937 = vmatpush1.msra.mxu0 0.0
        %938 = vmatprep.subr.mxu0 0.0
        %939 = vmatpush1.msra.mxu0 0.0
        %940 = vmatprep.subr.mxu0 0.0
        %941 = vmatpush1.msra.mxu0 0.0
        %942 = vmatprep.subr.mxu0 0.0
        %943 = vmatpush1.msra.mxu0 0.0
        %944 = vmatprep.subr.mxu0 0.0
        %945 = vmatpush1.msra.mxu0 0.0
        %946 = vmatprep.subr.mxu0 0.0
        %947 = vmatpush1.msra.mxu0 0.0
        %948 = vmatprep.subr.mxu0 0.0
        %949 = vmatpush1.msra.mxu0 0.0
        %950 = vmatprep.subr.mxu0 0.0
        %951 = vmatpush1.msra.mxu0 0.0
        %952 = vmatprep.subr.mxu0 0.0
        %953 = vmatpush1.msra.mxu0 0.0
        %954 = vmatprep.subr.mxu0 0.0
        %955 = vmatpush1.msra.mxu0 0.0
        %956 = vmatprep.subr.mxu0 0.0
        %957 = vmatpush1.msra.mxu0 0.0
        %958 = vmatprep.subr.mxu0 0.0
        %959 = vmatpush1.msra.mxu0 0.0
        %960 = vmatprep.subr.mxu0 0.0
        %961 = vmatpush1.msra.mxu0 0.0
        %962 = vmatprep.subr.mxu0 0.0
        %963 = vmatpush1.msra.mxu0 0.0
        %964 = vmatprep.subr.mxu0 0.0
        %965 = vmatpush1.msra.mxu0 0.0
        %966 = vmatprep.subr.mxu0 0.0
        %967 = vmatpush1.msra.mxu0 0.0
        %968 = vmatprep.subr.mxu0 0.0
        %969 = vmatpush1.msra.mxu0 0.0
        %970 = vmatprep.subr.mxu0 0.0
        %971 = vmatpush1.msra.mxu0 0.0
        %972 = vmatprep.subr.mxu0 0.0
        %973 = vmatpush1.msra.mxu0 0.0
        %974 = vmatprep.subr.mxu0 0.0
        %975 = vmatpush1.msra.mxu0 0.0
        %976 = vmatprep.subr.mxu0 0.0
        %977 = vmatpush1.msra.mxu0 0.0
        %978 = vmatprep.mubr.f32.mxu0 0.0
        %979 = vmatmul.mubr.f32.gmra.mrb[0].mxu0 %v903
        %v980 = vpop.f32.mrb[0].mxu0
        %v981 = vadd.f32 %v781, %v980
        %v982 = vpop.f32.mrb[0].mxu0
        %v983 = vadd.f32 %v783, %v982
        %984 = vmatprep.mubr.f32.mxu0 0.0
        %985 = vmatmul.mubr.f32.gmra.mrb[0].mxu0 %v906
        %v986 = vpop.f32.mrb[0].mxu0
        %v987 = vadd.f32 %v787, %v986
        %v988 = vpop.f32.mrb[0].mxu0
        %v989 = vadd.f32 %v789, %v988
        %990 = vmatprep.mubr.f32.mxu0 0.0
        %991 = vmatmul.mubr.f32.gmra.mrb[0].mxu0 %v909
        %v992 = vpop.f32.mrb[0].mxu0
        %v993 = vadd.f32 %v793, %v992
        %v994 = vpop.f32.mrb[0].mxu0
        %v995 = vadd.f32 %v795, %v994
        %996 = vmatprep.mubr.f32.mxu0 0.0
        %997 = vmatmul.mubr.f32.gmra.mrb[0].mxu0 %v912
        %v998 = vpop.f32.mrb[0].mxu0
        %v999 = vadd.f32 %v799, %v998
        %v1000 = vpop.f32.mrb[0].mxu0
        %v1001 = vadd.f32 %v801, %v1000
        %1002 = vdwg.mxu0
        %1003 = vmatprep.subr.mxu0 0.0
        %1004 = vmatpush1.msra.mxu0 %v896
        %1005 = vmatprep.subr.mxu0 0.0
        %1006 = vmatpush1.msra.mxu0 0.0
        %1007 = vmatprep.subr.mxu0 0.0
        %1008 = vmatpush1.msra.mxu0 0.0
        %1009 = vmatprep.subr.mxu0 0.0
        %1010 = vmatpush1.msra.mxu0 0.0
        %1011 = vmatprep.subr.mxu0 0.0
        %1012 = vmatpush1.msra.mxu0 0.0
        %1013 = vmatprep.subr.mxu0 0.0
        %1014 = vmatpush1.msra.mxu0 0.0
        %1015 = vmatprep.subr.mxu0 0.0
        %1016 = vmatpush1.msra.mxu0 0.0
        %1017 = vmatprep.subr.mxu0 0.0
        %1018 = vmatpush1.msra.mxu0 0.0
        %1019 = vmatprep.subr.mxu0 0.0
        %1020 = vmatpush1.msra.mxu0 0.0
        %1021 = vmatprep.subr.mxu0 0.0
        %1022 = vmatpush1.msra.mxu0 0.0
        %1023 = vmatprep.subr.mxu0 0.0
        %1024 = vmatpush1.msra.mxu0 0.0
        %1025 = vmatprep.subr.mxu0 0.0
        %1026 = vmatpush1.msra.mxu0 0.0
        %1027 = vmatprep.subr.mxu0 0.0
        %1028 = vmatpush1.msra.mxu0 0.0
        %1029 = vmatprep.subr.mxu0 0.0
        %1030 = vmatpush1.msra.mxu0 0.0
        %1031 = vmatprep.subr.mxu0 0.0
        %1032 = vmatpush1.msra.mxu0 0.0
        %1033 = vmatprep.subr.mxu0 0.0
        %1034 = vmatpush1.msra.mxu0 0.0
        %1035 = vmatprep.subr.mxu0 0.0
        %1036 = vmatpush1.msra.mxu0 0.0
        %1037 = vmatprep.subr.mxu0 0.0
        %1038 = vmatpush1.msra.mxu0 0.0
        %1039 = vmatprep.subr.mxu0 0.0
        %1040 = vmatpush1.msra.mxu0 0.0
        %1041 = vmatprep.subr.mxu0 0.0
        %1042 = vmatpush1.msra.mxu0 0.0
        %1043 = vmatprep.subr.mxu0 0.0
        %1044 = vmatpush1.msra.mxu0 0.0
        %1045 = vmatprep.subr.mxu0 0.0
        %1046 = vmatpush1.msra.mxu0 0.0
        %1047 = vmatprep.subr.mxu0 0.0
        %1048 = vmatpush1.msra.mxu0 0.0
        %1049 = vmatprep.subr.mxu0 0.0
        %1050 = vmatpush1.msra.mxu0 0.0
        %1051 = vmatprep.subr.mxu0 0.0
        %1052 = vmatpush1.msra.mxu0 0.0
        %1053 = vmatprep.subr.mxu0 0.0
        %1054 = vmatpush1.msra.mxu0 0.0
        %1055 = vmatprep.subr.mxu0 0.0
        %1056 = vmatpush1.msra.mxu0 0.0
        %1057 = vmatprep.subr.mxu0 0.0
        %1058 = vmatpush1.msra.mxu0 0.0
        %1059 = vmatprep.subr.mxu0 0.0
        %1060 = vmatpush1.msra.mxu0 0.0
        %1061 = vmatprep.subr.mxu0 0.0
        %1062 = vmatpush1.msra.mxu0 0.0
        %1063 = vmatprep.subr.mxu0 0.0
        %1064 = vmatpush1.msra.mxu0 0.0
        %1065 = vmatprep.subr.mxu0 0.0
        %1066 = vmatpush1.msra.mxu0 0.0
        %1067 = vmatprep.mubr.f32.mxu0 0.0
        %1068 = vmatmul.mubr.f32.gmra.mrb[0].mxu0 %v903
        %v1069 = vpop.f32.mrb[0].mxu0
        %v1070 = vadd.f32 %v870, %v1069
        %v1071 = vpop.f32.mrb[0].mxu0
        %1072 = vmatprep.mubr.f32.mxu0 0.0
        %1073 = vmatmul.mubr.f32.gmra.mrb[0].mxu0 %v906
        %v1074 = vpop.f32.mrb[0].mxu0
        %v1075 = vadd.f32 %v875, %v1074
        %v1076 = vpop.f32.mrb[0].mxu0
        %1077 = vmatprep.mubr.f32.mxu0 0.0
        %1078 = vmatmul.mubr.f32.gmra.mrb[0].mxu0 %v909
        %v1079 = vpop.f32.mrb[0].mxu0
        %v1080 = vadd.f32 %v880, %v1079
        %v1081 = vpop.f32.mrb[0].mxu0
        %1082 = vmatprep.mubr.f32.mxu0 0.0
        %1083 = vmatmul.mubr.f32.gmra.mrb[0].mxu0 %v912
        %v1084 = vpop.f32.mrb[0].mxu0
        %v1085 = vadd.f32 %v885, %v1084
        %v1086 = vpop.f32.mrb[0].mxu0
        %1087 = vdwg.mxu0
        %v1088 = vadd.f32 %v570, %v981
        %v1089 = vadd.f32 %v572, %v983
        %v1090 = vadd.f32 %v659, %v1070
        %v1091 = vadd.f32 %v576, %v987
        %v1092 = vadd.f32 %v578, %v989
        %v1093 = vadd.f32 %v664, %v1075
        %v1094 = vadd.f32 %v582, %v993
        %v1095 = vadd.f32 %v584, %v995
        %v1096 = vadd.f32 %v669, %v1080
        %v1097 = vadd.f32 %v588, %v999
        %v1098 = vadd.f32 %v590, %v1001
        %v1099 = vadd.f32 %v674, %v1085
        %s1100 = scalar_lea.vmem %s2, 64
        %v1101 = vld [vmem:[%s1100] sm:$0xff]
        %v1102 = vld [vmem:[%s1100 + $0x8] sm:$0xff]
        %v1103 = vld [vmem:[%s1100 + $0x10] sm:$0xff]
        %v1104 = vld [vmem:[%s1100 + $0x18] sm:$0xff]
        %s1105 = scalar_lea.vmem %s3, 64
        %v1106 = vld [vmem:[%s1105] sm:$0xff]
        %v1107 = vld [vmem:[%s1105 + $0x8] sm:$0xff]
        %v1108 = vld [vmem:[%s1105 + $0x10] sm:$0xff]
        %v1109 = vld [vmem:[%s1105 + $0x18] sm:$0xff]
        %1110 = vrot.lane.b32.xlu0 %v293, 126
        %v1111 = vpop.permute.xlu0 %1110
        %1112 = vrot.lane.b32.xlu0 %v294, 126
        %v1113 = vpop.permute.xlu0 %1112
        %1114 = vrot.lane.b32.xlu0 %v295, 126
        %v1115 = vpop.permute.xlu0 %1114
        %vm1116 = vcmask 1031168
        %v1117 = vsel %vm1116, %v1111, %v1113
        %v1118 = vsel %vm1116, %v1113, %v1115
        %v1123 = vsel %vm304, %v1106, 0
        %v1126 = vsel %vm304, %v1107, 0
        %v1129 = vsel %vm304, %v1108, 0
        %v1132 = vsel %vm304, %v1109, 0
        %1134 = vmatprep.subr.mxu0 %v1118
        %1135 = vmatpush1.msra.mxu0 %v1117
        %1136 = vmatprep.subr.mxu0 0.0
        %1137 = vmatpush1.msra.mxu0 0.0
        %1138 = vmatprep.subr.mxu0 0.0
        %1139 = vmatpush1.msra.mxu0 0.0
        %1140 = vmatprep.subr.mxu0 0.0
        %1141 = vmatpush1.msra.mxu0 0.0
        %1142 = vmatprep.subr.mxu0 0.0
        %1143 = vmatpush1.msra.mxu0 0.0
        %1144 = vmatprep.subr.mxu0 0.0
        %1145 = vmatpush1.msra.mxu0 0.0
        %1146 = vmatprep.subr.mxu0 0.0
        %1147 = vmatpush1.msra.mxu0 0.0
        %1148 = vmatprep.subr.mxu0 0.0
        %1149 = vmatpush1.msra.mxu0 0.0
        %1150 = vmatprep.subr.mxu0 0.0
        %1151 = vmatpush1.msra.mxu0 0.0
        %1152 = vmatprep.subr.mxu0 0.0
        %1153 = vmatpush1.msra.mxu0 0.0
        %1154 = vmatprep.subr.mxu0 0.0
        %1155 = vmatpush1.msra.mxu0 0.0
        %1156 = vmatprep.subr.mxu0 0.0
        %1157 = vmatpush1.msra.mxu0 0.0
        %1158 = vmatprep.subr.mxu0 0.0
        %1159 = vmatpush1.msra.mxu0 0.0
        %1160 = vmatprep.subr.mxu0 0.0
        %1161 = vmatpush1.msra.mxu0 0.0
        %1162 = vmatprep.subr.mxu0 0.0
        %1163 = vmatpush1.msra.mxu0 0.0
        %1164 = vmatprep.subr.mxu0 0.0
        %1165 = vmatpush1.msra.mxu0 0.0
        %1166 = vmatprep.subr.mxu0 0.0
        %1167 = vmatpush1.msra.mxu0 0.0
        %1168 = vmatprep.subr.mxu0 0.0
        %1169 = vmatpush1.msra.mxu0 0.0
        %1170 = vmatprep.subr.mxu0 0.0
        %1171 = vmatpush1.msra.mxu0 0.0
        %1172 = vmatprep.subr.mxu0 0.0
        %1173 = vmatpush1.msra.mxu0 0.0
        %1174 = vmatprep.subr.mxu0 0.0
        %1175 = vmatpush1.msra.mxu0 0.0
        %1176 = vmatprep.subr.mxu0 0.0
        %1177 = vmatpush1.msra.mxu0 0.0
        %1178 = vmatprep.subr.mxu0 0.0
        %1179 = vmatpush1.msra.mxu0 0.0
        %1180 = vmatprep.subr.mxu0 0.0
        %1181 = vmatpush1.msra.mxu0 0.0
        %1182 = vmatprep.subr.mxu0 0.0
        %1183 = vmatpush1.msra.mxu0 0.0
        %1184 = vmatprep.subr.mxu0 0.0
        %1185 = vmatpush1.msra.mxu0 0.0
        %1186 = vmatprep.subr.mxu0 0.0
        %1187 = vmatpush1.msra.mxu0 0.0
        %1188 = vmatprep.subr.mxu0 0.0
        %1189 = vmatpush1.msra.mxu0 0.0
        %1190 = vmatprep.subr.mxu0 0.0
        %1191 = vmatpush1.msra.mxu0 0.0
        %1192 = vmatprep.subr.mxu0 0.0
        %1193 = vmatpush1.msra.mxu0 0.0
        %1194 = vmatprep.subr.mxu0 0.0
        %1195 = vmatpush1.msra.mxu0 0.0
        %1196 = vmatprep.subr.mxu0 0.0
        %1197 = vmatpush1.msra.mxu0 0.0
        %1198 = vmatprep.mubr.f32.mxu0 0.0
        %1199 = vmatmul.mubr.f32.gmra.mrb[0].mxu0 %v1123
        %v1200 = vpop.f32.mrb[0].mxu0
        %v1201 = vadd.f32 0.0, %v1200
        %v1202 = vpop.f32.mrb[0].mxu0
        %v1203 = vadd.f32 0.0, %v1202
        %1204 = vmatprep.mubr.f32.mxu0 0.0
        %1205 = vmatmul.mubr.f32.gmra.mrb[0].mxu0 %v1126
        %v1206 = vpop.f32.mrb[0].mxu0
        %v1207 = vadd.f32 0.0, %v1206
        %v1208 = vpop.f32.mrb[0].mxu0
        %v1209 = vadd.f32 0.0, %v1208
        %1210 = vmatprep.mubr.f32.mxu0 0.0
        %1211 = vmatmul.mubr.f32.gmra.mrb[0].mxu0 %v1129
        %v1212 = vpop.f32.mrb[0].mxu0
        %v1213 = vadd.f32 0.0, %v1212
        %v1214 = vpop.f32.mrb[0].mxu0
        %v1215 = vadd.f32 0.0, %v1214
        %1216 = vmatprep.mubr.f32.mxu0 0.0
        %1217 = vmatmul.mubr.f32.gmra.mrb[0].mxu0 %v1132
        %v1218 = vpop.f32.mrb[0].mxu0
        %v1219 = vadd.f32 0.0, %v1218
        %v1220 = vpop.f32.mrb[0].mxu0
        %v1221 = vadd.f32 0.0, %v1220
        %1222 = vdwg.mxu0
        %1223 = vmatprep.subr.mxu0 0.0
        %1224 = vmatpush1.msra.mxu0 %v1115
        %1225 = vmatprep.subr.mxu0 0.0
        %1226 = vmatpush1.msra.mxu0 0.0
        %1227 = vmatprep.subr.mxu0 0.0
        %1228 = vmatpush1.msra.mxu0 0.0
        %1229 = vmatprep.subr.mxu0 0.0
        %1230 = vmatpush1.msra.mxu0 0.0
        %1231 = vmatprep.subr.mxu0 0.0
        %1232 = vmatpush1.msra.mxu0 0.0
        %1233 = vmatprep.subr.mxu0 0.0
        %1234 = vmatpush1.msra.mxu0 0.0
        %1235 = vmatprep.subr.mxu0 0.0
        %1236 = vmatpush1.msra.mxu0 0.0
        %1237 = vmatprep.subr.mxu0 0.0
        %1238 = vmatpush1.msra.mxu0 0.0
        %1239 = vmatprep.subr.mxu0 0.0
        %1240 = vmatpush1.msra.mxu0 0.0
        %1241 = vmatprep.subr.mxu0 0.0
        %1242 = vmatpush1.msra.mxu0 0.0
        %1243 = vmatprep.subr.mxu0 0.0
        %1244 = vmatpush1.msra.mxu0 0.0
        %1245 = vmatprep.subr.mxu0 0.0
        %1246 = vmatpush1.msra.mxu0 0.0
        %1247 = vmatprep.subr.mxu0 0.0
        %1248 = vmatpush1.msra.mxu0 0.0
        %1249 = vmatprep.subr.mxu0 0.0
        %1250 = vmatpush1.msra.mxu0 0.0
        %1251 = vmatprep.subr.mxu0 0.0
        %1252 = vmatpush1.msra.mxu0 0.0
        %1253 = vmatprep.subr.mxu0 0.0
        %1254 = vmatpush1.msra.mxu0 0.0
        %1255 = vmatprep.subr.mxu0 0.0
        %1256 = vmatpush1.msra.mxu0 0.0
        %1257 = vmatprep.subr.mxu0 0.0
        %1258 = vmatpush1.msra.mxu0 0.0
        %1259 = vmatprep.subr.mxu0 0.0
        %1260 = vmatpush1.msra.mxu0 0.0
        %1261 = vmatprep.subr.mxu0 0.0
        %1262 = vmatpush1.msra.mxu0 0.0
        %1263 = vmatprep.subr.mxu0 0.0
        %1264 = vmatpush1.msra.mxu0 0.0
        %1265 = vmatprep.subr.mxu0 0.0
        %1266 = vmatpush1.msra.mxu0 0.0
        %1267 = vmatprep.subr.mxu0 0.0
        %1268 = vmatpush1.msra.mxu0 0.0
        %1269 = vmatprep.subr.mxu0 0.0
        %1270 = vmatpush1.msra.mxu0 0.0
        %1271 = vmatprep.subr.mxu0 0.0
        %1272 = vmatpush1.msra.mxu0 0.0
        %1273 = vmatprep.subr.mxu0 0.0
        %1274 = vmatpush1.msra.mxu0 0.0
        %1275 = vmatprep.subr.mxu0 0.0
        %1276 = vmatpush1.msra.mxu0 0.0
        %1277 = vmatprep.subr.mxu0 0.0
        %1278 = vmatpush1.msra.mxu0 0.0
        %1279 = vmatprep.subr.mxu0 0.0
        %1280 = vmatpush1.msra.mxu0 0.0
        %1281 = vmatprep.subr.mxu0 0.0
        %1282 = vmatpush1.msra.mxu0 0.0
        %1283 = vmatprep.subr.mxu0 0.0
        %1284 = vmatpush1.msra.mxu0 0.0
        %1285 = vmatprep.subr.mxu0 0.0
        %1286 = vmatpush1.msra.mxu0 0.0
        %1287 = vmatprep.mubr.f32.mxu0 0.0
        %1288 = vmatmul.mubr.f32.gmra.mrb[0].mxu0 %v1123
        %v1289 = vpop.f32.mrb[0].mxu0
        %v1290 = vadd.f32 0.0, %v1289
        %v1291 = vpop.f32.mrb[0].mxu0
        %1292 = vmatprep.mubr.f32.mxu0 0.0
        %1293 = vmatmul.mubr.f32.gmra.mrb[0].mxu0 %v1126
        %v1294 = vpop.f32.mrb[0].mxu0
        %v1295 = vadd.f32 0.0, %v1294
        %v1296 = vpop.f32.mrb[0].mxu0
        %1297 = vmatprep.mubr.f32.mxu0 0.0
        %1298 = vmatmul.mubr.f32.gmra.mrb[0].mxu0 %v1129
        %v1299 = vpop.f32.mrb[0].mxu0
        %v1300 = vadd.f32 0.0, %v1299
        %v1301 = vpop.f32.mrb[0].mxu0
        %1302 = vmatprep.mubr.f32.mxu0 0.0
        %1303 = vmatmul.mubr.f32.gmra.mrb[0].mxu0 %v1132
        %v1304 = vpop.f32.mrb[0].mxu0
        %v1305 = vadd.f32 0.0, %v1304
        %v1306 = vpop.f32.mrb[0].mxu0
        %1307 = vdwg.mxu0
        %1308 = vrot.lane.b32.xlu0 %v290, 126
        %v1309 = vpop.permute.xlu0 %1308
        %1310 = vrot.lane.b32.xlu0 %v291, 126
        %v1311 = vpop.permute.xlu0 %1310
        %1312 = vrot.lane.b32.xlu0 %v292, 126
        %v1313 = vpop.permute.xlu0 %1312
        %v1314 = vsel %vm1116, %v1309, %v1311
        %v1315 = vsel %vm1116, %v1311, %v1313
        %v1320 = vsel %vm304, %v1101, 0
        %v1323 = vsel %vm304, %v1102, 0
        %v1326 = vsel %vm304, %v1103, 0
        %v1329 = vsel %vm304, %v1104, 0
        %1331 = vmatprep.subr.mxu0 %v1315
        %1332 = vmatpush1.msra.mxu0 %v1314
        %1333 = vmatprep.subr.mxu0 0.0
        %1334 = vmatpush1.msra.mxu0 0.0
        %1335 = vmatprep.subr.mxu0 0.0
        %1336 = vmatpush1.msra.mxu0 0.0
        %1337 = vmatprep.subr.mxu0 0.0
        %1338 = vmatpush1.msra.mxu0 0.0
        %1339 = vmatprep.subr.mxu0 0.0
        %1340 = vmatpush1.msra.mxu0 0.0
        %1341 = vmatprep.subr.mxu0 0.0
        %1342 = vmatpush1.msra.mxu0 0.0
        %1343 = vmatprep.subr.mxu0 0.0
        %1344 = vmatpush1.msra.mxu0 0.0
        %1345 = vmatprep.subr.mxu0 0.0
        %1346 = vmatpush1.msra.mxu0 0.0
        %1347 = vmatprep.subr.mxu0 0.0
        %1348 = vmatpush1.msra.mxu0 0.0
        %1349 = vmatprep.subr.mxu0 0.0
        %1350 = vmatpush1.msra.mxu0 0.0
        %1351 = vmatprep.subr.mxu0 0.0
        %1352 = vmatpush1.msra.mxu0 0.0
        %1353 = vmatprep.subr.mxu0 0.0
        %1354 = vmatpush1.msra.mxu0 0.0
        %1355 = vmatprep.subr.mxu0 0.0
        %1356 = vmatpush1.msra.mxu0 0.0
        %1357 = vmatprep.subr.mxu0 0.0
        %1358 = vmatpush1.msra.mxu0 0.0
        %1359 = vmatprep.subr.mxu0 0.0
        %1360 = vmatpush1.msra.mxu0 0.0
        %1361 = vmatprep.subr.mxu0 0.0
        %1362 = vmatpush1.msra.mxu0 0.0
        %1363 = vmatprep.subr.mxu0 0.0
        %1364 = vmatpush1.msra.mxu0 0.0
        %1365 = vmatprep.subr.mxu0 0.0
        %1366 = vmatpush1.msra.mxu0 0.0
        %1367 = vmatprep.subr.mxu0 0.0
        %1368 = vmatpush1.msra.mxu0 0.0
        %1369 = vmatprep.subr.mxu0 0.0
        %1370 = vmatpush1.msra.mxu0 0.0
        %1371 = vmatprep.subr.mxu0 0.0
        %1372 = vmatpush1.msra.mxu0 0.0
        %1373 = vmatprep.subr.mxu0 0.0
        %1374 = vmatpush1.msra.mxu0 0.0
        %1375 = vmatprep.subr.mxu0 0.0
        %1376 = vmatpush1.msra.mxu0 0.0
        %1377 = vmatprep.subr.mxu0 0.0
        %1378 = vmatpush1.msra.mxu0 0.0
        %1379 = vmatprep.subr.mxu0 0.0
        %1380 = vmatpush1.msra.mxu0 0.0
        %1381 = vmatprep.subr.mxu0 0.0
        %1382 = vmatpush1.msra.mxu0 0.0
        %1383 = vmatprep.subr.mxu0 0.0
        %1384 = vmatpush1.msra.mxu0 0.0
        %1385 = vmatprep.subr.mxu0 0.0
        %1386 = vmatpush1.msra.mxu0 0.0
        %1387 = vmatprep.subr.mxu0 0.0
        %1388 = vmatpush1.msra.mxu0 0.0
        %1389 = vmatprep.subr.mxu0 0.0
        %1390 = vmatpush1.msra.mxu0 0.0
        %1391 = vmatprep.subr.mxu0 0.0
        %1392 = vmatpush1.msra.mxu0 0.0
        %1393 = vmatprep.subr.mxu0 0.0
        %1394 = vmatpush1.msra.mxu0 0.0
        %1395 = vmatprep.mubr.f32.mxu0 0.0
        %1396 = vmatmul.mubr.f32.gmra.mrb[0].mxu0 %v1320
        %v1397 = vpop.f32.mrb[0].mxu0
        %v1398 = vadd.f32 %v1201, %v1397
        %v1399 = vpop.f32.mrb[0].mxu0
        %v1400 = vadd.f32 %v1203, %v1399
        %1401 = vmatprep.mubr.f32.mxu0 0.0
        %1402 = vmatmul.mubr.f32.gmra.mrb[0].mxu0 %v1323
        %v1403 = vpop.f32.mrb[0].mxu0
        %v1404 = vadd.f32 %v1207, %v1403
        %v1405 = vpop.f32.mrb[0].mxu0
        %v1406 = vadd.f32 %v1209, %v1405
        %1407 = vmatprep.mubr.f32.mxu0 0.0
        %1408 = vmatmul.mubr.f32.gmra.mrb[0].mxu0 %v1326
        %v1409 = vpop.f32.mrb[0].mxu0
        %v1410 = vadd.f32 %v1213, %v1409
        %v1411 = vpop.f32.mrb[0].mxu0
        %v1412 = vadd.f32 %v1215, %v1411
        %1413 = vmatprep.mubr.f32.mxu0 0.0
        %1414 = vmatmul.mubr.f32.gmra.mrb[0].mxu0 %v1329
        %v1415 = vpop.f32.mrb[0].mxu0
        %v1416 = vadd.f32 %v1219, %v1415
        %v1417 = vpop.f32.mrb[0].mxu0
        %v1418 = vadd.f32 %v1221, %v1417
        %1419 = vdwg.mxu0
        %1420 = vmatprep.subr.mxu0 0.0
        %1421 = vmatpush1.msra.mxu0 %v1313
        %1422 = vmatprep.subr.mxu0 0.0
        %1423 = vmatpush1.msra.mxu0 0.0
        %1424 = vmatprep.subr.mxu0 0.0
        %1425 = vmatpush1.msra.mxu0 0.0
        %1426 = vmatprep.subr.mxu0 0.0
        %1427 = vmatpush1.msra.mxu0 0.0
        %1428 = vmatprep.subr.mxu0 0.0
        %1429 = vmatpush1.msra.mxu0 0.0
        %1430 = vmatprep.subr.mxu0 0.0
        %1431 = vmatpush1.msra.mxu0 0.0
        %1432 = vmatprep.subr.mxu0 0.0
        %1433 = vmatpush1.msra.mxu0 0.0
        %1434 = vmatprep.subr.mxu0 0.0
        %1435 = vmatpush1.msra.mxu0 0.0
        %1436 = vmatprep.subr.mxu0 0.0
        %1437 = vmatpush1.msra.mxu0 0.0
        %1438 = vmatprep.subr.mxu0 0.0
        %1439 = vmatpush1.msra.mxu0 0.0
        %1440 = vmatprep.subr.mxu0 0.0
        %1441 = vmatpush1.msra.mxu0 0.0
        %1442 = vmatprep.subr.mxu0 0.0
        %1443 = vmatpush1.msra.mxu0 0.0
        %1444 = vmatprep.subr.mxu0 0.0
        %1445 = vmatpush1.msra.mxu0 0.0
        %1446 = vmatprep.subr.mxu0 0.0
        %1447 = vmatpush1.msra.mxu0 0.0
        %1448 = vmatprep.subr.mxu0 0.0
        %1449 = vmatpush1.msra.mxu0 0.0
        %1450 = vmatprep.subr.mxu0 0.0
        %1451 = vmatpush1.msra.mxu0 0.0
        %1452 = vmatprep.subr.mxu0 0.0
        %1453 = vmatpush1.msra.mxu0 0.0
        %1454 = vmatprep.subr.mxu0 0.0
        %1455 = vmatpush1.msra.mxu0 0.0
        %1456 = vmatprep.subr.mxu0 0.0
        %1457 = vmatpush1.msra.mxu0 0.0
        %1458 = vmatprep.subr.mxu0 0.0
        %1459 = vmatpush1.msra.mxu0 0.0
        %1460 = vmatprep.subr.mxu0 0.0
        %1461 = vmatpush1.msra.mxu0 0.0
        %1462 = vmatprep.subr.mxu0 0.0
        %1463 = vmatpush1.msra.mxu0 0.0
        %1464 = vmatprep.subr.mxu0 0.0
        %1465 = vmatpush1.msra.mxu0 0.0
        %1466 = vmatprep.subr.mxu0 0.0
        %1467 = vmatpush1.msra.mxu0 0.0
        %1468 = vmatprep.subr.mxu0 0.0
        %1469 = vmatpush1.msra.mxu0 0.0
        %1470 = vmatprep.subr.mxu0 0.0
        %1471 = vmatpush1.msra.mxu0 0.0
        %1472 = vmatprep.subr.mxu0 0.0
        %1473 = vmatpush1.msra.mxu0 0.0
        %1474 = vmatprep.subr.mxu0 0.0
        %1475 = vmatpush1.msra.mxu0 0.0
        %1476 = vmatprep.subr.mxu0 0.0
        %1477 = vmatpush1.msra.mxu0 0.0
        %1478 = vmatprep.subr.mxu0 0.0
        %1479 = vmatpush1.msra.mxu0 0.0
        %1480 = vmatprep.subr.mxu0 0.0
        %1481 = vmatpush1.msra.mxu0 0.0
        %1482 = vmatprep.subr.mxu0 0.0
        %1483 = vmatpush1.msra.mxu0 0.0
        %1484 = vmatprep.mubr.f32.mxu0 0.0
        %1485 = vmatmul.mubr.f32.gmra.mrb[0].mxu0 %v1320
        %v1486 = vpop.f32.mrb[0].mxu0
        %v1487 = vadd.f32 %v1290, %v1486
        %v1488 = vpop.f32.mrb[0].mxu0
        %1489 = vmatprep.mubr.f32.mxu0 0.0
        %1490 = vmatmul.mubr.f32.gmra.mrb[0].mxu0 %v1323
        %v1491 = vpop.f32.mrb[0].mxu0
        %v1492 = vadd.f32 %v1295, %v1491
        %v1493 = vpop.f32.mrb[0].mxu0
        %1494 = vmatprep.mubr.f32.mxu0 0.0
        %1495 = vmatmul.mubr.f32.gmra.mrb[0].mxu0 %v1326
        %v1496 = vpop.f32.mrb[0].mxu0
        %v1497 = vadd.f32 %v1300, %v1496
        %v1498 = vpop.f32.mrb[0].mxu0
        %1499 = vmatprep.mubr.f32.mxu0 0.0
        %1500 = vmatmul.mubr.f32.gmra.mrb[0].mxu0 %v1329
        %v1501 = vpop.f32.mrb[0].mxu0
        %v1502 = vadd.f32 %v1305, %v1501
        %v1503 = vpop.f32.mrb[0].mxu0
        %1504 = vdwg.mxu0
        %v1505 = vadd.f32 %v1088, %v1398
        %v1506 = vadd.f32 %v1089, %v1400
        %v1507 = vadd.f32 %v1090, %v1487
        %v1508 = vadd.f32 %v1091, %v1404
        %v1509 = vadd.f32 %v1092, %v1406
        %v1510 = vadd.f32 %v1093, %v1492
        %v1511 = vadd.f32 %v1094, %v1410
        %v1512 = vadd.f32 %v1095, %v1412
        %v1513 = vadd.f32 %v1096, %v1497
        %v1514 = vadd.f32 %v1097, %v1416
        %v1515 = vadd.f32 %v1098, %v1418
        %v1516 = vadd.f32 %v1099, %v1502
        %s1517 = scalar_lea.vmem %s2, 96
        %v1518 = vld [vmem:[%s1517] sm:$0xff]
        %v1519 = vld [vmem:[%s1517 + $0x8] sm:$0xff]
        %v1520 = vld [vmem:[%s1517 + $0x10] sm:$0xff]
        %v1521 = vld [vmem:[%s1517 + $0x18] sm:$0xff]
        %s1522 = scalar_lea.vmem %s3, 96
        %v1523 = vld [vmem:[%s1522] sm:$0xff]
        %v1524 = vld [vmem:[%s1522 + $0x8] sm:$0xff]
        %v1525 = vld [vmem:[%s1522 + $0x10] sm:$0xff]
        %v1526 = vld [vmem:[%s1522 + $0x18] sm:$0xff]
        %1527 = vrot.lane.b32.xlu0 %v293, 110
        %v1528 = vpop.permute.xlu0 %1527
        %1529 = vrot.lane.b32.xlu0 %v294, 110
        %v1530 = vpop.permute.xlu0 %1529
        %1531 = vrot.lane.b32.xlu0 %v295, 110
        %v1532 = vpop.permute.xlu0 %1531
        %vm1533 = vcmask 900096
        %v1534 = vsel %vm1533, %v1528, %v1530
        %v1535 = vsel %vm1533, %v1530, %v1532
        %v1540 = vsel %vm304, %v1523, 0
        %v1543 = vsel %vm304, %v1524, 0
        %v1546 = vsel %vm304, %v1525, 0
        %v1549 = vsel %vm304, %v1526, 0
        %1551 = vmatprep.subr.mxu0 %v1535
        %1552 = vmatpush1.msra.mxu0 %v1534
        %1553 = vmatprep.subr.mxu0 0.0
        %1554 = vmatpush1.msra.mxu0 0.0
        %1555 = vmatprep.subr.mxu0 0.0
        %1556 = vmatpush1.msra.mxu0 0.0
        %1557 = vmatprep.subr.mxu0 0.0
        %1558 = vmatpush1.msra.mxu0 0.0
        %1559 = vmatprep.subr.mxu0 0.0
        %1560 = vmatpush1.msra.mxu0 0.0
        %1561 = vmatprep.subr.mxu0 0.0
        %1562 = vmatpush1.msra.mxu0 0.0
        %1563 = vmatprep.subr.mxu0 0.0
        %1564 = vmatpush1.msra.mxu0 0.0
        %1565 = vmatprep.subr.mxu0 0.0
        %1566 = vmatpush1.msra.mxu0 0.0
        %1567 = vmatprep.subr.mxu0 0.0
        %1568 = vmatpush1.msra.mxu0 0.0
        %1569 = vmatprep.subr.mxu0 0.0
        %1570 = vmatpush1.msra.mxu0 0.0
        %1571 = vmatprep.subr.mxu0 0.0
        %1572 = vmatpush1.msra.mxu0 0.0
        %1573 = vmatprep.subr.mxu0 0.0
        %1574 = vmatpush1.msra.mxu0 0.0
        %1575 = vmatprep.subr.mxu0 0.0
        %1576 = vmatpush1.msra.mxu0 0.0
        %1577 = vmatprep.subr.mxu0 0.0
        %1578 = vmatpush1.msra.mxu0 0.0
        %1579 = vmatprep.subr.mxu0 0.0
        %1580 = vmatpush1.msra.mxu0 0.0
        %1581 = vmatprep.subr.mxu0 0.0
        %1582 = vmatpush1.msra.mxu0 0.0
        %1583 = vmatprep.subr.mxu0 0.0
        %1584 = vmatpush1.msra.mxu0 0.0
        %1585 = vmatprep.subr.mxu0 0.0
        %1586 = vmatpush1.msra.mxu0 0.0
        %1587 = vmatprep.subr.mxu0 0.0
        %1588 = vmatpush1.msra.mxu0 0.0
        %1589 = vmatprep.subr.mxu0 0.0
        %1590 = vmatpush1.msra.mxu0 0.0
        %1591 = vmatprep.subr.mxu0 0.0
        %1592 = vmatpush1.msra.mxu0 0.0
        %1593 = vmatprep.subr.mxu0 0.0
        %1594 = vmatpush1.msra.mxu0 0.0
        %1595 = vmatprep.subr.mxu0 0.0
        %1596 = vmatpush1.msra.mxu0 0.0
        %1597 = vmatprep.subr.mxu0 0.0
        %1598 = vmatpush1.msra.mxu0 0.0
        %1599 = vmatprep.subr.mxu0 0.0
        %1600 = vmatpush1.msra.mxu0 0.0
        %1601 = vmatprep.subr.mxu0 0.0
        %1602 = vmatpush1.msra.mxu0 0.0
        %1603 = vmatprep.subr.mxu0 0.0
        %1604 = vmatpush1.msra.mxu0 0.0
        %1605 = vmatprep.subr.mxu0 0.0
        %1606 = vmatpush1.msra.mxu0 0.0
        %1607 = vmatprep.subr.mxu0 0.0
        %1608 = vmatpush1.msra.mxu0 0.0
        %1609 = vmatprep.subr.mxu0 0.0
        %1610 = vmatpush1.msra.mxu0 0.0
        %1611 = vmatprep.subr.mxu0 0.0
        %1612 = vmatpush1.msra.mxu0 0.0
        %1613 = vmatprep.subr.mxu0 0.0
        %1614 = vmatpush1.msra.mxu0 0.0
        %1615 = vmatprep.mubr.f32.mxu0 0.0
        %1616 = vmatmul.mubr.f32.gmra.mrb[0].mxu0 %v1540
        %v1617 = vpop.f32.mrb[0].mxu0
        %v1618 = vadd.f32 0.0, %v1617
        %v1619 = vpop.f32.mrb[0].mxu0
        %v1620 = vadd.f32 0.0, %v1619
        %1621 = vmatprep.mubr.f32.mxu0 0.0
        %1622 = vmatmul.mubr.f32.gmra.mrb[0].mxu0 %v1543
        %v1623 = vpop.f32.mrb[0].mxu0
        %v1624 = vadd.f32 0.0, %v1623
        %v1625 = vpop.f32.mrb[0].mxu0
        %v1626 = vadd.f32 0.0, %v1625
        %1627 = vmatprep.mubr.f32.mxu0 0.0
        %1628 = vmatmul.mubr.f32.gmra.mrb[0].mxu0 %v1546
        %v1629 = vpop.f32.mrb[0].mxu0
        %v1630 = vadd.f32 0.0, %v1629
        %v1631 = vpop.f32.mrb[0].mxu0
        %v1632 = vadd.f32 0.0, %v1631
        %1633 = vmatprep.mubr.f32.mxu0 0.0
        %1634 = vmatmul.mubr.f32.gmra.mrb[0].mxu0 %v1549
        %v1635 = vpop.f32.mrb[0].mxu0
        %v1636 = vadd.f32 0.0, %v1635
        %v1637 = vpop.f32.mrb[0].mxu0
        %v1638 = vadd.f32 0.0, %v1637
        %1639 = vdwg.mxu0
        %1640 = vmatprep.subr.mxu0 0.0
        %1641 = vmatpush1.msra.mxu0 %v1532
        %1642 = vmatprep.subr.mxu0 0.0
        %1643 = vmatpush1.msra.mxu0 0.0
        %1644 = vmatprep.subr.mxu0 0.0
        %1645 = vmatpush1.msra.mxu0 0.0
        %1646 = vmatprep.subr.mxu0 0.0
        %1647 = vmatpush1.msra.mxu0 0.0
        %1648 = vmatprep.subr.mxu0 0.0
        %1649 = vmatpush1.msra.mxu0 0.0
        %1650 = vmatprep.subr.mxu0 0.0
        %1651 = vmatpush1.msra.mxu0 0.0
        %1652 = vmatprep.subr.mxu0 0.0
        %1653 = vmatpush1.msra.mxu0 0.0
        %1654 = vmatprep.subr.mxu0 0.0
        %1655 = vmatpush1.msra.mxu0 0.0
        %1656 = vmatprep.subr.mxu0 0.0
        %1657 = vmatpush1.msra.mxu0 0.0
        %1658 = vmatprep.subr.mxu0 0.0
        %1659 = vmatpush1.msra.mxu0 0.0
        %1660 = vmatprep.subr.mxu0 0.0
        %1661 = vmatpush1.msra.mxu0 0.0
        %1662 = vmatprep.subr.mxu0 0.0
        %1663 = vmatpush1.msra.mxu0 0.0
        %1664 = vmatprep.subr.mxu0 0.0
        %1665 = vmatpush1.msra.mxu0 0.0
        %1666 = vmatprep.subr.mxu0 0.0
        %1667 = vmatpush1.msra.mxu0 0.0
        %1668 = vmatprep.subr.mxu0 0.0
        %1669 = vmatpush1.msra.mxu0 0.0
        %1670 = vmatprep.subr.mxu0 0.0
        %1671 = vmatpush1.msra.mxu0 0.0
        %1672 = vmatprep.subr.mxu0 0.0
        %1673 = vmatpush1.msra.mxu0 0.0
        %1674 = vmatprep.subr.mxu0 0.0
        %1675 = vmatpush1.msra.mxu0 0.0
        %1676 = vmatprep.subr.mxu0 0.0
        %1677 = vmatpush1.msra.mxu0 0.0
        %1678 = vmatprep.subr.mxu0 0.0
        %1679 = vmatpush1.msra.mxu0 0.0
        %1680 = vmatprep.subr.mxu0 0.0
        %1681 = vmatpush1.msra.mxu0 0.0
        %1682 = vmatprep.subr.mxu0 0.0
        %1683 = vmatpush1.msra.mxu0 0.0
        %1684 = vmatprep.subr.mxu0 0.0
        %1685 = vmatpush1.msra.mxu0 0.0
        %1686 = vmatprep.subr.mxu0 0.0
        %1687 = vmatpush1.msra.mxu0 0.0
        %1688 = vmatprep.subr.mxu0 0.0
        %1689 = vmatpush1.msra.mxu0 0.0
        %1690 = vmatprep.subr.mxu0 0.0
        %1691 = vmatpush1.msra.mxu0 0.0
        %1692 = vmatprep.subr.mxu0 0.0
        %1693 = vmatpush1.msra.mxu0 0.0
        %1694 = vmatprep.subr.mxu0 0.0
        %1695 = vmatpush1.msra.mxu0 0.0
        %1696 = vmatprep.subr.mxu0 0.0
        %1697 = vmatpush1.msra.mxu0 0.0
        %1698 = vmatprep.subr.mxu0 0.0
        %1699 = vmatpush1.msra.mxu0 0.0
        %1700 = vmatprep.subr.mxu0 0.0
        %1701 = vmatpush1.msra.mxu0 0.0
        %1702 = vmatprep.subr.mxu0 0.0
        %1703 = vmatpush1.msra.mxu0 0.0
        %1704 = vmatprep.mubr.f32.mxu0 0.0
        %1705 = vmatmul.mubr.f32.gmra.mrb[0].mxu0 %v1540
        %v1706 = vpop.f32.mrb[0].mxu0
        %v1707 = vadd.f32 0.0, %v1706
        %v1708 = vpop.f32.mrb[0].mxu0
        %1709 = vmatprep.mubr.f32.mxu0 0.0
        %1710 = vmatmul.mubr.f32.gmra.mrb[0].mxu0 %v1543
        %v1711 = vpop.f32.mrb[0].mxu0
        %v1712 = vadd.f32 0.0, %v1711
        %v1713 = vpop.f32.mrb[0].mxu0
        %1714 = vmatprep.mubr.f32.mxu0 0.0
        %1715 = vmatmul.mubr.f32.gmra.mrb[0].mxu0 %v1546
        %v1716 = vpop.f32.mrb[0].mxu0
        %v1717 = vadd.f32 0.0, %v1716
        %v1718 = vpop.f32.mrb[0].mxu0
        %1719 = vmatprep.mubr.f32.mxu0 0.0
        %1720 = vmatmul.mubr.f32.gmra.mrb[0].mxu0 %v1549
        %v1721 = vpop.f32.mrb[0].mxu0
        %v1722 = vadd.f32 0.0, %v1721
        %v1723 = vpop.f32.mrb[0].mxu0
        %1724 = vdwg.mxu0
        %1725 = vrot.lane.b32.xlu0 %v290, 110
        %v1726 = vpop.permute.xlu0 %1725
        %1727 = vrot.lane.b32.xlu0 %v291, 110
        %v1728 = vpop.permute.xlu0 %1727
        %1729 = vrot.lane.b32.xlu0 %v292, 110
        %v1730 = vpop.permute.xlu0 %1729
        %v1731 = vsel %vm1533, %v1726, %v1728
        %v1732 = vsel %vm1533, %v1728, %v1730
        %v1737 = vsel %vm304, %v1518, 0
        %v1740 = vsel %vm304, %v1519, 0
        %v1743 = vsel %vm304, %v1520, 0
        %v1746 = vsel %vm304, %v1521, 0
        %1748 = vmatprep.subr.mxu0 %v1732
        %1749 = vmatpush1.msra.mxu0 %v1731
        %1750 = vmatprep.subr.mxu0 0.0
        %1751 = vmatpush1.msra.mxu0 0.0
        %1752 = vmatprep.subr.mxu0 0.0
        %1753 = vmatpush1.msra.mxu0 0.0
        %1754 = vmatprep.subr.mxu0 0.0
        %1755 = vmatpush1.msra.mxu0 0.0
        %1756 = vmatprep.subr.mxu0 0.0
        %1757 = vmatpush1.msra.mxu0 0.0
        %1758 = vmatprep.subr.mxu0 0.0
        %1759 = vmatpush1.msra.mxu0 0.0
        %1760 = vmatprep.subr.mxu0 0.0
        %1761 = vmatpush1.msra.mxu0 0.0
        %1762 = vmatprep.subr.mxu0 0.0
        %1763 = vmatpush1.msra.mxu0 0.0
        %1764 = vmatprep.subr.mxu0 0.0
        %1765 = vmatpush1.msra.mxu0 0.0
        %1766 = vmatprep.subr.mxu0 0.0
        %1767 = vmatpush1.msra.mxu0 0.0
        %1768 = vmatprep.subr.mxu0 0.0
        %1769 = vmatpush1.msra.mxu0 0.0
        %1770 = vmatprep.subr.mxu0 0.0
        %1771 = vmatpush1.msra.mxu0 0.0
        %1772 = vmatprep.subr.mxu0 0.0
        %1773 = vmatpush1.msra.mxu0 0.0
        %1774 = vmatprep.subr.mxu0 0.0
        %1775 = vmatpush1.msra.mxu0 0.0
        %1776 = vmatprep.subr.mxu0 0.0
        %1777 = vmatpush1.msra.mxu0 0.0
        %1778 = vmatprep.subr.mxu0 0.0
        %1779 = vmatpush1.msra.mxu0 0.0
        %1780 = vmatprep.subr.mxu0 0.0
        %1781 = vmatpush1.msra.mxu0 0.0
        %1782 = vmatprep.subr.mxu0 0.0
        %1783 = vmatpush1.msra.mxu0 0.0
        %1784 = vmatprep.subr.mxu0 0.0
        %1785 = vmatpush1.msra.mxu0 0.0
        %1786 = vmatprep.subr.mxu0 0.0
        %1787 = vmatpush1.msra.mxu0 0.0
        %1788 = vmatprep.subr.mxu0 0.0
        %1789 = vmatpush1.msra.mxu0 0.0
        %1790 = vmatprep.subr.mxu0 0.0
        %1791 = vmatpush1.msra.mxu0 0.0
        %1792 = vmatprep.subr.mxu0 0.0
        %1793 = vmatpush1.msra.mxu0 0.0
        %1794 = vmatprep.subr.mxu0 0.0
        %1795 = vmatpush1.msra.mxu0 0.0
        %1796 = vmatprep.subr.mxu0 0.0
        %1797 = vmatpush1.msra.mxu0 0.0
        %1798 = vmatprep.subr.mxu0 0.0
        %1799 = vmatpush1.msra.mxu0 0.0
        %1800 = vmatprep.subr.mxu0 0.0
        %1801 = vmatpush1.msra.mxu0 0.0
        %1802 = vmatprep.subr.mxu0 0.0
        %1803 = vmatpush1.msra.mxu0 0.0
        %1804 = vmatprep.subr.mxu0 0.0
        %1805 = vmatpush1.msra.mxu0 0.0
        %1806 = vmatprep.subr.mxu0 0.0
        %1807 = vmatpush1.msra.mxu0 0.0
        %1808 = vmatprep.subr.mxu0 0.0
        %1809 = vmatpush1.msra.mxu0 0.0
        %1810 = vmatprep.subr.mxu0 0.0
        %1811 = vmatpush1.msra.mxu0 0.0
        %1812 = vmatprep.mubr.f32.mxu0 0.0
        %1813 = vmatmul.mubr.f32.gmra.mrb[0].mxu0 %v1737
        %v1814 = vpop.f32.mrb[0].mxu0
        %v1815 = vadd.f32 %v1618, %v1814
        %v1816 = vpop.f32.mrb[0].mxu0
        %v1817 = vadd.f32 %v1620, %v1816
        %1818 = vmatprep.mubr.f32.mxu0 0.0
        %1819 = vmatmul.mubr.f32.gmra.mrb[0].mxu0 %v1740
        %v1820 = vpop.f32.mrb[0].mxu0
        %v1821 = vadd.f32 %v1624, %v1820
        %v1822 = vpop.f32.mrb[0].mxu0
        %v1823 = vadd.f32 %v1626, %v1822
        %1824 = vmatprep.mubr.f32.mxu0 0.0
        %1825 = vmatmul.mubr.f32.gmra.mrb[0].mxu0 %v1743
        %v1826 = vpop.f32.mrb[0].mxu0
        %v1827 = vadd.f32 %v1630, %v1826
        %v1828 = vpop.f32.mrb[0].mxu0
        %v1829 = vadd.f32 %v1632, %v1828
        %1830 = vmatprep.mubr.f32.mxu0 0.0
        %1831 = vmatmul.mubr.f32.gmra.mrb[0].mxu0 %v1746
        %v1832 = vpop.f32.mrb[0].mxu0
        %v1833 = vadd.f32 %v1636, %v1832
        %v1834 = vpop.f32.mrb[0].mxu0
        %v1835 = vadd.f32 %v1638, %v1834
        %1836 = vdwg.mxu0
        %1837 = vmatprep.subr.mxu0 0.0
        %1838 = vmatpush1.msra.mxu0 %v1730
        %1839 = vmatprep.subr.mxu0 0.0
        %1840 = vmatpush1.msra.mxu0 0.0
        %1841 = vmatprep.subr.mxu0 0.0
        %1842 = vmatpush1.msra.mxu0 0.0
        %1843 = vmatprep.subr.mxu0 0.0
        %1844 = vmatpush1.msra.mxu0 0.0
        %1845 = vmatprep.subr.mxu0 0.0
        %1846 = vmatpush1.msra.mxu0 0.0
        %1847 = vmatprep.subr.mxu0 0.0
        %1848 = vmatpush1.msra.mxu0 0.0
        %1849 = vmatprep.subr.mxu0 0.0
        %1850 = vmatpush1.msra.mxu0 0.0
        %1851 = vmatprep.subr.mxu0 0.0
        %1852 = vmatpush1.msra.mxu0 0.0
        %1853 = vmatprep.subr.mxu0 0.0
        %1854 = vmatpush1.msra.mxu0 0.0
        %1855 = vmatprep.subr.mxu0 0.0
        %1856 = vmatpush1.msra.mxu0 0.0
        %1857 = vmatprep.subr.mxu0 0.0
        %1858 = vmatpush1.msra.mxu0 0.0
        %1859 = vmatprep.subr.mxu0 0.0
        %1860 = vmatpush1.msra.mxu0 0.0
        %1861 = vmatprep.subr.mxu0 0.0
        %1862 = vmatpush1.msra.mxu0 0.0
        %1863 = vmatprep.subr.mxu0 0.0
        %1864 = vmatpush1.msra.mxu0 0.0
        %1865 = vmatprep.subr.mxu0 0.0
        %1866 = vmatpush1.msra.mxu0 0.0
        %1867 = vmatprep.subr.mxu0 0.0
        %1868 = vmatpush1.msra.mxu0 0.0
        %1869 = vmatprep.subr.mxu0 0.0
        %1870 = vmatpush1.msra.mxu0 0.0
        %1871 = vmatprep.subr.mxu0 0.0
        %1872 = vmatpush1.msra.mxu0 0.0
        %1873 = vmatprep.subr.mxu0 0.0
        %1874 = vmatpush1.msra.mxu0 0.0
        %1875 = vmatprep.subr.mxu0 0.0
        %1876 = vmatpush1.msra.mxu0 0.0
        %1877 = vmatprep.subr.mxu0 0.0
        %1878 = vmatpush1.msra.mxu0 0.0
        %1879 = vmatprep.subr.mxu0 0.0
        %1880 = vmatpush1.msra.mxu0 0.0
        %1881 = vmatprep.subr.mxu0 0.0
        %1882 = vmatpush1.msra.mxu0 0.0
        %1883 = vmatprep.subr.mxu0 0.0
        %1884 = vmatpush1.msra.mxu0 0.0
        %1885 = vmatprep.subr.mxu0 0.0
        %1886 = vmatpush1.msra.mxu0 0.0
        %1887 = vmatprep.subr.mxu0 0.0
        %1888 = vmatpush1.msra.mxu0 0.0
        %1889 = vmatprep.subr.mxu0 0.0
        %1890 = vmatpush1.msra.mxu0 0.0
        %1891 = vmatprep.subr.mxu0 0.0
        %1892 = vmatpush1.msra.mxu0 0.0
        %1893 = vmatprep.subr.mxu0 0.0
        %1894 = vmatpush1.msra.mxu0 0.0
        %1895 = vmatprep.subr.mxu0 0.0
        %1896 = vmatpush1.msra.mxu0 0.0
        %1897 = vmatprep.subr.mxu0 0.0
        %1898 = vmatpush1.msra.mxu0 0.0
        %1899 = vmatprep.subr.mxu0 0.0
        %1900 = vmatpush1.msra.mxu0 0.0
        %1901 = vmatprep.mubr.f32.mxu0 0.0
        %1902 = vmatmul.mubr.f32.gmra.mrb[0].mxu0 %v1737
        %v1903 = vpop.f32.mrb[0].mxu0
        %v1904 = vadd.f32 %v1707, %v1903
        %v1905 = vpop.f32.mrb[0].mxu0
        %1906 = vmatprep.mubr.f32.mxu0 0.0
        %1907 = vmatmul.mubr.f32.gmra.mrb[0].mxu0 %v1740
        %v1908 = vpop.f32.mrb[0].mxu0
        %v1909 = vadd.f32 %v1712, %v1908
        %v1910 = vpop.f32.mrb[0].mxu0
        %1911 = vmatprep.mubr.f32.mxu0 0.0
        %1912 = vmatmul.mubr.f32.gmra.mrb[0].mxu0 %v1743
        %v1913 = vpop.f32.mrb[0].mxu0
        %v1914 = vadd.f32 %v1717, %v1913
        %v1915 = vpop.f32.mrb[0].mxu0
        %1916 = vmatprep.mubr.f32.mxu0 0.0
        %1917 = vmatmul.mubr.f32.gmra.mrb[0].mxu0 %v1746
        %v1918 = vpop.f32.mrb[0].mxu0
        %v1919 = vadd.f32 %v1722, %v1918
        %v1920 = vpop.f32.mrb[0].mxu0
        %1921 = vdwg.mxu0
        %v1922 = vadd.f32 %v1505, %v1815
        %v1923 = vadd.f32 %v1506, %v1817
        %v1924 = vadd.f32 %v1507, %v1904
        %v1925 = vadd.f32 %v1508, %v1821
        %v1926 = vadd.f32 %v1509, %v1823
        %v1927 = vadd.f32 %v1510, %v1909
        %v1928 = vadd.f32 %v1511, %v1827
        %v1929 = vadd.f32 %v1512, %v1829
        %v1930 = vadd.f32 %v1513, %v1914
        %v1931 = vadd.f32 %v1514, %v1833
        %v1932 = vadd.f32 %v1515, %v1835
        %v1933 = vadd.f32 %v1516, %v1919
        %s1934 = scalar_lea.vmem %s2, 128
        %v1935 = vld [vmem:[%s1934] sm:$0xff]
        %v1936 = vld [vmem:[%s1934 + $0x8] sm:$0xff]
        %v1937 = vld [vmem:[%s1934 + $0x10] sm:$0xff]
        %v1938 = vld [vmem:[%s1934 + $0x18] sm:$0xff]
        %s1939 = scalar_lea.vmem %s3, 128
        %v1940 = vld [vmem:[%s1939] sm:$0xff]
        %v1941 = vld [vmem:[%s1939 + $0x8] sm:$0xff]
        %v1942 = vld [vmem:[%s1939 + $0x10] sm:$0xff]
        %v1943 = vld [vmem:[%s1939 + $0x18] sm:$0xff]
        %1944 = vrot.lane.b32.xlu0 %v293, 109
        %v1945 = vpop.permute.xlu0 %1944
        %1946 = vrot.lane.b32.xlu0 %v294, 109
        %v1947 = vpop.permute.xlu0 %1946
        %1948 = vrot.lane.b32.xlu0 %v295, 109
        %v1949 = vpop.permute.xlu0 %1948
        %vm1950 = vcmask 891904
        %v1951 = vsel %vm1950, %v1945, %v1947
        %v1952 = vsel %vm1950, %v1947, %v1949
        %v1957 = vsel %vm304, %v1940, 0
        %v1960 = vsel %vm304, %v1941, 0
        %v1963 = vsel %vm304, %v1942, 0
        %v1966 = vsel %vm304, %v1943, 0
        %1968 = vmatprep.subr.mxu0 %v1952
        %1969 = vmatpush1.msra.mxu0 %v1951
        %1970 = vmatprep.subr.mxu0 0.0
        %1971 = vmatpush1.msra.mxu0 0.0
        %1972 = vmatprep.subr.mxu0 0.0
        %1973 = vmatpush1.msra.mxu0 0.0
        %1974 = vmatprep.subr.mxu0 0.0
        %1975 = vmatpush1.msra.mxu0 0.0
        %1976 = vmatprep.subr.mxu0 0.0
        %1977 = vmatpush1.msra.mxu0 0.0
        %1978 = vmatprep.subr.mxu0 0.0
        %1979 = vmatpush1.msra.mxu0 0.0
        %1980 = vmatprep.subr.mxu0 0.0
        %1981 = vmatpush1.msra.mxu0 0.0
        %1982 = vmatprep.subr.mxu0 0.0
        %1983 = vmatpush1.msra.mxu0 0.0
        %1984 = vmatprep.subr.mxu0 0.0
        %1985 = vmatpush1.msra.mxu0 0.0
        %1986 = vmatprep.subr.mxu0 0.0
        %1987 = vmatpush1.msra.mxu0 0.0
        %1988 = vmatprep.subr.mxu0 0.0
        %1989 = vmatpush1.msra.mxu0 0.0
        %1990 = vmatprep.subr.mxu0 0.0
        %1991 = vmatpush1.msra.mxu0 0.0
        %1992 = vmatprep.subr.mxu0 0.0
        %1993 = vmatpush1.msra.mxu0 0.0
        %1994 = vmatprep.subr.mxu0 0.0
        %1995 = vmatpush1.msra.mxu0 0.0
        %1996 = vmatprep.subr.mxu0 0.0
        %1997 = vmatpush1.msra.mxu0 0.0
        %1998 = vmatprep.subr.mxu0 0.0
        %1999 = vmatpush1.msra.mxu0 0.0
        %2000 = vmatprep.subr.mxu0 0.0
        %2001 = vmatpush1.msra.mxu0 0.0
        %2002 = vmatprep.subr.mxu0 0.0
        %2003 = vmatpush1.msra.mxu0 0.0
        %2004 = vmatprep.subr.mxu0 0.0
        %2005 = vmatpush1.msra.mxu0 0.0
        %2006 = vmatprep.subr.mxu0 0.0
        %2007 = vmatpush1.msra.mxu0 0.0
        %2008 = vmatprep.subr.mxu0 0.0
        %2009 = vmatpush1.msra.mxu0 0.0
        %2010 = vmatprep.subr.mxu0 0.0
        %2011 = vmatpush1.msra.mxu0 0.0
        %2012 = vmatprep.subr.mxu0 0.0
        %2013 = vmatpush1.msra.mxu0 0.0
        %2014 = vmatprep.subr.mxu0 0.0
        %2015 = vmatpush1.msra.mxu0 0.0
        %2016 = vmatprep.subr.mxu0 0.0
        %2017 = vmatpush1.msra.mxu0 0.0
        %2018 = vmatprep.subr.mxu0 0.0
        %2019 = vmatpush1.msra.mxu0 0.0
        %2020 = vmatprep.subr.mxu0 0.0
        %2021 = vmatpush1.msra.mxu0 0.0
        %2022 = vmatprep.subr.mxu0 0.0
        %2023 = vmatpush1.msra.mxu0 0.0
        %2024 = vmatprep.subr.mxu0 0.0
        %2025 = vmatpush1.msra.mxu0 0.0
        %2026 = vmatprep.subr.mxu0 0.0
        %2027 = vmatpush1.msra.mxu0 0.0
        %2028 = vmatprep.subr.mxu0 0.0
        %2029 = vmatpush1.msra.mxu0 0.0
        %2030 = vmatprep.subr.mxu0 0.0
        %2031 = vmatpush1.msra.mxu0 0.0
        %2032 = vmatprep.mubr.f32.mxu0 0.0
        %2033 = vmatmul.mubr.f32.gmra.mrb[0].mxu0 %v1957
        %v2034 = vpop.f32.mrb[0].mxu0
        %v2035 = vadd.f32 0.0, %v2034
        %v2036 = vpop.f32.mrb[0].mxu0
        %v2037 = vadd.f32 0.0, %v2036
        %2038 = vmatprep.mubr.f32.mxu0 0.0
        %2039 = vmatmul.mubr.f32.gmra.mrb[0].mxu0 %v1960
        %v2040 = vpop.f32.mrb[0].mxu0
        %v2041 = vadd.f32 0.0, %v2040
        %v2042 = vpop.f32.mrb[0].mxu0
        %v2043 = vadd.f32 0.0, %v2042
        %2044 = vmatprep.mubr.f32.mxu0 0.0
        %2045 = vmatmul.mubr.f32.gmra.mrb[0].mxu0 %v1963
        %v2046 = vpop.f32.mrb[0].mxu0
        %v2047 = vadd.f32 0.0, %v2046
        %v2048 = vpop.f32.mrb[0].mxu0
        %v2049 = vadd.f32 0.0, %v2048
        %2050 = vmatprep.mubr.f32.mxu0 0.0
        %2051 = vmatmul.mubr.f32.gmra.mrb[0].mxu0 %v1966
        %v2052 = vpop.f32.mrb[0].mxu0
        %v2053 = vadd.f32 0.0, %v2052
        %v2054 = vpop.f32.mrb[0].mxu0
        %v2055 = vadd.f32 0.0, %v2054
        %2056 = vdwg.mxu0
        %2057 = vmatprep.subr.mxu0 0.0
        %2058 = vmatpush1.msra.mxu0 %v1949
        %2059 = vmatprep.subr.mxu0 0.0
        %2060 = vmatpush1.msra.mxu0 0.0
        %2061 = vmatprep.subr.mxu0 0.0
        %2062 = vmatpush1.msra.mxu0 0.0
        %2063 = vmatprep.subr.mxu0 0.0
        %2064 = vmatpush1.msra.mxu0 0.0
        %2065 = vmatprep.subr.mxu0 0.0
        %2066 = vmatpush1.msra.mxu0 0.0
        %2067 = vmatprep.subr.mxu0 0.0
        %2068 = vmatpush1.msra.mxu0 0.0
        %2069 = vmatprep.subr.mxu0 0.0
        %2070 = vmatpush1.msra.mxu0 0.0
        %2071 = vmatprep.subr.mxu0 0.0
        %2072 = vmatpush1.msra.mxu0 0.0
        %2073 = vmatprep.subr.mxu0 0.0
        %2074 = vmatpush1.msra.mxu0 0.0
        %2075 = vmatprep.subr.mxu0 0.0
        %2076 = vmatpush1.msra.mxu0 0.0
        %2077 = vmatprep.subr.mxu0 0.0
        %2078 = vmatpush1.msra.mxu0 0.0
        %2079 = vmatprep.subr.mxu0 0.0
        %2080 = vmatpush1.msra.mxu0 0.0
        %2081 = vmatprep.subr.mxu0 0.0
        %2082 = vmatpush1.msra.mxu0 0.0
        %2083 = vmatprep.subr.mxu0 0.0
        %2084 = vmatpush1.msra.mxu0 0.0
        %2085 = vmatprep.subr.mxu0 0.0
        %2086 = vmatpush1.msra.mxu0 0.0
        %2087 = vmatprep.subr.mxu0 0.0
        %2088 = vmatpush1.msra.mxu0 0.0
        %2089 = vmatprep.subr.mxu0 0.0
        %2090 = vmatpush1.msra.mxu0 0.0
        %2091 = vmatprep.subr.mxu0 0.0
        %2092 = vmatpush1.msra.mxu0 0.0
        %2093 = vmatprep.subr.mxu0 0.0
        %2094 = vmatpush1.msra.mxu0 0.0
        %2095 = vmatprep.subr.mxu0 0.0
        %2096 = vmatpush1.msra.mxu0 0.0
        %2097 = vmatprep.subr.mxu0 0.0
        %2098 = vmatpush1.msra.mxu0 0.0
        %2099 = vmatprep.subr.mxu0 0.0
        %2100 = vmatpush1.msra.mxu0 0.0
        %2101 = vmatprep.subr.mxu0 0.0
        %2102 = vmatpush1.msra.mxu0 0.0
        %2103 = vmatprep.subr.mxu0 0.0
        %2104 = vmatpush1.msra.mxu0 0.0
        %2105 = vmatprep.subr.mxu0 0.0
        %2106 = vmatpush1.msra.mxu0 0.0
        %2107 = vmatprep.subr.mxu0 0.0
        %2108 = vmatpush1.msra.mxu0 0.0
        %2109 = vmatprep.subr.mxu0 0.0
        %2110 = vmatpush1.msra.mxu0 0.0
        %2111 = vmatprep.subr.mxu0 0.0
        %2112 = vmatpush1.msra.mxu0 0.0
        %2113 = vmatprep.subr.mxu0 0.0
        %2114 = vmatpush1.msra.mxu0 0.0
        %2115 = vmatprep.subr.mxu0 0.0
        %2116 = vmatpush1.msra.mxu0 0.0
        %2117 = vmatprep.subr.mxu0 0.0
        %2118 = vmatpush1.msra.mxu0 0.0
        %2119 = vmatprep.subr.mxu0 0.0
        %2120 = vmatpush1.msra.mxu0 0.0
        %2121 = vmatprep.mubr.f32.mxu0 0.0
        %2122 = vmatmul.mubr.f32.gmra.mrb[0].mxu0 %v1957
        %v2123 = vpop.f32.mrb[0].mxu0
        %v2124 = vadd.f32 0.0, %v2123
        %v2125 = vpop.f32.mrb[0].mxu0
        %2126 = vmatprep.mubr.f32.mxu0 0.0
        %2127 = vmatmul.mubr.f32.gmra.mrb[0].mxu0 %v1960
        %v2128 = vpop.f32.mrb[0].mxu0
        %v2129 = vadd.f32 0.0, %v2128
        %v2130 = vpop.f32.mrb[0].mxu0
        %2131 = vmatprep.mubr.f32.mxu0 0.0
        %2132 = vmatmul.mubr.f32.gmra.mrb[0].mxu0 %v1963
        %v2133 = vpop.f32.mrb[0].mxu0
        %v2134 = vadd.f32 0.0, %v2133
        %v2135 = vpop.f32.mrb[0].mxu0
        %2136 = vmatprep.mubr.f32.mxu0 0.0
        %2137 = vmatmul.mubr.f32.gmra.mrb[0].mxu0 %v1966
        %v2138 = vpop.f32.mrb[0].mxu0
        %v2139 = vadd.f32 0.0, %v2138
        %v2140 = vpop.f32.mrb[0].mxu0
        %2141 = vdwg.mxu0
        %2142 = vrot.lane.b32.xlu0 %v290, 109
        %v2143 = vpop.permute.xlu0 %2142
        %2144 = vrot.lane.b32.xlu0 %v291, 109
        %v2145 = vpop.permute.xlu0 %2144
        %2146 = vrot.lane.b32.xlu0 %v292, 109
        %v2147 = vpop.permute.xlu0 %2146
        %v2148 = vsel %vm1950, %v2143, %v2145
        %v2149 = vsel %vm1950, %v2145, %v2147
        %v2154 = vsel %vm304, %v1935, 0
        %v2157 = vsel %vm304, %v1936, 0
        %v2160 = vsel %vm304, %v1937, 0
        %v2163 = vsel %vm304, %v1938, 0
        %2165 = vmatprep.subr.mxu0 %v2149
        %2166 = vmatpush1.msra.mxu0 %v2148
        %2167 = vmatprep.subr.mxu0 0.0
        %2168 = vmatpush1.msra.mxu0 0.0
        %2169 = vmatprep.subr.mxu0 0.0
        %2170 = vmatpush1.msra.mxu0 0.0
        %2171 = vmatprep.subr.mxu0 0.0
        %2172 = vmatpush1.msra.mxu0 0.0
        %2173 = vmatprep.subr.mxu0 0.0
        %2174 = vmatpush1.msra.mxu0 0.0
        %2175 = vmatprep.subr.mxu0 0.0
        %2176 = vmatpush1.msra.mxu0 0.0
        %2177 = vmatprep.subr.mxu0 0.0
        %2178 = vmatpush1.msra.mxu0 0.0
        %2179 = vmatprep.subr.mxu0 0.0
        %2180 = vmatpush1.msra.mxu0 0.0
        %2181 = vmatprep.subr.mxu0 0.0
        %2182 = vmatpush1.msra.mxu0 0.0
        %2183 = vmatprep.subr.mxu0 0.0
        %2184 = vmatpush1.msra.mxu0 0.0
        %2185 = vmatprep.subr.mxu0 0.0
        %2186 = vmatpush1.msra.mxu0 0.0
        %2187 = vmatprep.subr.mxu0 0.0
        %2188 = vmatpush1.msra.mxu0 0.0
        %2189 = vmatprep.subr.mxu0 0.0
        %2190 = vmatpush1.msra.mxu0 0.0
        %2191 = vmatprep.subr.mxu0 0.0
        %2192 = vmatpush1.msra.mxu0 0.0
        %2193 = vmatprep.subr.mxu0 0.0
        %2194 = vmatpush1.msra.mxu0 0.0
        %2195 = vmatprep.subr.mxu0 0.0
        %2196 = vmatpush1.msra.mxu0 0.0
        %2197 = vmatprep.subr.mxu0 0.0
        %2198 = vmatpush1.msra.mxu0 0.0
        %2199 = vmatprep.subr.mxu0 0.0
        %2200 = vmatpush1.msra.mxu0 0.0
        %2201 = vmatprep.subr.mxu0 0.0
        %2202 = vmatpush1.msra.mxu0 0.0
        %2203 = vmatprep.subr.mxu0 0.0
        %2204 = vmatpush1.msra.mxu0 0.0
        %2205 = vmatprep.subr.mxu0 0.0
        %2206 = vmatpush1.msra.mxu0 0.0
        %2207 = vmatprep.subr.mxu0 0.0
        %2208 = vmatpush1.msra.mxu0 0.0
        %2209 = vmatprep.subr.mxu0 0.0
        %2210 = vmatpush1.msra.mxu0 0.0
        %2211 = vmatprep.subr.mxu0 0.0
        %2212 = vmatpush1.msra.mxu0 0.0
        %2213 = vmatprep.subr.mxu0 0.0
        %2214 = vmatpush1.msra.mxu0 0.0
        %2215 = vmatprep.subr.mxu0 0.0
        %2216 = vmatpush1.msra.mxu0 0.0
        %2217 = vmatprep.subr.mxu0 0.0
        %2218 = vmatpush1.msra.mxu0 0.0
        %2219 = vmatprep.subr.mxu0 0.0
        %2220 = vmatpush1.msra.mxu0 0.0
        %2221 = vmatprep.subr.mxu0 0.0
        %2222 = vmatpush1.msra.mxu0 0.0
        %2223 = vmatprep.subr.mxu0 0.0
        %2224 = vmatpush1.msra.mxu0 0.0
        %2225 = vmatprep.subr.mxu0 0.0
        %2226 = vmatpush1.msra.mxu0 0.0
        %2227 = vmatprep.subr.mxu0 0.0
        %2228 = vmatpush1.msra.mxu0 0.0
        %2229 = vmatprep.mubr.f32.mxu0 0.0
        %2230 = vmatmul.mubr.f32.gmra.mrb[0].mxu0 %v2154
        %v2231 = vpop.f32.mrb[0].mxu0
        %v2232 = vadd.f32 %v2035, %v2231
        %v2233 = vpop.f32.mrb[0].mxu0
        %v2234 = vadd.f32 %v2037, %v2233
        %2235 = vmatprep.mubr.f32.mxu0 0.0
        %2236 = vmatmul.mubr.f32.gmra.mrb[0].mxu0 %v2157
        %v2237 = vpop.f32.mrb[0].mxu0
        %v2238 = vadd.f32 %v2041, %v2237
        %v2239 = vpop.f32.mrb[0].mxu0
        %v2240 = vadd.f32 %v2043, %v2239
        %2241 = vmatprep.mubr.f32.mxu0 0.0
        %2242 = vmatmul.mubr.f32.gmra.mrb[0].mxu0 %v2160
        %v2243 = vpop.f32.mrb[0].mxu0
        %v2244 = vadd.f32 %v2047, %v2243
        %v2245 = vpop.f32.mrb[0].mxu0
        %v2246 = vadd.f32 %v2049, %v2245
        %2247 = vmatprep.mubr.f32.mxu0 0.0
        %2248 = vmatmul.mubr.f32.gmra.mrb[0].mxu0 %v2163
        %v2249 = vpop.f32.mrb[0].mxu0
        %v2250 = vadd.f32 %v2053, %v2249
        %v2251 = vpop.f32.mrb[0].mxu0
        %v2252 = vadd.f32 %v2055, %v2251
        %2253 = vdwg.mxu0
        %2254 = vmatprep.subr.mxu0 0.0
        %2255 = vmatpush1.msra.mxu0 %v2147
        %2256 = vmatprep.subr.mxu0 0.0
        %2257 = vmatpush1.msra.mxu0 0.0
        %2258 = vmatprep.subr.mxu0 0.0
        %2259 = vmatpush1.msra.mxu0 0.0
        %2260 = vmatprep.subr.mxu0 0.0
        %2261 = vmatpush1.msra.mxu0 0.0
        %2262 = vmatprep.subr.mxu0 0.0
        %2263 = vmatpush1.msra.mxu0 0.0
        %2264 = vmatprep.subr.mxu0 0.0
        %2265 = vmatpush1.msra.mxu0 0.0
        %2266 = vmatprep.subr.mxu0 0.0
        %2267 = vmatpush1.msra.mxu0 0.0
        %2268 = vmatprep.subr.mxu0 0.0
        %2269 = vmatpush1.msra.mxu0 0.0
        %2270 = vmatprep.subr.mxu0 0.0
        %2271 = vmatpush1.msra.mxu0 0.0
        %2272 = vmatprep.subr.mxu0 0.0
        %2273 = vmatpush1.msra.mxu0 0.0
        %2274 = vmatprep.subr.mxu0 0.0
        %2275 = vmatpush1.msra.mxu0 0.0
        %2276 = vmatprep.subr.mxu0 0.0
        %2277 = vmatpush1.msra.mxu0 0.0
        %2278 = vmatprep.subr.mxu0 0.0
        %2279 = vmatpush1.msra.mxu0 0.0
        %2280 = vmatprep.subr.mxu0 0.0
        %2281 = vmatpush1.msra.mxu0 0.0
        %2282 = vmatprep.subr.mxu0 0.0
        %2283 = vmatpush1.msra.mxu0 0.0
        %2284 = vmatprep.subr.mxu0 0.0
        %2285 = vmatpush1.msra.mxu0 0.0
        %2286 = vmatprep.subr.mxu0 0.0
        %2287 = vmatpush1.msra.mxu0 0.0
        %2288 = vmatprep.subr.mxu0 0.0
        %2289 = vmatpush1.msra.mxu0 0.0
        %2290 = vmatprep.subr.mxu0 0.0
        %2291 = vmatpush1.msra.mxu0 0.0
        %2292 = vmatprep.subr.mxu0 0.0
        %2293 = vmatpush1.msra.mxu0 0.0
        %2294 = vmatprep.subr.mxu0 0.0
        %2295 = vmatpush1.msra.mxu0 0.0
        %2296 = vmatprep.subr.mxu0 0.0
        %2297 = vmatpush1.msra.mxu0 0.0
        %2298 = vmatprep.subr.mxu0 0.0
        %2299 = vmatpush1.msra.mxu0 0.0
        %2300 = vmatprep.subr.mxu0 0.0
        %2301 = vmatpush1.msra.mxu0 0.0
        %2302 = vmatprep.subr.mxu0 0.0
        %2303 = vmatpush1.msra.mxu0 0.0
        %2304 = vmatprep.subr.mxu0 0.0
        %2305 = vmatpush1.msra.mxu0 0.0
        %2306 = vmatprep.subr.mxu0 0.0
        %2307 = vmatpush1.msra.mxu0 0.0
        %2308 = vmatprep.subr.mxu0 0.0
        %2309 = vmatpush1.msra.mxu0 0.0
        %2310 = vmatprep.subr.mxu0 0.0
        %2311 = vmatpush1.msra.mxu0 0.0
        %2312 = vmatprep.subr.mxu0 0.0
        %2313 = vmatpush1.msra.mxu0 0.0
        %2314 = vmatprep.subr.mxu0 0.0
        %2315 = vmatpush1.msra.mxu0 0.0
        %2316 = vmatprep.subr.mxu0 0.0
        %2317 = vmatpush1.msra.mxu0 0.0
        %2318 = vmatprep.mubr.f32.mxu0 0.0
        %2319 = vmatmul.mubr.f32.gmra.mrb[0].mxu0 %v2154
        %v2320 = vpop.f32.mrb[0].mxu0
        %v2321 = vadd.f32 %v2124, %v2320
        %v2322 = vpop.f32.mrb[0].mxu0
        %2323 = vmatprep.mubr.f32.mxu0 0.0
        %2324 = vmatmul.mubr.f32.gmra.mrb[0].mxu0 %v2157
        %v2325 = vpop.f32.mrb[0].mxu0
        %v2326 = vadd.f32 %v2129, %v2325
        %v2327 = vpop.f32.mrb[0].mxu0
        %2328 = vmatprep.mubr.f32.mxu0 0.0
        %2329 = vmatmul.mubr.f32.gmra.mrb[0].mxu0 %v2160
        %v2330 = vpop.f32.mrb[0].mxu0
        %v2331 = vadd.f32 %v2134, %v2330
        %v2332 = vpop.f32.mrb[0].mxu0
        %2333 = vmatprep.mubr.f32.mxu0 0.0
        %2334 = vmatmul.mubr.f32.gmra.mrb[0].mxu0 %v2163
        %v2335 = vpop.f32.mrb[0].mxu0
        %v2336 = vadd.f32 %v2139, %v2335
        %v2337 = vpop.f32.mrb[0].mxu0
        %2338 = vdwg.mxu0
        %v2339 = vadd.f32 %v1922, %v2232
        %v2340 = vadd.f32 %v1923, %v2234
        %v2341 = vadd.f32 %v1924, %v2321
        %v2342 = vadd.f32 %v1925, %v2238
        %v2343 = vadd.f32 %v1926, %v2240
        %v2344 = vadd.f32 %v1927, %v2326
        %v2345 = vadd.f32 %v1928, %v2244
        %v2346 = vadd.f32 %v1929, %v2246
        %v2347 = vadd.f32 %v1930, %v2331
        %v2348 = vadd.f32 %v1931, %v2250
        %v2349 = vadd.f32 %v1932, %v2252
        %v2350 = vadd.f32 %v1933, %v2336
        %s2351 = scalar_lea.vmem %s2, 160
        %v2352 = vld [vmem:[%s2351] sm:$0xff]
        %v2353 = vld [vmem:[%s2351 + $0x8] sm:$0xff]
        %v2354 = vld [vmem:[%s2351 + $0x10] sm:$0xff]
        %v2355 = vld [vmem:[%s2351 + $0x18] sm:$0xff]
        %s2356 = scalar_lea.vmem %s3, 160
        %v2357 = vld [vmem:[%s2356] sm:$0xff]
        %v2358 = vld [vmem:[%s2356 + $0x8] sm:$0xff]
        %v2359 = vld [vmem:[%s2356 + $0x10] sm:$0xff]
        %v2360 = vld [vmem:[%s2356 + $0x18] sm:$0xff]
        %2361 = vrot.lane.b32.xlu0 %v293, 108
        %v2362 = vpop.permute.xlu0 %2361
        %2363 = vrot.lane.b32.xlu0 %v294, 108
        %v2364 = vpop.permute.xlu0 %2363
        %2365 = vrot.lane.b32.xlu0 %v295, 108
        %v2366 = vpop.permute.xlu0 %2365
        %vm2367 = vcmask 883712
        %v2368 = vsel %vm2367, %v2362, %v2364
        %v2369 = vsel %vm2367, %v2364, %v2366
        %v2374 = vsel %vm304, %v2357, 0
        %v2377 = vsel %vm304, %v2358, 0
        %v2380 = vsel %vm304, %v2359, 0
        %v2383 = vsel %vm304, %v2360, 0
        %2385 = vmatprep.subr.mxu0 %v2369
        %2386 = vmatpush1.msra.mxu0 %v2368
        %2387 = vmatprep.subr.mxu0 0.0
        %2388 = vmatpush1.msra.mxu0 0.0
        %2389 = vmatprep.subr.mxu0 0.0
        %2390 = vmatpush1.msra.mxu0 0.0
        %2391 = vmatprep.subr.mxu0 0.0
        %2392 = vmatpush1.msra.mxu0 0.0
        %2393 = vmatprep.subr.mxu0 0.0
        %2394 = vmatpush1.msra.mxu0 0.0
        %2395 = vmatprep.subr.mxu0 0.0
        %2396 = vmatpush1.msra.mxu0 0.0
        %2397 = vmatprep.subr.mxu0 0.0
        %2398 = vmatpush1.msra.mxu0 0.0
        %2399 = vmatprep.subr.mxu0 0.0
        %2400 = vmatpush1.msra.mxu0 0.0
        %2401 = vmatprep.subr.mxu0 0.0
        %2402 = vmatpush1.msra.mxu0 0.0
        %2403 = vmatprep.subr.mxu0 0.0
        %2404 = vmatpush1.msra.mxu0 0.0
        %2405 = vmatprep.subr.mxu0 0.0
        %2406 = vmatpush1.msra.mxu0 0.0
        %2407 = vmatprep.subr.mxu0 0.0
        %2408 = vmatpush1.msra.mxu0 0.0
        %2409 = vmatprep.subr.mxu0 0.0
        %2410 = vmatpush1.msra.mxu0 0.0
        %2411 = vmatprep.subr.mxu0 0.0
        %2412 = vmatpush1.msra.mxu0 0.0
        %2413 = vmatprep.subr.mxu0 0.0
        %2414 = vmatpush1.msra.mxu0 0.0
        %2415 = vmatprep.subr.mxu0 0.0
        %2416 = vmatpush1.msra.mxu0 0.0
        %2417 = vmatprep.subr.mxu0 0.0
        %2418 = vmatpush1.msra.mxu0 0.0
        %2419 = vmatprep.subr.mxu0 0.0
        %2420 = vmatpush1.msra.mxu0 0.0
        %2421 = vmatprep.subr.mxu0 0.0
        %2422 = vmatpush1.msra.mxu0 0.0
        %2423 = vmatprep.subr.mxu0 0.0
        %2424 = vmatpush1.msra.mxu0 0.0
        %2425 = vmatprep.subr.mxu0 0.0
        %2426 = vmatpush1.msra.mxu0 0.0
        %2427 = vmatprep.subr.mxu0 0.0
        %2428 = vmatpush1.msra.mxu0 0.0
        %2429 = vmatprep.subr.mxu0 0.0
        %2430 = vmatpush1.msra.mxu0 0.0
        %2431 = vmatprep.subr.mxu0 0.0
        %2432 = vmatpush1.msra.mxu0 0.0
        %2433 = vmatprep.subr.mxu0 0.0
        %2434 = vmatpush1.msra.mxu0 0.0
        %2435 = vmatprep.subr.mxu0 0.0
        %2436 = vmatpush1.msra.mxu0 0.0
        %2437 = vmatprep.subr.mxu0 0.0
        %2438 = vmatpush1.msra.mxu0 0.0
        %2439 = vmatprep.subr.mxu0 0.0
        %2440 = vmatpush1.msra.mxu0 0.0
        %2441 = vmatprep.subr.mxu0 0.0
        %2442 = vmatpush1.msra.mxu0 0.0
        %2443 = vmatprep.subr.mxu0 0.0
        %2444 = vmatpush1.msra.mxu0 0.0
        %2445 = vmatprep.subr.mxu0 0.0
        %2446 = vmatpush1.msra.mxu0 0.0
        %2447 = vmatprep.subr.mxu0 0.0
        %2448 = vmatpush1.msra.mxu0 0.0
        %2449 = vmatprep.mubr.f32.mxu0 0.0
        %2450 = vmatmul.mubr.f32.gmra.mrb[0].mxu0 %v2374
        %v2451 = vpop.f32.mrb[0].mxu0
        %v2452 = vadd.f32 0.0, %v2451
        %v2453 = vpop.f32.mrb[0].mxu0
        %v2454 = vadd.f32 0.0, %v2453
        %2455 = vmatprep.mubr.f32.mxu0 0.0
        %2456 = vmatmul.mubr.f32.gmra.mrb[0].mxu0 %v2377
        %v2457 = vpop.f32.mrb[0].mxu0
        %v2458 = vadd.f32 0.0, %v2457
        %v2459 = vpop.f32.mrb[0].mxu0
        %v2460 = vadd.f32 0.0, %v2459
        %2461 = vmatprep.mubr.f32.mxu0 0.0
        %2462 = vmatmul.mubr.f32.gmra.mrb[0].mxu0 %v2380
        %v2463 = vpop.f32.mrb[0].mxu0
        %v2464 = vadd.f32 0.0, %v2463
        %v2465 = vpop.f32.mrb[0].mxu0
        %v2466 = vadd.f32 0.0, %v2465
        %2467 = vmatprep.mubr.f32.mxu0 0.0
        %2468 = vmatmul.mubr.f32.gmra.mrb[0].mxu0 %v2383
        %v2469 = vpop.f32.mrb[0].mxu0
        %v2470 = vadd.f32 0.0, %v2469
        %v2471 = vpop.f32.mrb[0].mxu0
        %v2472 = vadd.f32 0.0, %v2471
        %2473 = vdwg.mxu0
        %2474 = vmatprep.subr.mxu0 0.0
        %2475 = vmatpush1.msra.mxu0 %v2366
        %2476 = vmatprep.subr.mxu0 0.0
        %2477 = vmatpush1.msra.mxu0 0.0
        %2478 = vmatprep.subr.mxu0 0.0
        %2479 = vmatpush1.msra.mxu0 0.0
        %2480 = vmatprep.subr.mxu0 0.0
        %2481 = vmatpush1.msra.mxu0 0.0
        %2482 = vmatprep.subr.mxu0 0.0
        %2483 = vmatpush1.msra.mxu0 0.0
        %2484 = vmatprep.subr.mxu0 0.0
        %2485 = vmatpush1.msra.mxu0 0.0
        %2486 = vmatprep.subr.mxu0 0.0
        %2487 = vmatpush1.msra.mxu0 0.0
        %2488 = vmatprep.subr.mxu0 0.0
        %2489 = vmatpush1.msra.mxu0 0.0
        %2490 = vmatprep.subr.mxu0 0.0
        %2491 = vmatpush1.msra.mxu0 0.0
        %2492 = vmatprep.subr.mxu0 0.0
        %2493 = vmatpush1.msra.mxu0 0.0
        %2494 = vmatprep.subr.mxu0 0.0
        %2495 = vmatpush1.msra.mxu0 0.0
        %2496 = vmatprep.subr.mxu0 0.0
        %2497 = vmatpush1.msra.mxu0 0.0
        %2498 = vmatprep.subr.mxu0 0.0
        %2499 = vmatpush1.msra.mxu0 0.0
        %2500 = vmatprep.subr.mxu0 0.0
        %2501 = vmatpush1.msra.mxu0 0.0
        %2502 = vmatprep.subr.mxu0 0.0
        %2503 = vmatpush1.msra.mxu0 0.0
        %2504 = vmatprep.subr.mxu0 0.0
        %2505 = vmatpush1.msra.mxu0 0.0
        %2506 = vmatprep.subr.mxu0 0.0
        %2507 = vmatpush1.msra.mxu0 0.0
        %2508 = vmatprep.subr.mxu0 0.0
        %2509 = vmatpush1.msra.mxu0 0.0
        %2510 = vmatprep.subr.mxu0 0.0
        %2511 = vmatpush1.msra.mxu0 0.0
        %2512 = vmatprep.subr.mxu0 0.0
        %2513 = vmatpush1.msra.mxu0 0.0
        %2514 = vmatprep.subr.mxu0 0.0
        %2515 = vmatpush1.msra.mxu0 0.0
        %2516 = vmatprep.subr.mxu0 0.0
        %2517 = vmatpush1.msra.mxu0 0.0
        %2518 = vmatprep.subr.mxu0 0.0
        %2519 = vmatpush1.msra.mxu0 0.0
        %2520 = vmatprep.subr.mxu0 0.0
        %2521 = vmatpush1.msra.mxu0 0.0
        %2522 = vmatprep.subr.mxu0 0.0
        %2523 = vmatpush1.msra.mxu0 0.0
        %2524 = vmatprep.subr.mxu0 0.0
        %2525 = vmatpush1.msra.mxu0 0.0
        %2526 = vmatprep.subr.mxu0 0.0
        %2527 = vmatpush1.msra.mxu0 0.0
        %2528 = vmatprep.subr.mxu0 0.0
        %2529 = vmatpush1.msra.mxu0 0.0
        %2530 = vmatprep.subr.mxu0 0.0
        %2531 = vmatpush1.msra.mxu0 0.0
        %2532 = vmatprep.subr.mxu0 0.0
        %2533 = vmatpush1.msra.mxu0 0.0
        %2534 = vmatprep.subr.mxu0 0.0
        %2535 = vmatpush1.msra.mxu0 0.0
        %2536 = vmatprep.subr.mxu0 0.0
        %2537 = vmatpush1.msra.mxu0 0.0
        %2538 = vmatprep.mubr.f32.mxu0 0.0
        %2539 = vmatmul.mubr.f32.gmra.mrb[0].mxu0 %v2374
        %v2540 = vpop.f32.mrb[0].mxu0
        %v2541 = vadd.f32 0.0, %v2540
        %v2542 = vpop.f32.mrb[0].mxu0
        %2543 = vmatprep.mubr.f32.mxu0 0.0
        %2544 = vmatmul.mubr.f32.gmra.mrb[0].mxu0 %v2377
        %v2545 = vpop.f32.mrb[0].mxu0
        %v2546 = vadd.f32 0.0, %v2545
        %v2547 = vpop.f32.mrb[0].mxu0
        %2548 = vmatprep.mubr.f32.mxu0 0.0
        %2549 = vmatmul.mubr.f32.gmra.mrb[0].mxu0 %v2380
        %v2550 = vpop.f32.mrb[0].mxu0
        %v2551 = vadd.f32 0.0, %v2550
        %v2552 = vpop.f32.mrb[0].mxu0
        %2553 = vmatprep.mubr.f32.mxu0 0.0
        %2554 = vmatmul.mubr.f32.gmra.mrb[0].mxu0 %v2383
        %v2555 = vpop.f32.mrb[0].mxu0
        %v2556 = vadd.f32 0.0, %v2555
        %v2557 = vpop.f32.mrb[0].mxu0
        %2558 = vdwg.mxu0
        %2559 = vrot.lane.b32.xlu0 %v290, 108
        %v2560 = vpop.permute.xlu0 %2559
        %2561 = vrot.lane.b32.xlu0 %v291, 108
        %v2562 = vpop.permute.xlu0 %2561
        %2563 = vrot.lane.b32.xlu0 %v292, 108
        %v2564 = vpop.permute.xlu0 %2563
        %v2565 = vsel %vm2367, %v2560, %v2562
        %v2566 = vsel %vm2367, %v2562, %v2564
        %v2571 = vsel %vm304, %v2352, 0
        %v2574 = vsel %vm304, %v2353, 0
        %v2577 = vsel %vm304, %v2354, 0
        %v2580 = vsel %vm304, %v2355, 0
        %2582 = vmatprep.subr.mxu0 %v2566
        %2583 = vmatpush1.msra.mxu0 %v2565
        %2584 = vmatprep.subr.mxu0 0.0
        %2585 = vmatpush1.msra.mxu0 0.0
        %2586 = vmatprep.subr.mxu0 0.0
        %2587 = vmatpush1.msra.mxu0 0.0
        %2588 = vmatprep.subr.mxu0 0.0
        %2589 = vmatpush1.msra.mxu0 0.0
        %2590 = vmatprep.subr.mxu0 0.0
        %2591 = vmatpush1.msra.mxu0 0.0
        %2592 = vmatprep.subr.mxu0 0.0
        %2593 = vmatpush1.msra.mxu0 0.0
        %2594 = vmatprep.subr.mxu0 0.0
        %2595 = vmatpush1.msra.mxu0 0.0
        %2596 = vmatprep.subr.mxu0 0.0
        %2597 = vmatpush1.msra.mxu0 0.0
        %2598 = vmatprep.subr.mxu0 0.0
        %2599 = vmatpush1.msra.mxu0 0.0
        %2600 = vmatprep.subr.mxu0 0.0
        %2601 = vmatpush1.msra.mxu0 0.0
        %2602 = vmatprep.subr.mxu0 0.0
        %2603 = vmatpush1.msra.mxu0 0.0
        %2604 = vmatprep.subr.mxu0 0.0
        %2605 = vmatpush1.msra.mxu0 0.0
        %2606 = vmatprep.subr.mxu0 0.0
        %2607 = vmatpush1.msra.mxu0 0.0
        %2608 = vmatprep.subr.mxu0 0.0
        %2609 = vmatpush1.msra.mxu0 0.0
        %2610 = vmatprep.subr.mxu0 0.0
        %2611 = vmatpush1.msra.mxu0 0.0
        %2612 = vmatprep.subr.mxu0 0.0
        %2613 = vmatpush1.msra.mxu0 0.0
        %2614 = vmatprep.subr.mxu0 0.0
        %2615 = vmatpush1.msra.mxu0 0.0
        %2616 = vmatprep.subr.mxu0 0.0
        %2617 = vmatpush1.msra.mxu0 0.0
        %2618 = vmatprep.subr.mxu0 0.0
        %2619 = vmatpush1.msra.mxu0 0.0
        %2620 = vmatprep.subr.mxu0 0.0
        %2621 = vmatpush1.msra.mxu0 0.0
        %2622 = vmatprep.subr.mxu0 0.0
        %2623 = vmatpush1.msra.mxu0 0.0
        %2624 = vmatprep.subr.mxu0 0.0
        %2625 = vmatpush1.msra.mxu0 0.0
        %2626 = vmatprep.subr.mxu0 0.0
        %2627 = vmatpush1.msra.mxu0 0.0
        %2628 = vmatprep.subr.mxu0 0.0
        %2629 = vmatpush1.msra.mxu0 0.0
        %2630 = vmatprep.subr.mxu0 0.0
        %2631 = vmatpush1.msra.mxu0 0.0
        %2632 = vmatprep.subr.mxu0 0.0
        %2633 = vmatpush1.msra.mxu0 0.0
        %2634 = vmatprep.subr.mxu0 0.0
        %2635 = vmatpush1.msra.mxu0 0.0
        %2636 = vmatprep.subr.mxu0 0.0
        %2637 = vmatpush1.msra.mxu0 0.0
        %2638 = vmatprep.subr.mxu0 0.0
        %2639 = vmatpush1.msra.mxu0 0.0
        %2640 = vmatprep.subr.mxu0 0.0
        %2641 = vmatpush1.msra.mxu0 0.0
        %2642 = vmatprep.subr.mxu0 0.0
        %2643 = vmatpush1.msra.mxu0 0.0
        %2644 = vmatprep.subr.mxu0 0.0
        %2645 = vmatpush1.msra.mxu0 0.0
        %2646 = vmatprep.mubr.f32.mxu0 0.0
        %2647 = vmatmul.mubr.f32.gmra.mrb[0].mxu0 %v2571
        %v2648 = vpop.f32.mrb[0].mxu0
        %v2649 = vadd.f32 %v2452, %v2648
        %v2650 = vpop.f32.mrb[0].mxu0
        %v2651 = vadd.f32 %v2454, %v2650
        %2652 = vmatprep.mubr.f32.mxu0 0.0
        %2653 = vmatmul.mubr.f32.gmra.mrb[0].mxu0 %v2574
        %v2654 = vpop.f32.mrb[0].mxu0
        %v2655 = vadd.f32 %v2458, %v2654
        %v2656 = vpop.f32.mrb[0].mxu0
        %v2657 = vadd.f32 %v2460, %v2656
        %2658 = vmatprep.mubr.f32.mxu0 0.0
        %2659 = vmatmul.mubr.f32.gmra.mrb[0].mxu0 %v2577
        %v2660 = vpop.f32.mrb[0].mxu0
        %v2661 = vadd.f32 %v2464, %v2660
        %v2662 = vpop.f32.mrb[0].mxu0
        %v2663 = vadd.f32 %v2466, %v2662
        %2664 = vmatprep.mubr.f32.mxu0 0.0
        %2665 = vmatmul.mubr.f32.gmra.mrb[0].mxu0 %v2580
        %v2666 = vpop.f32.mrb[0].mxu0
        %v2667 = vadd.f32 %v2470, %v2666
        %v2668 = vpop.f32.mrb[0].mxu0
        %v2669 = vadd.f32 %v2472, %v2668
        %2670 = vdwg.mxu0
        %2671 = vmatprep.subr.mxu0 0.0
        %2672 = vmatpush1.msra.mxu0 %v2564
        %2673 = vmatprep.subr.mxu0 0.0
        %2674 = vmatpush1.msra.mxu0 0.0
        %2675 = vmatprep.subr.mxu0 0.0
        %2676 = vmatpush1.msra.mxu0 0.0
        %2677 = vmatprep.subr.mxu0 0.0
        %2678 = vmatpush1.msra.mxu0 0.0
        %2679 = vmatprep.subr.mxu0 0.0
        %2680 = vmatpush1.msra.mxu0 0.0
        %2681 = vmatprep.subr.mxu0 0.0
        %2682 = vmatpush1.msra.mxu0 0.0
        %2683 = vmatprep.subr.mxu0 0.0
        %2684 = vmatpush1.msra.mxu0 0.0
        %2685 = vmatprep.subr.mxu0 0.0
        %2686 = vmatpush1.msra.mxu0 0.0
        %2687 = vmatprep.subr.mxu0 0.0
        %2688 = vmatpush1.msra.mxu0 0.0
        %2689 = vmatprep.subr.mxu0 0.0
        %2690 = vmatpush1.msra.mxu0 0.0
        %2691 = vmatprep.subr.mxu0 0.0
        %2692 = vmatpush1.msra.mxu0 0.0
        %2693 = vmatprep.subr.mxu0 0.0
        %2694 = vmatpush1.msra.mxu0 0.0
        %2695 = vmatprep.subr.mxu0 0.0
        %2696 = vmatpush1.msra.mxu0 0.0
        %2697 = vmatprep.subr.mxu0 0.0
        %2698 = vmatpush1.msra.mxu0 0.0
        %2699 = vmatprep.subr.mxu0 0.0
        %2700 = vmatpush1.msra.mxu0 0.0
        %2701 = vmatprep.subr.mxu0 0.0
        %2702 = vmatpush1.msra.mxu0 0.0
        %2703 = vmatprep.subr.mxu0 0.0
        %2704 = vmatpush1.msra.mxu0 0.0
        %2705 = vmatprep.subr.mxu0 0.0
        %2706 = vmatpush1.msra.mxu0 0.0
        %2707 = vmatprep.subr.mxu0 0.0
        %2708 = vmatpush1.msra.mxu0 0.0
        %2709 = vmatprep.subr.mxu0 0.0
        %2710 = vmatpush1.msra.mxu0 0.0
        %2711 = vmatprep.subr.mxu0 0.0
        %2712 = vmatpush1.msra.mxu0 0.0
        %2713 = vmatprep.subr.mxu0 0.0
        %2714 = vmatpush1.msra.mxu0 0.0
        %2715 = vmatprep.subr.mxu0 0.0
        %2716 = vmatpush1.msra.mxu0 0.0
        %2717 = vmatprep.subr.mxu0 0.0
        %2718 = vmatpush1.msra.mxu0 0.0
        %2719 = vmatprep.subr.mxu0 0.0
        %2720 = vmatpush1.msra.mxu0 0.0
        %2721 = vmatprep.subr.mxu0 0.0
        %2722 = vmatpush1.msra.mxu0 0.0
        %2723 = vmatprep.subr.mxu0 0.0
        %2724 = vmatpush1.msra.mxu0 0.0
        %2725 = vmatprep.subr.mxu0 0.0
        %2726 = vmatpush1.msra.mxu0 0.0
        %2727 = vmatprep.subr.mxu0 0.0
        %2728 = vmatpush1.msra.mxu0 0.0
        %2729 = vmatprep.subr.mxu0 0.0
        %2730 = vmatpush1.msra.mxu0 0.0
        %2731 = vmatprep.subr.mxu0 0.0
        %2732 = vmatpush1.msra.mxu0 0.0
        %2733 = vmatprep.subr.mxu0 0.0
        %2734 = vmatpush1.msra.mxu0 0.0
        %2735 = vmatprep.mubr.f32.mxu0 0.0
        %2736 = vmatmul.mubr.f32.gmra.mrb[0].mxu0 %v2571
        %v2737 = vpop.f32.mrb[0].mxu0
        %v2738 = vadd.f32 %v2541, %v2737
        %v2739 = vpop.f32.mrb[0].mxu0
        %2740 = vmatprep.mubr.f32.mxu0 0.0
        %2741 = vmatmul.mubr.f32.gmra.mrb[0].mxu0 %v2574
        %v2742 = vpop.f32.mrb[0].mxu0
        %v2743 = vadd.f32 %v2546, %v2742
        %v2744 = vpop.f32.mrb[0].mxu0
        %2745 = vmatprep.mubr.f32.mxu0 0.0
        %2746 = vmatmul.mubr.f32.gmra.mrb[0].mxu0 %v2577
        %v2747 = vpop.f32.mrb[0].mxu0
        %v2748 = vadd.f32 %v2551, %v2747
        %v2749 = vpop.f32.mrb[0].mxu0
        %2750 = vmatprep.mubr.f32.mxu0 0.0
        %2751 = vmatmul.mubr.f32.gmra.mrb[0].mxu0 %v2580
        %v2752 = vpop.f32.mrb[0].mxu0
        %v2753 = vadd.f32 %v2556, %v2752
        %v2754 = vpop.f32.mrb[0].mxu0
        %2755 = vdwg.mxu0
        %v2756 = vadd.f32 %v2339, %v2649
        %v2757 = vadd.f32 %v2340, %v2651
        %v2758 = vadd.f32 %v2341, %v2738
        %v2759 = vadd.f32 %v2342, %v2655
        %v2760 = vadd.f32 %v2343, %v2657
        %v2761 = vadd.f32 %v2344, %v2743
        %v2762 = vadd.f32 %v2345, %v2661
        %v2763 = vadd.f32 %v2346, %v2663
        %v2764 = vadd.f32 %v2347, %v2748
        %v2765 = vadd.f32 %v2348, %v2667
        %v2766 = vadd.f32 %v2349, %v2669
        %v2767 = vadd.f32 %v2350, %v2753
        %s2768 = scalar_lea.vmem %s2, 192
        %v2769 = vld [vmem:[%s2768] sm:$0xff]
        %v2770 = vld [vmem:[%s2768 + $0x8] sm:$0xff]
        %v2771 = vld [vmem:[%s2768 + $0x10] sm:$0xff]
        %v2772 = vld [vmem:[%s2768 + $0x18] sm:$0xff]
        %s2773 = scalar_lea.vmem %s3, 192
        %v2774 = vld [vmem:[%s2773] sm:$0xff]
        %v2775 = vld [vmem:[%s2773 + $0x8] sm:$0xff]
        %v2776 = vld [vmem:[%s2773 + $0x10] sm:$0xff]
        %v2777 = vld [vmem:[%s2773 + $0x18] sm:$0xff]
        %2778 = vrot.lane.b32.xlu0 %v293, 92
        %v2779 = vpop.permute.xlu0 %2778
        %2780 = vrot.lane.b32.xlu0 %v294, 92
        %v2781 = vpop.permute.xlu0 %2780
        %2782 = vrot.lane.b32.xlu0 %v295, 92
        %v2783 = vpop.permute.xlu0 %2782
        %vm2784 = vcmask 752640
        %v2785 = vsel %vm2784, %v2779, %v2781
        %v2786 = vsel %vm2784, %v2781, %v2783
        %v2791 = vsel %vm304, %v2774, 0
        %v2794 = vsel %vm304, %v2775, 0
        %v2797 = vsel %vm304, %v2776, 0
        %v2800 = vsel %vm304, %v2777, 0
        %2802 = vmatprep.subr.mxu0 %v2786
        %2803 = vmatpush1.msra.mxu0 %v2785
        %2804 = vmatprep.subr.mxu0 0.0
        %2805 = vmatpush1.msra.mxu0 0.0
        %2806 = vmatprep.subr.mxu0 0.0
        %2807 = vmatpush1.msra.mxu0 0.0
        %2808 = vmatprep.subr.mxu0 0.0
        %2809 = vmatpush1.msra.mxu0 0.0
        %2810 = vmatprep.subr.mxu0 0.0
        %2811 = vmatpush1.msra.mxu0 0.0
        %2812 = vmatprep.subr.mxu0 0.0
        %2813 = vmatpush1.msra.mxu0 0.0
        %2814 = vmatprep.subr.mxu0 0.0
        %2815 = vmatpush1.msra.mxu0 0.0
        %2816 = vmatprep.subr.mxu0 0.0
        %2817 = vmatpush1.msra.mxu0 0.0
        %2818 = vmatprep.subr.mxu0 0.0
        %2819 = vmatpush1.msra.mxu0 0.0
        %2820 = vmatprep.subr.mxu0 0.0
        %2821 = vmatpush1.msra.mxu0 0.0
        %2822 = vmatprep.subr.mxu0 0.0
        %2823 = vmatpush1.msra.mxu0 0.0
        %2824 = vmatprep.subr.mxu0 0.0
        %2825 = vmatpush1.msra.mxu0 0.0
        %2826 = vmatprep.subr.mxu0 0.0
        %2827 = vmatpush1.msra.mxu0 0.0
        %2828 = vmatprep.subr.mxu0 0.0
        %2829 = vmatpush1.msra.mxu0 0.0
        %2830 = vmatprep.subr.mxu0 0.0
        %2831 = vmatpush1.msra.mxu0 0.0
        %2832 = vmatprep.subr.mxu0 0.0
        %2833 = vmatpush1.msra.mxu0 0.0
        %2834 = vmatprep.subr.mxu0 0.0
        %2835 = vmatpush1.msra.mxu0 0.0
        %2836 = vmatprep.subr.mxu0 0.0
        %2837 = vmatpush1.msra.mxu0 0.0
        %2838 = vmatprep.subr.mxu0 0.0
        %2839 = vmatpush1.msra.mxu0 0.0
        %2840 = vmatprep.subr.mxu0 0.0
        %2841 = vmatpush1.msra.mxu0 0.0
        %2842 = vmatprep.subr.mxu0 0.0
        %2843 = vmatpush1.msra.mxu0 0.0
        %2844 = vmatprep.subr.mxu0 0.0
        %2845 = vmatpush1.msra.mxu0 0.0
        %2846 = vmatprep.subr.mxu0 0.0
        %2847 = vmatpush1.msra.mxu0 0.0
        %2848 = vmatprep.subr.mxu0 0.0
        %2849 = vmatpush1.msra.mxu0 0.0
        %2850 = vmatprep.subr.mxu0 0.0
        %2851 = vmatpush1.msra.mxu0 0.0
        %2852 = vmatprep.subr.mxu0 0.0
        %2853 = vmatpush1.msra.mxu0 0.0
        %2854 = vmatprep.subr.mxu0 0.0
        %2855 = vmatpush1.msra.mxu0 0.0
        %2856 = vmatprep.subr.mxu0 0.0
        %2857 = vmatpush1.msra.mxu0 0.0
        %2858 = vmatprep.subr.mxu0 0.0
        %2859 = vmatpush1.msra.mxu0 0.0
        %2860 = vmatprep.subr.mxu0 0.0
        %2861 = vmatpush1.msra.mxu0 0.0
        %2862 = vmatprep.subr.mxu0 0.0
        %2863 = vmatpush1.msra.mxu0 0.0
        %2864 = vmatprep.subr.mxu0 0.0
        %2865 = vmatpush1.msra.mxu0 0.0
        %2866 = vmatprep.mubr.f32.mxu0 0.0
        %2867 = vmatmul.mubr.f32.gmra.mrb[0].mxu0 %v2791
        %v2868 = vpop.f32.mrb[0].mxu0
        %v2869 = vadd.f32 0.0, %v2868
        %v2870 = vpop.f32.mrb[0].mxu0
        %v2871 = vadd.f32 0.0, %v2870
        %2872 = vmatprep.mubr.f32.mxu0 0.0
        %2873 = vmatmul.mubr.f32.gmra.mrb[0].mxu0 %v2794
        %v2874 = vpop.f32.mrb[0].mxu0
        %v2875 = vadd.f32 0.0, %v2874
        %v2876 = vpop.f32.mrb[0].mxu0
        %v2877 = vadd.f32 0.0, %v2876
        %2878 = vmatprep.mubr.f32.mxu0 0.0
        %2879 = vmatmul.mubr.f32.gmra.mrb[0].mxu0 %v2797
        %v2880 = vpop.f32.mrb[0].mxu0
        %v2881 = vadd.f32 0.0, %v2880
        %v2882 = vpop.f32.mrb[0].mxu0
        %v2883 = vadd.f32 0.0, %v2882
        %2884 = vmatprep.mubr.f32.mxu0 0.0
        %2885 = vmatmul.mubr.f32.gmra.mrb[0].mxu0 %v2800
        %v2886 = vpop.f32.mrb[0].mxu0
        %v2887 = vadd.f32 0.0, %v2886
        %v2888 = vpop.f32.mrb[0].mxu0
        %v2889 = vadd.f32 0.0, %v2888
        %2890 = vdwg.mxu0
        %2891 = vmatprep.subr.mxu0 0.0
        %2892 = vmatpush1.msra.mxu0 %v2783
        %2893 = vmatprep.subr.mxu0 0.0
        %2894 = vmatpush1.msra.mxu0 0.0
        %2895 = vmatprep.subr.mxu0 0.0
        %2896 = vmatpush1.msra.mxu0 0.0
        %2897 = vmatprep.subr.mxu0 0.0
        %2898 = vmatpush1.msra.mxu0 0.0
        %2899 = vmatprep.subr.mxu0 0.0
        %2900 = vmatpush1.msra.mxu0 0.0
        %2901 = vmatprep.subr.mxu0 0.0
        %2902 = vmatpush1.msra.mxu0 0.0
        %2903 = vmatprep.subr.mxu0 0.0
        %2904 = vmatpush1.msra.mxu0 0.0
        %2905 = vmatprep.subr.mxu0 0.0
        %2906 = vmatpush1.msra.mxu0 0.0
        %2907 = vmatprep.subr.mxu0 0.0
        %2908 = vmatpush1.msra.mxu0 0.0
        %2909 = vmatprep.subr.mxu0 0.0
        %2910 = vmatpush1.msra.mxu0 0.0
        %2911 = vmatprep.subr.mxu0 0.0
        %2912 = vmatpush1.msra.mxu0 0.0
        %2913 = vmatprep.subr.mxu0 0.0
        %2914 = vmatpush1.msra.mxu0 0.0
        %2915 = vmatprep.subr.mxu0 0.0
        %2916 = vmatpush1.msra.mxu0 0.0
        %2917 = vmatprep.subr.mxu0 0.0
        %2918 = vmatpush1.msra.mxu0 0.0
        %2919 = vmatprep.subr.mxu0 0.0
        %2920 = vmatpush1.msra.mxu0 0.0
        %2921 = vmatprep.subr.mxu0 0.0
        %2922 = vmatpush1.msra.mxu0 0.0
        %2923 = vmatprep.subr.mxu0 0.0
        %2924 = vmatpush1.msra.mxu0 0.0
        %2925 = vmatprep.subr.mxu0 0.0
        %2926 = vmatpush1.msra.mxu0 0.0
        %2927 = vmatprep.subr.mxu0 0.0
        %2928 = vmatpush1.msra.mxu0 0.0
        %2929 = vmatprep.subr.mxu0 0.0
        %2930 = vmatpush1.msra.mxu0 0.0
        %2931 = vmatprep.subr.mxu0 0.0
        %2932 = vmatpush1.msra.mxu0 0.0
        %2933 = vmatprep.subr.mxu0 0.0
        %2934 = vmatpush1.msra.mxu0 0.0
        %2935 = vmatprep.subr.mxu0 0.0
        %2936 = vmatpush1.msra.mxu0 0.0
        %2937 = vmatprep.subr.mxu0 0.0
        %2938 = vmatpush1.msra.mxu0 0.0
        %2939 = vmatprep.subr.mxu0 0.0
        %2940 = vmatpush1.msra.mxu0 0.0
        %2941 = vmatprep.subr.mxu0 0.0
        %2942 = vmatpush1.msra.mxu0 0.0
        %2943 = vmatprep.subr.mxu0 0.0
        %2944 = vmatpush1.msra.mxu0 0.0
        %2945 = vmatprep.subr.mxu0 0.0
        %2946 = vmatpush1.msra.mxu0 0.0
        %2947 = vmatprep.subr.mxu0 0.0
        %2948 = vmatpush1.msra.mxu0 0.0
        %2949 = vmatprep.subr.mxu0 0.0
        %2950 = vmatpush1.msra.mxu0 0.0
        %2951 = vmatprep.subr.mxu0 0.0
        %2952 = vmatpush1.msra.mxu0 0.0
        %2953 = vmatprep.subr.mxu0 0.0
        %2954 = vmatpush1.msra.mxu0 0.0
        %2955 = vmatprep.mubr.f32.mxu0 0.0
        %2956 = vmatmul.mubr.f32.gmra.mrb[0].mxu0 %v2791
        %v2957 = vpop.f32.mrb[0].mxu0
        %v2958 = vadd.f32 0.0, %v2957
        %v2959 = vpop.f32.mrb[0].mxu0
        %2960 = vmatprep.mubr.f32.mxu0 0.0
        %2961 = vmatmul.mubr.f32.gmra.mrb[0].mxu0 %v2794
        %v2962 = vpop.f32.mrb[0].mxu0
        %v2963 = vadd.f32 0.0, %v2962
        %v2964 = vpop.f32.mrb[0].mxu0
        %2965 = vmatprep.mubr.f32.mxu0 0.0
        %2966 = vmatmul.mubr.f32.gmra.mrb[0].mxu0 %v2797
        %v2967 = vpop.f32.mrb[0].mxu0
        %v2968 = vadd.f32 0.0, %v2967
        %v2969 = vpop.f32.mrb[0].mxu0
        %2970 = vmatprep.mubr.f32.mxu0 0.0
        %2971 = vmatmul.mubr.f32.gmra.mrb[0].mxu0 %v2800
        %v2972 = vpop.f32.mrb[0].mxu0
        %v2973 = vadd.f32 0.0, %v2972
        %v2974 = vpop.f32.mrb[0].mxu0
        %2975 = vdwg.mxu0
        %2976 = vrot.lane.b32.xlu0 %v290, 92
        %v2977 = vpop.permute.xlu0 %2976
        %2978 = vrot.lane.b32.xlu0 %v291, 92
        %v2979 = vpop.permute.xlu0 %2978
        %2980 = vrot.lane.b32.xlu0 %v292, 92
        %v2981 = vpop.permute.xlu0 %2980
        %v2982 = vsel %vm2784, %v2977, %v2979
        %v2983 = vsel %vm2784, %v2979, %v2981
        %v2988 = vsel %vm304, %v2769, 0
        %v2991 = vsel %vm304, %v2770, 0
        %v2994 = vsel %vm304, %v2771, 0
        %v2997 = vsel %vm304, %v2772, 0
        %2999 = vmatprep.subr.mxu0 %v2983
        %3000 = vmatpush1.msra.mxu0 %v2982
        %3001 = vmatprep.subr.mxu0 0.0
        %3002 = vmatpush1.msra.mxu0 0.0
        %3003 = vmatprep.subr.mxu0 0.0
        %3004 = vmatpush1.msra.mxu0 0.0
        %3005 = vmatprep.subr.mxu0 0.0
        %3006 = vmatpush1.msra.mxu0 0.0
        %3007 = vmatprep.subr.mxu0 0.0
        %3008 = vmatpush1.msra.mxu0 0.0
        %3009 = vmatprep.subr.mxu0 0.0
        %3010 = vmatpush1.msra.mxu0 0.0
        %3011 = vmatprep.subr.mxu0 0.0
        %3012 = vmatpush1.msra.mxu0 0.0
        %3013 = vmatprep.subr.mxu0 0.0
        %3014 = vmatpush1.msra.mxu0 0.0
        %3015 = vmatprep.subr.mxu0 0.0
        %3016 = vmatpush1.msra.mxu0 0.0
        %3017 = vmatprep.subr.mxu0 0.0
        %3018 = vmatpush1.msra.mxu0 0.0
        %3019 = vmatprep.subr.mxu0 0.0
        %3020 = vmatpush1.msra.mxu0 0.0
        %3021 = vmatprep.subr.mxu0 0.0
        %3022 = vmatpush1.msra.mxu0 0.0
        %3023 = vmatprep.subr.mxu0 0.0
        %3024 = vmatpush1.msra.mxu0 0.0
        %3025 = vmatprep.subr.mxu0 0.0
        %3026 = vmatpush1.msra.mxu0 0.0
        %3027 = vmatprep.subr.mxu0 0.0
        %3028 = vmatpush1.msra.mxu0 0.0
        %3029 = vmatprep.subr.mxu0 0.0
        %3030 = vmatpush1.msra.mxu0 0.0
        %3031 = vmatprep.subr.mxu0 0.0
        %3032 = vmatpush1.msra.mxu0 0.0
        %3033 = vmatprep.subr.mxu0 0.0
        %3034 = vmatpush1.msra.mxu0 0.0
        %3035 = vmatprep.subr.mxu0 0.0
        %3036 = vmatpush1.msra.mxu0 0.0
        %3037 = vmatprep.subr.mxu0 0.0
        %3038 = vmatpush1.msra.mxu0 0.0
        %3039 = vmatprep.subr.mxu0 0.0
        %3040 = vmatpush1.msra.mxu0 0.0
        %3041 = vmatprep.subr.mxu0 0.0
        %3042 = vmatpush1.msra.mxu0 0.0
        %3043 = vmatprep.subr.mxu0 0.0
        %3044 = vmatpush1.msra.mxu0 0.0
        %3045 = vmatprep.subr.mxu0 0.0
        %3046 = vmatpush1.msra.mxu0 0.0
        %3047 = vmatprep.subr.mxu0 0.0
        %3048 = vmatpush1.msra.mxu0 0.0
        %3049 = vmatprep.subr.mxu0 0.0
        %3050 = vmatpush1.msra.mxu0 0.0
        %3051 = vmatprep.subr.mxu0 0.0
        %3052 = vmatpush1.msra.mxu0 0.0
        %3053 = vmatprep.subr.mxu0 0.0
        %3054 = vmatpush1.msra.mxu0 0.0
        %3055 = vmatprep.subr.mxu0 0.0
        %3056 = vmatpush1.msra.mxu0 0.0
        %3057 = vmatprep.subr.mxu0 0.0
        %3058 = vmatpush1.msra.mxu0 0.0
        %3059 = vmatprep.subr.mxu0 0.0
        %3060 = vmatpush1.msra.mxu0 0.0
        %3061 = vmatprep.subr.mxu0 0.0
        %3062 = vmatpush1.msra.mxu0 0.0
        %3063 = vmatprep.mubr.f32.mxu0 0.0
        %3064 = vmatmul.mubr.f32.gmra.mrb[0].mxu0 %v2988
        %v3065 = vpop.f32.mrb[0].mxu0
        %v3066 = vadd.f32 %v2869, %v3065
        %v3067 = vpop.f32.mrb[0].mxu0
        %v3068 = vadd.f32 %v2871, %v3067
        %3069 = vmatprep.mubr.f32.mxu0 0.0
        %3070 = vmatmul.mubr.f32.gmra.mrb[0].mxu0 %v2991
        %v3071 = vpop.f32.mrb[0].mxu0
        %v3072 = vadd.f32 %v2875, %v3071
        %v3073 = vpop.f32.mrb[0].mxu0
        %v3074 = vadd.f32 %v2877, %v3073
        %3075 = vmatprep.mubr.f32.mxu0 0.0
        %3076 = vmatmul.mubr.f32.gmra.mrb[0].mxu0 %v2994
        %v3077 = vpop.f32.mrb[0].mxu0
        %v3078 = vadd.f32 %v2881, %v3077
        %v3079 = vpop.f32.mrb[0].mxu0
        %v3080 = vadd.f32 %v2883, %v3079
        %3081 = vmatprep.mubr.f32.mxu0 0.0
        %3082 = vmatmul.mubr.f32.gmra.mrb[0].mxu0 %v2997
        %v3083 = vpop.f32.mrb[0].mxu0
        %v3084 = vadd.f32 %v2887, %v3083
        %v3085 = vpop.f32.mrb[0].mxu0
        %v3086 = vadd.f32 %v2889, %v3085
        %3087 = vdwg.mxu0
        %3088 = vmatprep.subr.mxu0 0.0
        %3089 = vmatpush1.msra.mxu0 %v2981
        %3090 = vmatprep.subr.mxu0 0.0
        %3091 = vmatpush1.msra.mxu0 0.0
        %3092 = vmatprep.subr.mxu0 0.0
        %3093 = vmatpush1.msra.mxu0 0.0
        %3094 = vmatprep.subr.mxu0 0.0
        %3095 = vmatpush1.msra.mxu0 0.0
        %3096 = vmatprep.subr.mxu0 0.0
        %3097 = vmatpush1.msra.mxu0 0.0
        %3098 = vmatprep.subr.mxu0 0.0
        %3099 = vmatpush1.msra.mxu0 0.0
        %3100 = vmatprep.subr.mxu0 0.0
        %3101 = vmatpush1.msra.mxu0 0.0
        %3102 = vmatprep.subr.mxu0 0.0
        %3103 = vmatpush1.msra.mxu0 0.0
        %3104 = vmatprep.subr.mxu0 0.0
        %3105 = vmatpush1.msra.mxu0 0.0
        %3106 = vmatprep.subr.mxu0 0.0
        %3107 = vmatpush1.msra.mxu0 0.0
        %3108 = vmatprep.subr.mxu0 0.0
        %3109 = vmatpush1.msra.mxu0 0.0
        %3110 = vmatprep.subr.mxu0 0.0
        %3111 = vmatpush1.msra.mxu0 0.0
        %3112 = vmatprep.subr.mxu0 0.0
        %3113 = vmatpush1.msra.mxu0 0.0
        %3114 = vmatprep.subr.mxu0 0.0
        %3115 = vmatpush1.msra.mxu0 0.0
        %3116 = vmatprep.subr.mxu0 0.0
        %3117 = vmatpush1.msra.mxu0 0.0
        %3118 = vmatprep.subr.mxu0 0.0
        %3119 = vmatpush1.msra.mxu0 0.0
        %3120 = vmatprep.subr.mxu0 0.0
        %3121 = vmatpush1.msra.mxu0 0.0
        %3122 = vmatprep.subr.mxu0 0.0
        %3123 = vmatpush1.msra.mxu0 0.0
        %3124 = vmatprep.subr.mxu0 0.0
        %3125 = vmatpush1.msra.mxu0 0.0
        %3126 = vmatprep.subr.mxu0 0.0
        %3127 = vmatpush1.msra.mxu0 0.0
        %3128 = vmatprep.subr.mxu0 0.0
        %3129 = vmatpush1.msra.mxu0 0.0
        %3130 = vmatprep.subr.mxu0 0.0
        %3131 = vmatpush1.msra.mxu0 0.0
        %3132 = vmatprep.subr.mxu0 0.0
        %3133 = vmatpush1.msra.mxu0 0.0
        %3134 = vmatprep.subr.mxu0 0.0
        %3135 = vmatpush1.msra.mxu0 0.0
        %3136 = vmatprep.subr.mxu0 0.0
        %3137 = vmatpush1.msra.mxu0 0.0
        %3138 = vmatprep.subr.mxu0 0.0
        %3139 = vmatpush1.msra.mxu0 0.0
        %3140 = vmatprep.subr.mxu0 0.0
        %3141 = vmatpush1.msra.mxu0 0.0
        %3142 = vmatprep.subr.mxu0 0.0
        %3143 = vmatpush1.msra.mxu0 0.0
        %3144 = vmatprep.subr.mxu0 0.0
        %3145 = vmatpush1.msra.mxu0 0.0
        %3146 = vmatprep.subr.mxu0 0.0
        %3147 = vmatpush1.msra.mxu0 0.0
        %3148 = vmatprep.subr.mxu0 0.0
        %3149 = vmatpush1.msra.mxu0 0.0
        %3150 = vmatprep.subr.mxu0 0.0
        %3151 = vmatpush1.msra.mxu0 0.0
        %3152 = vmatprep.mubr.f32.mxu0 0.0
        %3153 = vmatmul.mubr.f32.gmra.mrb[0].mxu0 %v2988
        %v3154 = vpop.f32.mrb[0].mxu0
        %v3155 = vadd.f32 %v2958, %v3154
        %v3156 = vpop.f32.mrb[0].mxu0
        %3157 = vmatprep.mubr.f32.mxu0 0.0
        %3158 = vmatmul.mubr.f32.gmra.mrb[0].mxu0 %v2991
        %v3159 = vpop.f32.mrb[0].mxu0
        %v3160 = vadd.f32 %v2963, %v3159
        %v3161 = vpop.f32.mrb[0].mxu0
        %3162 = vmatprep.mubr.f32.mxu0 0.0
        %3163 = vmatmul.mubr.f32.gmra.mrb[0].mxu0 %v2994
        %v3164 = vpop.f32.mrb[0].mxu0
        %v3165 = vadd.f32 %v2968, %v3164
        %v3166 = vpop.f32.mrb[0].mxu0
        %3167 = vmatprep.mubr.f32.mxu0 0.0
        %3168 = vmatmul.mubr.f32.gmra.mrb[0].mxu0 %v2997
        %v3169 = vpop.f32.mrb[0].mxu0
        %v3170 = vadd.f32 %v2973, %v3169
        %v3171 = vpop.f32.mrb[0].mxu0
        %3172 = vdwg.mxu0
        %v3173 = vadd.f32 %v2756, %v3066
        %v3174 = vadd.f32 %v2757, %v3068
        %v3175 = vadd.f32 %v2758, %v3155
        %v3176 = vadd.f32 %v2759, %v3072
        %v3177 = vadd.f32 %v2760, %v3074
        %v3178 = vadd.f32 %v2761, %v3160
        %v3179 = vadd.f32 %v2762, %v3078
        %v3180 = vadd.f32 %v2763, %v3080
        %v3181 = vadd.f32 %v2764, %v3165
        %v3182 = vadd.f32 %v2765, %v3084
        %v3183 = vadd.f32 %v2766, %v3086
        %v3184 = vadd.f32 %v2767, %v3170
        %s3185 = scalar_lea.vmem %s2, 224
        %v3186 = vld [vmem:[%s3185] sm:$0xff]
        %v3187 = vld [vmem:[%s3185 + $0x8] sm:$0xff]
        %v3188 = vld [vmem:[%s3185 + $0x10] sm:$0xff]
        %v3189 = vld [vmem:[%s3185 + $0x18] sm:$0xff]
        %s3190 = scalar_lea.vmem %s3, 224
        %v3191 = vld [vmem:[%s3190] sm:$0xff]
        %v3192 = vld [vmem:[%s3190 + $0x8] sm:$0xff]
        %v3193 = vld [vmem:[%s3190 + $0x10] sm:$0xff]
        %v3194 = vld [vmem:[%s3190 + $0x18] sm:$0xff]
        %3195 = vrot.lane.b32.xlu0 %v293, 91
        %v3196 = vpop.permute.xlu0 %3195
        %3197 = vrot.lane.b32.xlu0 %v294, 91
        %v3198 = vpop.permute.xlu0 %3197
        %3199 = vrot.lane.b32.xlu0 %v295, 91
        %v3200 = vpop.permute.xlu0 %3199
        %vm3201 = vcmask 744448
        %v3202 = vsel %vm3201, %v3196, %v3198
        %v3203 = vsel %vm3201, %v3198, %v3200
        %v3208 = vsel %vm304, %v3191, 0
        %v3211 = vsel %vm304, %v3192, 0
        %v3214 = vsel %vm304, %v3193, 0
        %v3217 = vsel %vm304, %v3194, 0
        %3219 = vmatprep.subr.mxu0 %v3203
        %3220 = vmatpush1.msra.mxu0 %v3202
        %3221 = vmatprep.subr.mxu0 0.0
        %3222 = vmatpush1.msra.mxu0 0.0
        %3223 = vmatprep.subr.mxu0 0.0
        %3224 = vmatpush1.msra.mxu0 0.0
        %3225 = vmatprep.subr.mxu0 0.0
        %3226 = vmatpush1.msra.mxu0 0.0
        %3227 = vmatprep.subr.mxu0 0.0
        %3228 = vmatpush1.msra.mxu0 0.0
        %3229 = vmatprep.subr.mxu0 0.0
        %3230 = vmatpush1.msra.mxu0 0.0
        %3231 = vmatprep.subr.mxu0 0.0
        %3232 = vmatpush1.msra.mxu0 0.0
        %3233 = vmatprep.subr.mxu0 0.0
        %3234 = vmatpush1.msra.mxu0 0.0
        %3235 = vmatprep.subr.mxu0 0.0
        %3236 = vmatpush1.msra.mxu0 0.0
        %3237 = vmatprep.subr.mxu0 0.0
        %3238 = vmatpush1.msra.mxu0 0.0
        %3239 = vmatprep.subr.mxu0 0.0
        %3240 = vmatpush1.msra.mxu0 0.0
        %3241 = vmatprep.subr.mxu0 0.0
        %3242 = vmatpush1.msra.mxu0 0.0
        %3243 = vmatprep.subr.mxu0 0.0
        %3244 = vmatpush1.msra.mxu0 0.0
        %3245 = vmatprep.subr.mxu0 0.0
        %3246 = vmatpush1.msra.mxu0 0.0
        %3247 = vmatprep.subr.mxu0 0.0
        %3248 = vmatpush1.msra.mxu0 0.0
        %3249 = vmatprep.subr.mxu0 0.0
        %3250 = vmatpush1.msra.mxu0 0.0
        %3251 = vmatprep.subr.mxu0 0.0
        %3252 = vmatpush1.msra.mxu0 0.0
        %3253 = vmatprep.subr.mxu0 0.0
        %3254 = vmatpush1.msra.mxu0 0.0
        %3255 = vmatprep.subr.mxu0 0.0
        %3256 = vmatpush1.msra.mxu0 0.0
        %3257 = vmatprep.subr.mxu0 0.0
        %3258 = vmatpush1.msra.mxu0 0.0
        %3259 = vmatprep.subr.mxu0 0.0
        %3260 = vmatpush1.msra.mxu0 0.0
        %3261 = vmatprep.subr.mxu0 0.0
        %3262 = vmatpush1.msra.mxu0 0.0
        %3263 = vmatprep.subr.mxu0 0.0
        %3264 = vmatpush1.msra.mxu0 0.0
        %3265 = vmatprep.subr.mxu0 0.0
        %3266 = vmatpush1.msra.mxu0 0.0
        %3267 = vmatprep.subr.mxu0 0.0
        %3268 = vmatpush1.msra.mxu0 0.0
        %3269 = vmatprep.subr.mxu0 0.0
        %3270 = vmatpush1.msra.mxu0 0.0
        %3271 = vmatprep.subr.mxu0 0.0
        %3272 = vmatpush1.msra.mxu0 0.0
        %3273 = vmatprep.subr.mxu0 0.0
        %3274 = vmatpush1.msra.mxu0 0.0
        %3275 = vmatprep.subr.mxu0 0.0
        %3276 = vmatpush1.msra.mxu0 0.0
        %3277 = vmatprep.subr.mxu0 0.0
        %3278 = vmatpush1.msra.mxu0 0.0
        %3279 = vmatprep.subr.mxu0 0.0
        %3280 = vmatpush1.msra.mxu0 0.0
        %3281 = vmatprep.subr.mxu0 0.0
        %3282 = vmatpush1.msra.mxu0 0.0
        %3283 = vmatprep.mubr.f32.mxu0 0.0
        %3284 = vmatmul.mubr.f32.gmra.mrb[0].mxu0 %v3208
        %v3285 = vpop.f32.mrb[0].mxu0
        %v3286 = vadd.f32 0.0, %v3285
        %v3287 = vpop.f32.mrb[0].mxu0
        %v3288 = vadd.f32 0.0, %v3287
        %3289 = vmatprep.mubr.f32.mxu0 0.0
        %3290 = vmatmul.mubr.f32.gmra.mrb[0].mxu0 %v3211
        %v3291 = vpop.f32.mrb[0].mxu0
        %v3292 = vadd.f32 0.0, %v3291
        %v3293 = vpop.f32.mrb[0].mxu0
        %v3294 = vadd.f32 0.0, %v3293
        %3295 = vmatprep.mubr.f32.mxu0 0.0
        %3296 = vmatmul.mubr.f32.gmra.mrb[0].mxu0 %v3214
        %v3297 = vpop.f32.mrb[0].mxu0
        %v3298 = vadd.f32 0.0, %v3297
        %v3299 = vpop.f32.mrb[0].mxu0
        %v3300 = vadd.f32 0.0, %v3299
        %3301 = vmatprep.mubr.f32.mxu0 0.0
        %3302 = vmatmul.mubr.f32.gmra.mrb[0].mxu0 %v3217
        %v3303 = vpop.f32.mrb[0].mxu0
        %v3304 = vadd.f32 0.0, %v3303
        %v3305 = vpop.f32.mrb[0].mxu0
        %v3306 = vadd.f32 0.0, %v3305
        %3307 = vdwg.mxu0
        %3308 = vmatprep.subr.mxu0 0.0
        %3309 = vmatpush1.msra.mxu0 %v3200
        %3310 = vmatprep.subr.mxu0 0.0
        %3311 = vmatpush1.msra.mxu0 0.0
        %3312 = vmatprep.subr.mxu0 0.0
        %3313 = vmatpush1.msra.mxu0 0.0
        %3314 = vmatprep.subr.mxu0 0.0
        %3315 = vmatpush1.msra.mxu0 0.0
        %3316 = vmatprep.subr.mxu0 0.0
        %3317 = vmatpush1.msra.mxu0 0.0
        %3318 = vmatprep.subr.mxu0 0.0
        %3319 = vmatpush1.msra.mxu0 0.0
        %3320 = vmatprep.subr.mxu0 0.0
        %3321 = vmatpush1.msra.mxu0 0.0
        %3322 = vmatprep.subr.mxu0 0.0
        %3323 = vmatpush1.msra.mxu0 0.0
        %3324 = vmatprep.subr.mxu0 0.0
        %3325 = vmatpush1.msra.mxu0 0.0
        %3326 = vmatprep.subr.mxu0 0.0
        %3327 = vmatpush1.msra.mxu0 0.0
        %3328 = vmatprep.subr.mxu0 0.0
        %3329 = vmatpush1.msra.mxu0 0.0
        %3330 = vmatprep.subr.mxu0 0.0
        %3331 = vmatpush1.msra.mxu0 0.0
        %3332 = vmatprep.subr.mxu0 0.0
        %3333 = vmatpush1.msra.mxu0 0.0
        %3334 = vmatprep.subr.mxu0 0.0
        %3335 = vmatpush1.msra.mxu0 0.0
        %3336 = vmatprep.subr.mxu0 0.0
        %3337 = vmatpush1.msra.mxu0 0.0
        %3338 = vmatprep.subr.mxu0 0.0
        %3339 = vmatpush1.msra.mxu0 0.0
        %3340 = vmatprep.subr.mxu0 0.0
        %3341 = vmatpush1.msra.mxu0 0.0
        %3342 = vmatprep.subr.mxu0 0.0
        %3343 = vmatpush1.msra.mxu0 0.0
        %3344 = vmatprep.subr.mxu0 0.0
        %3345 = vmatpush1.msra.mxu0 0.0
        %3346 = vmatprep.subr.mxu0 0.0
        %3347 = vmatpush1.msra.mxu0 0.0
        %3348 = vmatprep.subr.mxu0 0.0
        %3349 = vmatpush1.msra.mxu0 0.0
        %3350 = vmatprep.subr.mxu0 0.0
        %3351 = vmatpush1.msra.mxu0 0.0
        %3352 = vmatprep.subr.mxu0 0.0
        %3353 = vmatpush1.msra.mxu0 0.0
        %3354 = vmatprep.subr.mxu0 0.0
        %3355 = vmatpush1.msra.mxu0 0.0
        %3356 = vmatprep.subr.mxu0 0.0
        %3357 = vmatpush1.msra.mxu0 0.0
        %3358 = vmatprep.subr.mxu0 0.0
        %3359 = vmatpush1.msra.mxu0 0.0
        %3360 = vmatprep.subr.mxu0 0.0
        %3361 = vmatpush1.msra.mxu0 0.0
        %3362 = vmatprep.subr.mxu0 0.0
        %3363 = vmatpush1.msra.mxu0 0.0
        %3364 = vmatprep.subr.mxu0 0.0
        %3365 = vmatpush1.msra.mxu0 0.0
        %3366 = vmatprep.subr.mxu0 0.0
        %3367 = vmatpush1.msra.mxu0 0.0
        %3368 = vmatprep.subr.mxu0 0.0
        %3369 = vmatpush1.msra.mxu0 0.0
        %3370 = vmatprep.subr.mxu0 0.0
        %3371 = vmatpush1.msra.mxu0 0.0
        %3372 = vmatprep.mubr.f32.mxu0 0.0
        %3373 = vmatmul.mubr.f32.gmra.mrb[0].mxu0 %v3208
        %v3374 = vpop.f32.mrb[0].mxu0
        %v3375 = vadd.f32 0.0, %v3374
        %v3376 = vpop.f32.mrb[0].mxu0
        %3377 = vmatprep.mubr.f32.mxu0 0.0
        %3378 = vmatmul.mubr.f32.gmra.mrb[0].mxu0 %v3211
        %v3379 = vpop.f32.mrb[0].mxu0
        %v3380 = vadd.f32 0.0, %v3379
        %v3381 = vpop.f32.mrb[0].mxu0
        %3382 = vmatprep.mubr.f32.mxu0 0.0
        %3383 = vmatmul.mubr.f32.gmra.mrb[0].mxu0 %v3214
        %v3384 = vpop.f32.mrb[0].mxu0
        %v3385 = vadd.f32 0.0, %v3384
        %v3386 = vpop.f32.mrb[0].mxu0
        %3387 = vmatprep.mubr.f32.mxu0 0.0
        %3388 = vmatmul.mubr.f32.gmra.mrb[0].mxu0 %v3217
        %v3389 = vpop.f32.mrb[0].mxu0
        %v3390 = vadd.f32 0.0, %v3389
        %v3391 = vpop.f32.mrb[0].mxu0
        %3392 = vdwg.mxu0
        %3393 = vrot.lane.b32.xlu0 %v290, 91
        %v3394 = vpop.permute.xlu0 %3393
        %3395 = vrot.lane.b32.xlu0 %v291, 91
        %v3396 = vpop.permute.xlu0 %3395
        %3397 = vrot.lane.b32.xlu0 %v292, 91
        %v3398 = vpop.permute.xlu0 %3397
        %v3399 = vsel %vm3201, %v3394, %v3396
        %v3400 = vsel %vm3201, %v3396, %v3398
        %v3405 = vsel %vm304, %v3186, 0
        %v3408 = vsel %vm304, %v3187, 0
        %v3411 = vsel %vm304, %v3188, 0
        %v3414 = vsel %vm304, %v3189, 0
        %3416 = vmatprep.subr.mxu0 %v3400
        %3417 = vmatpush1.msra.mxu0 %v3399
        %3418 = vmatprep.subr.mxu0 0.0
        %3419 = vmatpush1.msra.mxu0 0.0
        %3420 = vmatprep.subr.mxu0 0.0
        %3421 = vmatpush1.msra.mxu0 0.0
        %3422 = vmatprep.subr.mxu0 0.0
        %3423 = vmatpush1.msra.mxu0 0.0
        %3424 = vmatprep.subr.mxu0 0.0
        %3425 = vmatpush1.msra.mxu0 0.0
        %3426 = vmatprep.subr.mxu0 0.0
        %3427 = vmatpush1.msra.mxu0 0.0
        %3428 = vmatprep.subr.mxu0 0.0
        %3429 = vmatpush1.msra.mxu0 0.0
        %3430 = vmatprep.subr.mxu0 0.0
        %3431 = vmatpush1.msra.mxu0 0.0
        %3432 = vmatprep.subr.mxu0 0.0
        %3433 = vmatpush1.msra.mxu0 0.0
        %3434 = vmatprep.subr.mxu0 0.0
        %3435 = vmatpush1.msra.mxu0 0.0
        %3436 = vmatprep.subr.mxu0 0.0
        %3437 = vmatpush1.msra.mxu0 0.0
        %3438 = vmatprep.subr.mxu0 0.0
        %3439 = vmatpush1.msra.mxu0 0.0
        %3440 = vmatprep.subr.mxu0 0.0
        %3441 = vmatpush1.msra.mxu0 0.0
        %3442 = vmatprep.subr.mxu0 0.0
        %3443 = vmatpush1.msra.mxu0 0.0
        %3444 = vmatprep.subr.mxu0 0.0
        %3445 = vmatpush1.msra.mxu0 0.0
        %3446 = vmatprep.subr.mxu0 0.0
        %3447 = vmatpush1.msra.mxu0 0.0
        %3448 = vmatprep.subr.mxu0 0.0
        %3449 = vmatpush1.msra.mxu0 0.0
        %3450 = vmatprep.subr.mxu0 0.0
        %3451 = vmatpush1.msra.mxu0 0.0
        %3452 = vmatprep.subr.mxu0 0.0
        %3453 = vmatpush1.msra.mxu0 0.0
        %3454 = vmatprep.subr.mxu0 0.0
        %3455 = vmatpush1.msra.mxu0 0.0
        %3456 = vmatprep.subr.mxu0 0.0
        %3457 = vmatpush1.msra.mxu0 0.0
        %3458 = vmatprep.subr.mxu0 0.0
        %3459 = vmatpush1.msra.mxu0 0.0
        %3460 = vmatprep.subr.mxu0 0.0
        %3461 = vmatpush1.msra.mxu0 0.0
        %3462 = vmatprep.subr.mxu0 0.0
        %3463 = vmatpush1.msra.mxu0 0.0
        %3464 = vmatprep.subr.mxu0 0.0
        %3465 = vmatpush1.msra.mxu0 0.0
        %3466 = vmatprep.subr.mxu0 0.0
        %3467 = vmatpush1.msra.mxu0 0.0
        %3468 = vmatprep.subr.mxu0 0.0
        %3469 = vmatpush1.msra.mxu0 0.0
        %3470 = vmatprep.subr.mxu0 0.0
        %3471 = vmatpush1.msra.mxu0 0.0
        %3472 = vmatprep.subr.mxu0 0.0
        %3473 = vmatpush1.msra.mxu0 0.0
        %3474 = vmatprep.subr.mxu0 0.0
        %3475 = vmatpush1.msra.mxu0 0.0
        %3476 = vmatprep.subr.mxu0 0.0
        %3477 = vmatpush1.msra.mxu0 0.0
        %3478 = vmatprep.subr.mxu0 0.0
        %3479 = vmatpush1.msra.mxu0 0.0
        %3480 = vmatprep.mubr.f32.mxu0 0.0
        %3481 = vmatmul.mubr.f32.gmra.mrb[0].mxu0 %v3405
        %v3482 = vpop.f32.mrb[0].mxu0
        %v3483 = vadd.f32 %v3286, %v3482
        %v3484 = vpop.f32.mrb[0].mxu0
        %v3485 = vadd.f32 %v3288, %v3484
        %3486 = vmatprep.mubr.f32.mxu0 0.0
        %3487 = vmatmul.mubr.f32.gmra.mrb[0].mxu0 %v3408
        %v3488 = vpop.f32.mrb[0].mxu0
        %v3489 = vadd.f32 %v3292, %v3488
        %v3490 = vpop.f32.mrb[0].mxu0
        %v3491 = vadd.f32 %v3294, %v3490
        %3492 = vmatprep.mubr.f32.mxu0 0.0
        %3493 = vmatmul.mubr.f32.gmra.mrb[0].mxu0 %v3411
        %v3494 = vpop.f32.mrb[0].mxu0
        %v3495 = vadd.f32 %v3298, %v3494
        %v3496 = vpop.f32.mrb[0].mxu0
        %v3497 = vadd.f32 %v3300, %v3496
        %3498 = vmatprep.mubr.f32.mxu0 0.0
        %3499 = vmatmul.mubr.f32.gmra.mrb[0].mxu0 %v3414
        %v3500 = vpop.f32.mrb[0].mxu0
        %v3501 = vadd.f32 %v3304, %v3500
        %v3502 = vpop.f32.mrb[0].mxu0
        %v3503 = vadd.f32 %v3306, %v3502
        %3504 = vdwg.mxu0
        %3505 = vmatprep.subr.mxu0 0.0
        %3506 = vmatpush1.msra.mxu0 %v3398
        %3507 = vmatprep.subr.mxu0 0.0
        %3508 = vmatpush1.msra.mxu0 0.0
        %3509 = vmatprep.subr.mxu0 0.0
        %3510 = vmatpush1.msra.mxu0 0.0
        %3511 = vmatprep.subr.mxu0 0.0
        %3512 = vmatpush1.msra.mxu0 0.0
        %3513 = vmatprep.subr.mxu0 0.0
        %3514 = vmatpush1.msra.mxu0 0.0
        %3515 = vmatprep.subr.mxu0 0.0
        %3516 = vmatpush1.msra.mxu0 0.0
        %3517 = vmatprep.subr.mxu0 0.0
        %3518 = vmatpush1.msra.mxu0 0.0
        %3519 = vmatprep.subr.mxu0 0.0
        %3520 = vmatpush1.msra.mxu0 0.0
        %3521 = vmatprep.subr.mxu0 0.0
        %3522 = vmatpush1.msra.mxu0 0.0
        %3523 = vmatprep.subr.mxu0 0.0
        %3524 = vmatpush1.msra.mxu0 0.0
        %3525 = vmatprep.subr.mxu0 0.0
        %3526 = vmatpush1.msra.mxu0 0.0
        %3527 = vmatprep.subr.mxu0 0.0
        %3528 = vmatpush1.msra.mxu0 0.0
        %3529 = vmatprep.subr.mxu0 0.0
        %3530 = vmatpush1.msra.mxu0 0.0
        %3531 = vmatprep.subr.mxu0 0.0
        %3532 = vmatpush1.msra.mxu0 0.0
        %3533 = vmatprep.subr.mxu0 0.0
        %3534 = vmatpush1.msra.mxu0 0.0
        %3535 = vmatprep.subr.mxu0 0.0
        %3536 = vmatpush1.msra.mxu0 0.0
        %3537 = vmatprep.subr.mxu0 0.0
        %3538 = vmatpush1.msra.mxu0 0.0
        %3539 = vmatprep.subr.mxu0 0.0
        %3540 = vmatpush1.msra.mxu0 0.0
        %3541 = vmatprep.subr.mxu0 0.0
        %3542 = vmatpush1.msra.mxu0 0.0
        %3543 = vmatprep.subr.mxu0 0.0
        %3544 = vmatpush1.msra.mxu0 0.0
        %3545 = vmatprep.subr.mxu0 0.0
        %3546 = vmatpush1.msra.mxu0 0.0
        %3547 = vmatprep.subr.mxu0 0.0
        %3548 = vmatpush1.msra.mxu0 0.0
        %3549 = vmatprep.subr.mxu0 0.0
        %3550 = vmatpush1.msra.mxu0 0.0
        %3551 = vmatprep.subr.mxu0 0.0
        %3552 = vmatpush1.msra.mxu0 0.0
        %3553 = vmatprep.subr.mxu0 0.0
        %3554 = vmatpush1.msra.mxu0 0.0
        %3555 = vmatprep.subr.mxu0 0.0
        %3556 = vmatpush1.msra.mxu0 0.0
        %3557 = vmatprep.subr.mxu0 0.0
        %3558 = vmatpush1.msra.mxu0 0.0
        %3559 = vmatprep.subr.mxu0 0.0
        %3560 = vmatpush1.msra.mxu0 0.0
        %3561 = vmatprep.subr.mxu0 0.0
        %3562 = vmatpush1.msra.mxu0 0.0
        %3563 = vmatprep.subr.mxu0 0.0
        %3564 = vmatpush1.msra.mxu0 0.0
        %3565 = vmatprep.subr.mxu0 0.0
        %3566 = vmatpush1.msra.mxu0 0.0
        %3567 = vmatprep.subr.mxu0 0.0
        %3568 = vmatpush1.msra.mxu0 0.0
        %3569 = vmatprep.mubr.f32.mxu0 0.0
        %3570 = vmatmul.mubr.f32.gmra.mrb[0].mxu0 %v3405
        %v3571 = vpop.f32.mrb[0].mxu0
        %v3572 = vadd.f32 %v3375, %v3571
        %v3573 = vpop.f32.mrb[0].mxu0
        %3574 = vmatprep.mubr.f32.mxu0 0.0
        %3575 = vmatmul.mubr.f32.gmra.mrb[0].mxu0 %v3408
        %v3576 = vpop.f32.mrb[0].mxu0
        %v3577 = vadd.f32 %v3380, %v3576
        %v3578 = vpop.f32.mrb[0].mxu0
        %3579 = vmatprep.mubr.f32.mxu0 0.0
        %3580 = vmatmul.mubr.f32.gmra.mrb[0].mxu0 %v3411
        %v3581 = vpop.f32.mrb[0].mxu0
        %v3582 = vadd.f32 %v3385, %v3581
        %v3583 = vpop.f32.mrb[0].mxu0
        %3584 = vmatprep.mubr.f32.mxu0 0.0
        %3585 = vmatmul.mubr.f32.gmra.mrb[0].mxu0 %v3414
        %v3586 = vpop.f32.mrb[0].mxu0
        %v3587 = vadd.f32 %v3390, %v3586
        %v3588 = vpop.f32.mrb[0].mxu0
        %3589 = vdwg.mxu0
        %v3590 = vadd.f32 %v3173, %v3483
        %v3591 = vadd.f32 %v3174, %v3485
        %v3592 = vadd.f32 %v3175, %v3572
        %v3593 = vadd.f32 %v3176, %v3489
        %v3594 = vadd.f32 %v3177, %v3491
        %v3595 = vadd.f32 %v3178, %v3577
        %v3596 = vadd.f32 %v3179, %v3495
        %v3597 = vadd.f32 %v3180, %v3497
        %v3598 = vadd.f32 %v3181, %v3582
        %v3599 = vadd.f32 %v3182, %v3501
        %v3600 = vadd.f32 %v3183, %v3503
        %v3601 = vadd.f32 %v3184, %v3587
        %s3602 = scalar_lea.vmem %s2, 256
        %v3603 = vld [vmem:[%s3602] sm:$0xff]
        %v3604 = vld [vmem:[%s3602 + $0x8] sm:$0xff]
        %v3605 = vld [vmem:[%s3602 + $0x10] sm:$0xff]
        %v3606 = vld [vmem:[%s3602 + $0x18] sm:$0xff]
        %s3607 = scalar_lea.vmem %s3, 256
        %v3608 = vld [vmem:[%s3607] sm:$0xff]
        %v3609 = vld [vmem:[%s3607 + $0x8] sm:$0xff]
        %v3610 = vld [vmem:[%s3607 + $0x10] sm:$0xff]
        %v3611 = vld [vmem:[%s3607 + $0x18] sm:$0xff]
        %3612 = vrot.lane.b32.xlu0 %v293, 90
        %v3613 = vpop.permute.xlu0 %3612
        %3614 = vrot.lane.b32.xlu0 %v294, 90
        %v3615 = vpop.permute.xlu0 %3614
        %3616 = vrot.lane.b32.xlu0 %v295, 90
        %v3617 = vpop.permute.xlu0 %3616
        %vm3618 = vcmask 736256
        %v3619 = vsel %vm3618, %v3613, %v3615
        %v3620 = vsel %vm3618, %v3615, %v3617
        %v3625 = vsel %vm304, %v3608, 0
        %v3628 = vsel %vm304, %v3609, 0
        %v3631 = vsel %vm304, %v3610, 0
        %v3634 = vsel %vm304, %v3611, 0
        %3636 = vmatprep.subr.mxu0 %v3620
        %3637 = vmatpush1.msra.mxu0 %v3619
        %3638 = vmatprep.subr.mxu0 0.0
        %3639 = vmatpush1.msra.mxu0 0.0
        %3640 = vmatprep.subr.mxu0 0.0
        %3641 = vmatpush1.msra.mxu0 0.0
        %3642 = vmatprep.subr.mxu0 0.0
        %3643 = vmatpush1.msra.mxu0 0.0
        %3644 = vmatprep.subr.mxu0 0.0
        %3645 = vmatpush1.msra.mxu0 0.0
        %3646 = vmatprep.subr.mxu0 0.0
        %3647 = vmatpush1.msra.mxu0 0.0
        %3648 = vmatprep.subr.mxu0 0.0
        %3649 = vmatpush1.msra.mxu0 0.0
        %3650 = vmatprep.subr.mxu0 0.0
        %3651 = vmatpush1.msra.mxu0 0.0
        %3652 = vmatprep.subr.mxu0 0.0
        %3653 = vmatpush1.msra.mxu0 0.0
        %3654 = vmatprep.subr.mxu0 0.0
        %3655 = vmatpush1.msra.mxu0 0.0
        %3656 = vmatprep.subr.mxu0 0.0
        %3657 = vmatpush1.msra.mxu0 0.0
        %3658 = vmatprep.subr.mxu0 0.0
        %3659 = vmatpush1.msra.mxu0 0.0
        %3660 = vmatprep.subr.mxu0 0.0
        %3661 = vmatpush1.msra.mxu0 0.0
        %3662 = vmatprep.subr.mxu0 0.0
        %3663 = vmatpush1.msra.mxu0 0.0
        %3664 = vmatprep.subr.mxu0 0.0
        %3665 = vmatpush1.msra.mxu0 0.0
        %3666 = vmatprep.subr.mxu0 0.0
        %3667 = vmatpush1.msra.mxu0 0.0
        %3668 = vmatprep.subr.mxu0 0.0
        %3669 = vmatpush1.msra.mxu0 0.0
        %3670 = vmatprep.subr.mxu0 0.0
        %3671 = vmatpush1.msra.mxu0 0.0
        %3672 = vmatprep.subr.mxu0 0.0
        %3673 = vmatpush1.msra.mxu0 0.0
        %3674 = vmatprep.subr.mxu0 0.0
        %3675 = vmatpush1.msra.mxu0 0.0
        %3676 = vmatprep.subr.mxu0 0.0
        %3677 = vmatpush1.msra.mxu0 0.0
        %3678 = vmatprep.subr.mxu0 0.0
        %3679 = vmatpush1.msra.mxu0 0.0
        %3680 = vmatprep.subr.mxu0 0.0
        %3681 = vmatpush1.msra.mxu0 0.0
        %3682 = vmatprep.subr.mxu0 0.0
        %3683 = vmatpush1.msra.mxu0 0.0
        %3684 = vmatprep.subr.mxu0 0.0
        %3685 = vmatpush1.msra.mxu0 0.0
        %3686 = vmatprep.subr.mxu0 0.0
        %3687 = vmatpush1.msra.mxu0 0.0
        %3688 = vmatprep.subr.mxu0 0.0
        %3689 = vmatpush1.msra.mxu0 0.0
        %3690 = vmatprep.subr.mxu0 0.0
        %3691 = vmatpush1.msra.mxu0 0.0
        %3692 = vmatprep.subr.mxu0 0.0
        %3693 = vmatpush1.msra.mxu0 0.0
        %3694 = vmatprep.subr.mxu0 0.0
        %3695 = vmatpush1.msra.mxu0 0.0
        %3696 = vmatprep.subr.mxu0 0.0
        %3697 = vmatpush1.msra.mxu0 0.0
        %3698 = vmatprep.subr.mxu0 0.0
        %3699 = vmatpush1.msra.mxu0 0.0
        %3700 = vmatprep.mubr.f32.mxu0 0.0
        %3701 = vmatmul.mubr.f32.gmra.mrb[0].mxu0 %v3625
        %v3702 = vpop.f32.mrb[0].mxu0
        %v3703 = vadd.f32 0.0, %v3702
        %v3704 = vpop.f32.mrb[0].mxu0
        %v3705 = vadd.f32 0.0, %v3704
        %3706 = vmatprep.mubr.f32.mxu0 0.0
        %3707 = vmatmul.mubr.f32.gmra.mrb[0].mxu0 %v3628
        %v3708 = vpop.f32.mrb[0].mxu0
        %v3709 = vadd.f32 0.0, %v3708
        %v3710 = vpop.f32.mrb[0].mxu0
        %v3711 = vadd.f32 0.0, %v3710
        %3712 = vmatprep.mubr.f32.mxu0 0.0
        %3713 = vmatmul.mubr.f32.gmra.mrb[0].mxu0 %v3631
        %v3714 = vpop.f32.mrb[0].mxu0
        %v3715 = vadd.f32 0.0, %v3714
        %v3716 = vpop.f32.mrb[0].mxu0
        %v3717 = vadd.f32 0.0, %v3716
        %3718 = vmatprep.mubr.f32.mxu0 0.0
        %3719 = vmatmul.mubr.f32.gmra.mrb[0].mxu0 %v3634
        %v3720 = vpop.f32.mrb[0].mxu0
        %v3721 = vadd.f32 0.0, %v3720
        %v3722 = vpop.f32.mrb[0].mxu0
        %v3723 = vadd.f32 0.0, %v3722
        %3724 = vdwg.mxu0
        %3725 = vmatprep.subr.mxu0 0.0
        %3726 = vmatpush1.msra.mxu0 %v3617
        %3727 = vmatprep.subr.mxu0 0.0
        %3728 = vmatpush1.msra.mxu0 0.0
        %3729 = vmatprep.subr.mxu0 0.0
        %3730 = vmatpush1.msra.mxu0 0.0
        %3731 = vmatprep.subr.mxu0 0.0
        %3732 = vmatpush1.msra.mxu0 0.0
        %3733 = vmatprep.subr.mxu0 0.0
        %3734 = vmatpush1.msra.mxu0 0.0
        %3735 = vmatprep.subr.mxu0 0.0
        %3736 = vmatpush1.msra.mxu0 0.0
        %3737 = vmatprep.subr.mxu0 0.0
        %3738 = vmatpush1.msra.mxu0 0.0
        %3739 = vmatprep.subr.mxu0 0.0
        %3740 = vmatpush1.msra.mxu0 0.0
        %3741 = vmatprep.subr.mxu0 0.0
        %3742 = vmatpush1.msra.mxu0 0.0
        %3743 = vmatprep.subr.mxu0 0.0
        %3744 = vmatpush1.msra.mxu0 0.0
        %3745 = vmatprep.subr.mxu0 0.0
        %3746 = vmatpush1.msra.mxu0 0.0
        %3747 = vmatprep.subr.mxu0 0.0
        %3748 = vmatpush1.msra.mxu0 0.0
        %3749 = vmatprep.subr.mxu0 0.0
        %3750 = vmatpush1.msra.mxu0 0.0
        %3751 = vmatprep.subr.mxu0 0.0
        %3752 = vmatpush1.msra.mxu0 0.0
        %3753 = vmatprep.subr.mxu0 0.0
        %3754 = vmatpush1.msra.mxu0 0.0
        %3755 = vmatprep.subr.mxu0 0.0
        %3756 = vmatpush1.msra.mxu0 0.0
        %3757 = vmatprep.subr.mxu0 0.0
        %3758 = vmatpush1.msra.mxu0 0.0
        %3759 = vmatprep.subr.mxu0 0.0
        %3760 = vmatpush1.msra.mxu0 0.0
        %3761 = vmatprep.subr.mxu0 0.0
        %3762 = vmatpush1.msra.mxu0 0.0
        %3763 = vmatprep.subr.mxu0 0.0
        %3764 = vmatpush1.msra.mxu0 0.0
        %3765 = vmatprep.subr.mxu0 0.0
        %3766 = vmatpush1.msra.mxu0 0.0
        %3767 = vmatprep.subr.mxu0 0.0
        %3768 = vmatpush1.msra.mxu0 0.0
        %3769 = vmatprep.subr.mxu0 0.0
        %3770 = vmatpush1.msra.mxu0 0.0
        %3771 = vmatprep.subr.mxu0 0.0
        %3772 = vmatpush1.msra.mxu0 0.0
        %3773 = vmatprep.subr.mxu0 0.0
        %3774 = vmatpush1.msra.mxu0 0.0
        %3775 = vmatprep.subr.mxu0 0.0
        %3776 = vmatpush1.msra.mxu0 0.0
        %3777 = vmatprep.subr.mxu0 0.0
        %3778 = vmatpush1.msra.mxu0 0.0
        %3779 = vmatprep.subr.mxu0 0.0
        %3780 = vmatpush1.msra.mxu0 0.0
        %3781 = vmatprep.subr.mxu0 0.0
        %3782 = vmatpush1.msra.mxu0 0.0
        %3783 = vmatprep.subr.mxu0 0.0
        %3784 = vmatpush1.msra.mxu0 0.0
        %3785 = vmatprep.subr.mxu0 0.0
        %3786 = vmatpush1.msra.mxu0 0.0
        %3787 = vmatprep.subr.mxu0 0.0
        %3788 = vmatpush1.msra.mxu0 0.0
        %3789 = vmatprep.mubr.f32.mxu0 0.0
        %3790 = vmatmul.mubr.f32.gmra.mrb[0].mxu0 %v3625
        %v3791 = vpop.f32.mrb[0].mxu0
        %v3792 = vadd.f32 0.0, %v3791
        %v3793 = vpop.f32.mrb[0].mxu0
        %3794 = vmatprep.mubr.f32.mxu0 0.0
        %3795 = vmatmul.mubr.f32.gmra.mrb[0].mxu0 %v3628
        %v3796 = vpop.f32.mrb[0].mxu0
        %v3797 = vadd.f32 0.0, %v3796
        %v3798 = vpop.f32.mrb[0].mxu0
        %3799 = vmatprep.mubr.f32.mxu0 0.0
        %3800 = vmatmul.mubr.f32.gmra.mrb[0].mxu0 %v3631
        %v3801 = vpop.f32.mrb[0].mxu0
        %v3802 = vadd.f32 0.0, %v3801
        %v3803 = vpop.f32.mrb[0].mxu0
        %3804 = vmatprep.mubr.f32.mxu0 0.0
        %3805 = vmatmul.mubr.f32.gmra.mrb[0].mxu0 %v3634
        %v3806 = vpop.f32.mrb[0].mxu0
        %v3807 = vadd.f32 0.0, %v3806
        %v3808 = vpop.f32.mrb[0].mxu0
        %3809 = vdwg.mxu0
        %3810 = vrot.lane.b32.xlu0 %v290, 90
        %v3811 = vpop.permute.xlu0 %3810
        %3812 = vrot.lane.b32.xlu0 %v291, 90
        %v3813 = vpop.permute.xlu0 %3812
        %3814 = vrot.lane.b32.xlu0 %v292, 90
        %v3815 = vpop.permute.xlu0 %3814
        %v3816 = vsel %vm3618, %v3811, %v3813
        %v3817 = vsel %vm3618, %v3813, %v3815
        %v3822 = vsel %vm304, %v3603, 0
        %v3825 = vsel %vm304, %v3604, 0
        %v3828 = vsel %vm304, %v3605, 0
        %v3831 = vsel %vm304, %v3606, 0
        %3833 = vmatprep.subr.mxu0 %v3817
        %3834 = vmatpush1.msra.mxu0 %v3816
        %3835 = vmatprep.subr.mxu0 0.0
        %3836 = vmatpush1.msra.mxu0 0.0
        %3837 = vmatprep.subr.mxu0 0.0
        %3838 = vmatpush1.msra.mxu0 0.0
        %3839 = vmatprep.subr.mxu0 0.0
        %3840 = vmatpush1.msra.mxu0 0.0
        %3841 = vmatprep.subr.mxu0 0.0
        %3842 = vmatpush1.msra.mxu0 0.0
        %3843 = vmatprep.subr.mxu0 0.0
        %3844 = vmatpush1.msra.mxu0 0.0
        %3845 = vmatprep.subr.mxu0 0.0
        %3846 = vmatpush1.msra.mxu0 0.0
        %3847 = vmatprep.subr.mxu0 0.0
        %3848 = vmatpush1.msra.mxu0 0.0
        %3849 = vmatprep.subr.mxu0 0.0
        %3850 = vmatpush1.msra.mxu0 0.0
        %3851 = vmatprep.subr.mxu0 0.0
        %3852 = vmatpush1.msra.mxu0 0.0
        %3853 = vmatprep.subr.mxu0 0.0
        %3854 = vmatpush1.msra.mxu0 0.0
        %3855 = vmatprep.subr.mxu0 0.0
        %3856 = vmatpush1.msra.mxu0 0.0
        %3857 = vmatprep.subr.mxu0 0.0
        %3858 = vmatpush1.msra.mxu0 0.0
        %3859 = vmatprep.subr.mxu0 0.0
        %3860 = vmatpush1.msra.mxu0 0.0
        %3861 = vmatprep.subr.mxu0 0.0
        %3862 = vmatpush1.msra.mxu0 0.0
        %3863 = vmatprep.subr.mxu0 0.0
        %3864 = vmatpush1.msra.mxu0 0.0
        %3865 = vmatprep.subr.mxu0 0.0
        %3866 = vmatpush1.msra.mxu0 0.0
        %3867 = vmatprep.subr.mxu0 0.0
        %3868 = vmatpush1.msra.mxu0 0.0
        %3869 = vmatprep.subr.mxu0 0.0
        %3870 = vmatpush1.msra.mxu0 0.0
        %3871 = vmatprep.subr.mxu0 0.0
        %3872 = vmatpush1.msra.mxu0 0.0
        %3873 = vmatprep.subr.mxu0 0.0
        %3874 = vmatpush1.msra.mxu0 0.0
        %3875 = vmatprep.subr.mxu0 0.0
        %3876 = vmatpush1.msra.mxu0 0.0
        %3877 = vmatprep.subr.mxu0 0.0
        %3878 = vmatpush1.msra.mxu0 0.0
        %3879 = vmatprep.subr.mxu0 0.0
        %3880 = vmatpush1.msra.mxu0 0.0
        %3881 = vmatprep.subr.mxu0 0.0
        %3882 = vmatpush1.msra.mxu0 0.0
        %3883 = vmatprep.subr.mxu0 0.0
        %3884 = vmatpush1.msra.mxu0 0.0
        %3885 = vmatprep.subr.mxu0 0.0
        %3886 = vmatpush1.msra.mxu0 0.0
        %3887 = vmatprep.subr.mxu0 0.0
        %3888 = vmatpush1.msra.mxu0 0.0
        %3889 = vmatprep.subr.mxu0 0.0
        %3890 = vmatpush1.msra.mxu0 0.0
        %3891 = vmatprep.subr.mxu0 0.0
        %3892 = vmatpush1.msra.mxu0 0.0
        %3893 = vmatprep.subr.mxu0 0.0
        %3894 = vmatpush1.msra.mxu0 0.0
        %3895 = vmatprep.subr.mxu0 0.0
        %3896 = vmatpush1.msra.mxu0 0.0
        %3897 = vmatprep.mubr.f32.mxu0 0.0
        %3898 = vmatmul.mubr.f32.gmra.mrb[0].mxu0 %v3822
        %v3899 = vpop.f32.mrb[0].mxu0
        %v3900 = vadd.f32 %v3703, %v3899
        %v3901 = vpop.f32.mrb[0].mxu0
        %v3902 = vadd.f32 %v3705, %v3901
        %3903 = vmatprep.mubr.f32.mxu0 0.0
        %3904 = vmatmul.mubr.f32.gmra.mrb[0].mxu0 %v3825
        %v3905 = vpop.f32.mrb[0].mxu0
        %v3906 = vadd.f32 %v3709, %v3905
        %v3907 = vpop.f32.mrb[0].mxu0
        %v3908 = vadd.f32 %v3711, %v3907
        %3909 = vmatprep.mubr.f32.mxu0 0.0
        %3910 = vmatmul.mubr.f32.gmra.mrb[0].mxu0 %v3828
        %v3911 = vpop.f32.mrb[0].mxu0
        %v3912 = vadd.f32 %v3715, %v3911
        %v3913 = vpop.f32.mrb[0].mxu0
        %v3914 = vadd.f32 %v3717, %v3913
        %3915 = vmatprep.mubr.f32.mxu0 0.0
        %3916 = vmatmul.mubr.f32.gmra.mrb[0].mxu0 %v3831
        %v3917 = vpop.f32.mrb[0].mxu0
        %v3918 = vadd.f32 %v3721, %v3917
        %v3919 = vpop.f32.mrb[0].mxu0
        %v3920 = vadd.f32 %v3723, %v3919
        %3921 = vdwg.mxu0
        %3922 = vmatprep.subr.mxu0 0.0
        %3923 = vmatpush1.msra.mxu0 %v3815
        %3924 = vmatprep.subr.mxu0 0.0
        %3925 = vmatpush1.msra.mxu0 0.0
        %3926 = vmatprep.subr.mxu0 0.0
        %3927 = vmatpush1.msra.mxu0 0.0
        %3928 = vmatprep.subr.mxu0 0.0
        %3929 = vmatpush1.msra.mxu0 0.0
        %3930 = vmatprep.subr.mxu0 0.0
        %3931 = vmatpush1.msra.mxu0 0.0
        %3932 = vmatprep.subr.mxu0 0.0
        %3933 = vmatpush1.msra.mxu0 0.0
        %3934 = vmatprep.subr.mxu0 0.0
        %3935 = vmatpush1.msra.mxu0 0.0
        %3936 = vmatprep.subr.mxu0 0.0
        %3937 = vmatpush1.msra.mxu0 0.0
        %3938 = vmatprep.subr.mxu0 0.0
        %3939 = vmatpush1.msra.mxu0 0.0
        %3940 = vmatprep.subr.mxu0 0.0
        %3941 = vmatpush1.msra.mxu0 0.0
        %3942 = vmatprep.subr.mxu0 0.0
        %3943 = vmatpush1.msra.mxu0 0.0
        %3944 = vmatprep.subr.mxu0 0.0
        %3945 = vmatpush1.msra.mxu0 0.0
        %3946 = vmatprep.subr.mxu0 0.0
        %3947 = vmatpush1.msra.mxu0 0.0
        %3948 = vmatprep.subr.mxu0 0.0
        %3949 = vmatpush1.msra.mxu0 0.0
        %3950 = vmatprep.subr.mxu0 0.0
        %3951 = vmatpush1.msra.mxu0 0.0
        %3952 = vmatprep.subr.mxu0 0.0
        %3953 = vmatpush1.msra.mxu0 0.0
        %3954 = vmatprep.subr.mxu0 0.0
        %3955 = vmatpush1.msra.mxu0 0.0
        %3956 = vmatprep.subr.mxu0 0.0
        %3957 = vmatpush1.msra.mxu0 0.0
        %3958 = vmatprep.subr.mxu0 0.0
        %3959 = vmatpush1.msra.mxu0 0.0
        %3960 = vmatprep.subr.mxu0 0.0
        %3961 = vmatpush1.msra.mxu0 0.0
        %3962 = vmatprep.subr.mxu0 0.0
        %3963 = vmatpush1.msra.mxu0 0.0
        %3964 = vmatprep.subr.mxu0 0.0
        %3965 = vmatpush1.msra.mxu0 0.0
        %3966 = vmatprep.subr.mxu0 0.0
        %3967 = vmatpush1.msra.mxu0 0.0
        %3968 = vmatprep.subr.mxu0 0.0
        %3969 = vmatpush1.msra.mxu0 0.0
        %3970 = vmatprep.subr.mxu0 0.0
        %3971 = vmatpush1.msra.mxu0 0.0
        %3972 = vmatprep.subr.mxu0 0.0
        %3973 = vmatpush1.msra.mxu0 0.0
        %3974 = vmatprep.subr.mxu0 0.0
        %3975 = vmatpush1.msra.mxu0 0.0
        %3976 = vmatprep.subr.mxu0 0.0
        %3977 = vmatpush1.msra.mxu0 0.0
        %3978 = vmatprep.subr.mxu0 0.0
        %3979 = vmatpush1.msra.mxu0 0.0
        %3980 = vmatprep.subr.mxu0 0.0
        %3981 = vmatpush1.msra.mxu0 0.0
        %3982 = vmatprep.subr.mxu0 0.0
        %3983 = vmatpush1.msra.mxu0 0.0
        %3984 = vmatprep.subr.mxu0 0.0
        %3985 = vmatpush1.msra.mxu0 0.0
        %3986 = vmatprep.mubr.f32.mxu0 0.0
        %3987 = vmatmul.mubr.f32.gmra.mrb[0].mxu0 %v3822
        %v3988 = vpop.f32.mrb[0].mxu0
        %v3989 = vadd.f32 %v3792, %v3988
        %v3990 = vpop.f32.mrb[0].mxu0
        %3991 = vmatprep.mubr.f32.mxu0 0.0
        %3992 = vmatmul.mubr.f32.gmra.mrb[0].mxu0 %v3825
        %v3993 = vpop.f32.mrb[0].mxu0
        %v3994 = vadd.f32 %v3797, %v3993
        %v3995 = vpop.f32.mrb[0].mxu0
        %3996 = vmatprep.mubr.f32.mxu0 0.0
        %3997 = vmatmul.mubr.f32.gmra.mrb[0].mxu0 %v3828
        %v3998 = vpop.f32.mrb[0].mxu0
        %v3999 = vadd.f32 %v3802, %v3998
        %v4000 = vpop.f32.mrb[0].mxu0
        %4001 = vmatprep.mubr.f32.mxu0 0.0
        %4002 = vmatmul.mubr.f32.gmra.mrb[0].mxu0 %v3831
        %v4003 = vpop.f32.mrb[0].mxu0
        %v4004 = vadd.f32 %v3807, %v4003
        %v4005 = vpop.f32.mrb[0].mxu0
        %4006 = vdwg.mxu0
        %v4007 = vadd.f32 %v3590, %v3900
        %v4008 = vadd.f32 %v3591, %v3902
        %v4009 = vadd.f32 %v3592, %v3989
        %v4010 = vadd.f32 %v3593, %v3906
        %v4011 = vadd.f32 %v3594, %v3908
        %v4012 = vadd.f32 %v3595, %v3994
        %v4013 = vadd.f32 %v3596, %v3912
        %v4014 = vadd.f32 %v3597, %v3914
        %v4015 = vadd.f32 %v3598, %v3999
        %v4016 = vadd.f32 %v3599, %v3918
        %v4017 = vadd.f32 %v3600, %v3920
        %v4018 = vadd.f32 %v3601, %v4004
        %v4019 = vld [vmem:[%s4] sm:$0xff]
        %v4020 = vld [vmem:[%s4 + $0x8] sm:$0xff]
        %v4021 = vld [vmem:[%s4 + $0x10] sm:$0xff]
        %v4022 = vld [vmem:[%s4 + $0x18] sm:$0xff]
        %4024 = vset.pattern.permute.xlu0 0
        %4025 = vperm.xlu0 %4024, %v4019
        %v4026 = vpop.permute.xlu0 %4025
        %v4028 = vadd.f32 %v4007, %v4026
        %v4029 = vadd.f32 %v4008, %v4026
        %v4030 = vadd.f32 %v4009, %v4026
        %4032 = vset.pattern.permute.xlu0 0
        %4033 = vperm.xlu0 %4032, %v4020
        %v4034 = vpop.permute.xlu0 %4033
        %v4036 = vadd.f32 %v4010, %v4034
        %v4037 = vadd.f32 %v4011, %v4034
        %v4038 = vadd.f32 %v4012, %v4034
        %v4039 = vadd.f32 %v4021, 1.0
        %4041 = vset.pattern.permute.xlu0 0
        %4042 = vperm.xlu0 %4041, %v4039
        %v4043 = vpop.permute.xlu0 %4042
        %v4045 = vadd.f32 %v4013, %v4043
        %v4046 = vadd.f32 %v4014, %v4043
        %v4047 = vadd.f32 %v4015, %v4043
        %4049 = vset.pattern.permute.xlu0 0
        %4050 = vperm.xlu0 %4049, %v4022
        %v4051 = vpop.permute.xlu0 %4050
        %v4053 = vadd.f32 %v4016, %v4051
        %v4054 = vadd.f32 %v4017, %v4051
        %v4055 = vadd.f32 %v4018, %v4051
        %v4056 = vld [vmem:[%s289] sm:$0xff]
        %v4057 = vld [vmem:[%s289 + $0x8] sm:$0xff]
        %v4058 = vld [vmem:[%s289 + $0x10] sm:$0xff]
        %v4059 = vmul.f32 %v4045, 0.5
        %v4060 = vmul.f32 %v4046, 0.5
        %v4061 = vmul.f32 %v4047, 0.5
        %v4062 = vtanh.pop %v4059
        %v4063 = vtanh.pop %v4060
        %v4064 = vtanh.pop %v4061
        %v4065 = vmul.f32 %v4062, 0.5
        %v4066 = vmul.f32 %v4063, 0.5
        %v4067 = vmul.f32 %v4064, 0.5
        %v4068 = vadd.f32 %v4065, 0.5
        %v4069 = vadd.f32 %v4066, 0.5
        %v4070 = vadd.f32 %v4067, 0.5
        %v4071 = vmul.f32 %v4056, %v4068
        %v4072 = vmul.f32 %v4057, %v4069
        %v4073 = vmul.f32 %v4058, %v4070
        %v4074 = vmul.f32 %v4028, 0.5
        %v4075 = vmul.f32 %v4029, 0.5
        %v4076 = vmul.f32 %v4030, 0.5
        %v4077 = vtanh.pop %v4074
        %v4078 = vtanh.pop %v4075
        %v4079 = vtanh.pop %v4076
        %v4080 = vmul.f32 %v4077, 0.5
        %v4081 = vmul.f32 %v4078, 0.5
        %v4082 = vmul.f32 %v4079, 0.5
        %v4083 = vadd.f32 %v4080, 0.5
        %v4084 = vadd.f32 %v4081, 0.5
        %v4085 = vadd.f32 %v4082, 0.5
        %v4086 = vtanh.pop %v4036
        %v4087 = vtanh.pop %v4037
        %v4088 = vtanh.pop %v4038
        %v4089 = vmul.f32 %v4083, %v4086
        %v4090 = vmul.f32 %v4084, %v4087
        %v4091 = vmul.f32 %v4085, %v4088
        %v4092 = vadd.f32 %v4071, %v4089
        %v4093 = vadd.f32 %v4072, %v4090
        %v4094 = vadd.f32 %v4073, %v4091
        %v4095 = vtanh.pop %v4092
        %v4096 = vtanh.pop %v4093
        %v4097 = vtanh.pop %v4094
        %v4098 = vmul.f32 %v4053, 0.5
        %v4099 = vmul.f32 %v4054, 0.5
        %v4100 = vmul.f32 %v4055, 0.5
        %v4101 = vtanh.pop %v4098
        %v4102 = vtanh.pop %v4099
        %v4103 = vtanh.pop %v4100
        %v4104 = vmul.f32 %v4101, 0.5
        %v4105 = vmul.f32 %v4102, 0.5
        %v4106 = vmul.f32 %v4103, 0.5
        %v4107 = vadd.f32 %v4104, 0.5
        %v4108 = vadd.f32 %v4105, 0.5
        %v4109 = vadd.f32 %v4106, 0.5
        %v4110 = vmul.f32 %v4095, %v4107
        %v4111 = vmul.f32 %v4096, %v4108
        %v4112 = vmul.f32 %v4097, %v4109
        %4113 = vst [vmem:[%s274] sm:$0xff] %v4092
        %4114 = vst [vmem:[%s274 + $0x8] sm:$0xff] %v4093
        %vm4115 = vcmask 556032
        %4116 = vst.msk [vmem:[%s274 + $0x10] sm:$0xff] %vm4115, %v4094
        %4117 = vst [vmem:[%s274 + $0x18] sm:$0xff] %v4110
        %4118 = vst [vmem:[%s274 + $0x20] sm:$0xff] %v4111
        %4119 = vst.msk [vmem:[%s274 + $0x28] sm:$0xff] %vm4115, %v4112
        %s4120 = sand.u32 %s169, 1
        %s4121 = scalar_lea.sflag [#allocation3], %s4120
        %s4122 = sand.u32 %s169, 1
        %s4123 = smul.addr %s4122, 48
        %s4124 = scalar_lea.vmem [#allocation2], %s4123
        // Predicated region
        $region45: #{tpu_custom_call.1} parent=43 // pred_check
          %p4125 = pneg %p179
        $region46: #{tpu_custom_call.1} parent=43 // pred_check_branch
          %4127 = sbr.rel (%p4125) target = $region48
        $region47: #{tpu_custom_call.1} parent=43 // pred_region
          %s4129 = ssub.s32 768, 768
          %4130 = vsyncadd %s4121, %s4129
          %s4131 = smul.addr %s20, 6
          %s4132 = smul.addr %s4131, 128
          %s4133 = scalar_lea.hbm %s6, %s4132
          %s4134 = sshll.u32 %s4124, 4
          %s4135 = int_to_ptr.vmem [resolvable:$true] %s4134
          %4140 = dma.vmem_to_hbm [thread:$0]  %s4135, 768, %s4133, %s4121, 384, 384, 24
        $region48: #{tpu_custom_call.1} parent=43 // pred_fallthru
          _
      $region44: #{tpu_custom_call.1} parent=5 // pred_fallthru
        _
      %p4141 = scmp.le.s32.totalorder 2, %s15
      // Predicated region
      $region49: #{tpu_custom_call.1} parent=5 // pred_check
        %p4142 = pneg %p4141
      $region50: #{tpu_custom_call.1} parent=5 // pred_check_branch
        %4144 = sbr.rel (%p4142) target = $region52
      $region51: #{tpu_custom_call.1} parent=5 // pred_region
        %s4145 = ssub.s32 %s15, 2
        // Predicated region
        $region53: #{tpu_custom_call.1} parent=51 // pred_check
          %p4146 = pneg %p185
        $region54: #{tpu_custom_call.1} parent=51 // pred_check_branch
          %4148 = sbr.rel (%p4146) target = $region56
        $region55: #{tpu_custom_call.1} parent=51 // pred_region
          %s4149 = sand.u32 %s170, 1
          %s4150 = scalar_lea.sflag [#allocation3], %s4149
          %s4151 = sand.u32 %s170, 1
          %s4152 = smul.addr %s4151, 48
          %s4153 = scalar_lea.vmem [#allocation2], %s4152
          %4154 = dma.done %s4150, 768
        $region56: #{tpu_custom_call.1} parent=51 // pred_fallthru
          _
      $region52: #{tpu_custom_call.1} parent=5 // pred_fallthru
        _
    $region6: #{tpu_custom_call.1} parent=1 // loop_footer
      %s19 = sadd.s32 1, %s15
    $region7: #{tpu_custom_call.1} parent=1 // loop_footer_branch
      %14 = sbr.rel target = $region3
    $region8: #{tpu_custom_call.1} parent=1 // loop_exit
      _
    %4155 = vsyncpa [#allocation3], 1
    %s4156 = scalar_lea.sflag [#allocation3], 1
    %4157 = vsyncpa %s4156, 1

</llo_original>
